<compile_context>
chip_gen: v6e
topology: v6e:2x2x1
jax: 0.10.0
libtpu: 0.0.40
codegen_flags: <defaults>
</compile_context>

<pallas_src>
import functools

import numpy as np
import jax
import jax.numpy as jnp
from jax.experimental import pallas as pl
from jax.experimental.pallas import tpu as pltpu

# ----------------------------- LeNet geometry ------------------------------
KS = 5                      # conv kernel size
C1, C2 = 6, 16              # conv output channels
H0 = W0 = 32                # input spatial size (fc1 = 16*5*5 implies 32x32)
HQ = H0 // 2                # 16 = half-resolution rows/cols per image
W2O = 10                    # conv2 output spatial size
D1, D2, D3 = 120, 84, 10    # fc layer sizes
LPAD = 128                  # lane padding for the fc layers / logits
L1 = 8 * HQ                 # 128 pool1 lanes :  8*wp + ci   (ci padded 6->8)
L2 = 16 * W2O               # 160 conv2 lanes :  16*w2 + c2
LH = 144                    # lanes consumed by the fc1 fold : 32*wp2 + c2
B_TILE = 8                  # images per grid step


# ---------------------------------------------------------------------------
# Fused kernel: the full LeNet forward for one batch tile.
# ---------------------------------------------------------------------------
def _lenet_kernel(x_ref, w1m_ref, b1_ref, w2m_ref, b2_ref, sel_ref, v1_ref,
                  fb1_ref, wf2_ref, fb2_ref, wf3_ref, fb3_ref,
                  out_ref, xbuf, p1buf):
    f32 = jnp.float32
    bt = out_ref.shape[0]
    m = bt * HQ

    # stage 0: stage the packed input rows + zero tail so row-shifted reads
    # (dh / kh below) never leave the buffer.
    xbuf[0:m, :] = x_ref[...]
    xbuf[m:m + 8, :] = jnp.zeros((8, 4 * HQ), f32)

    # stage 1: conv1 + bias + ReLU + 2x2 max-pool.
    # One accumulator per output parity class (ph, pw); the 2x2 max-pool is the
    # elementwise max over the four classes.  Each class needs only 3 matmuls
    # (row shift dh in {0,1,2}); the kw shifts are folded into w1m at init.
    pooled = None
    for p in range(4):
        acc = b1_ref[...]
        for dh in range(3):
            acc = acc + jnp.dot(xbuf[dh:dh + m, :], w1m_ref[p, dh],
                                preferred_element_type=f32)
        pooled = acc if pooled is None else jnp.maximum(pooled, acc)
    pooled = jnp.maximum(pooled, 0.0)          # relu(maxpool) == maxpool(relu)

    p1buf[0:m, :] = pooled
    p1buf[m:m + 8, :] = jnp.zeros((8, L1), f32)

    # stage 2: conv2 + bias + ReLU.  rows = (b, h2), lanes = 16*w2 + c2.
    # kw and the ci contraction are folded into w2m; kh = row-shifted reads.
    a2 = b2_ref[...]
    for kh in range(KS):
        a2 = a2 + jnp.dot(p1buf[kh:kh + m, :], w2m_ref[kh],
                          preferred_element_type=f32)
    a2 = jnp.maximum(a2, 0.0)

    # stage 3: 2x2 max-pool of conv2 + flatten + fc1.
    vmax = jnp.maximum(a2[0:m - 1, :], a2[1:m, :])        # pool along h2 (rows)
    g = jnp.dot(sel_ref[...], vmax, preferred_element_type=f32)  # gather 5 rows/img
    gm = jnp.maximum(g[:, 0:LH], g[:, 16:16 + LH])        # pool along w2 (lanes)

    y = fb1_ref[...]
    for hp2 in range(5):                                  # fc1 (flatten folded in)
        y = y + jnp.dot(gm[hp2 * bt:(hp2 + 1) * bt, :], v1_ref[hp2],
                        preferred_element_type=f32)
    y = jnp.maximum(y, 0.0)

    # stage 4: fc2 + fc3 on 128-lane padded operands; lane-dense output store.
    y = jnp.maximum(fb2_ref[...] + jnp.dot(y, wf2_ref[...],
                                           preferred_element_type=f32), 0.0)
    y = fb3_ref[...] + jnp.dot(y, wf3_ref[...], preferred_element_type=f32)
    out_ref[...] = y


def _fused_forward(n_tiles, bt):
    m = bt * HQ

    def _full(shape):
        nd = len(shape)
        return pl.BlockSpec(shape, lambda i, _n=nd: (0,) * _n)

    grid_spec = pltpu.PrefetchScalarGridSpec(
        num_scalar_prefetch=0,
        grid=(n_tiles,),
        in_specs=[
            pl.BlockSpec((m, 4 * HQ), lambda i: (i, 0)),  # packed input rows
            _full((4, 3, 4 * HQ, L1)),                    # conv1 matrices
            _full((1, L1)),                               # conv1 bias (lane layout)
            _full((KS, L1, L2)),                          # conv2 matrices
            _full((1, L2)),                               # conv2 bias
            _full((5 * bt, m - 1)),                       # pooled-row gather matrix
            _full((5, LH, LPAD)),                         # fc1 (flatten folded in)
            _full((1, LPAD)),                             # fc1 bias
            _full((LPAD, LPAD)),                          # fc2 weight
            _full((1, LPAD)),                             # fc2 bias
            _full((LPAD, LPAD)),                          # fc3 weight
            _full((1, LPAD)),                             # fc3 bias
        ],
        out_specs=pl.BlockSpec((bt, LPAD), lambda i: (i, 0)),
        scratch_shapes=[
            pltpu.VMEM((m + 8, 4 * HQ), jnp.float32),     # padded input buffer
            pltpu.VMEM((m + 8, L1), jnp.float32),         # padded pool1 buffer
        ],
    )
    return pl.pallas_call(
        _lenet_kernel,
        out_shape=jax.ShapeDtypeStruct((n_tiles * bt, LPAD), jnp.float32),
        grid_spec=grid_spec,
        compiler_params=pltpu.CompilerParams(
            dimension_semantics=("parallel",),
            vmem_limit_bytes=32 * 1024 * 1024,
        ),
    )


# ---------------------------------------------------------------------------
# Parameters: PyTorch-layout init + one-time repack into kernel operands.
# ---------------------------------------------------------------------------
def init_lenet_params(key, input_dim=1):
    ks = jax.random.split(key, 10)
    p = {}
    p["conv1_w"] = 0.05 * jax.random.normal(ks[0], (C1, input_dim, KS, KS), jnp.float32)
    p["conv1_b"] = 0.01 * jax.random.normal(ks[1], (C1,), jnp.float32)
    p["conv2_w"] = 0.05 * jax.random.normal(ks[2], (C2, C1, KS, KS), jnp.float32)
    p["conv2_b"] = 0.01 * jax.random.normal(ks[3], (C2,), jnp.float32)
    p["fc1_w"] = 0.05 * jax.random.normal(ks[4], (D1, C2 * 5 * 5), jnp.float32)
    p["fc1_b"] = 0.01 * jax.random.normal(ks[5], (D1,), jnp.float32)
    p["fc2_w"] = 0.05 * jax.random.normal(ks[6], (D2, D1), jnp.float32)
    p["fc2_b"] = 0.01 * jax.random.normal(ks[7], (D2,), jnp.float32)
    p["fc3_w"] = 0.05 * jax.random.normal(ks[8], (D3, D2), jnp.float32)
    p["fc3_b"] = 0.01 * jax.random.normal(ks[9], (D3,), jnp.float32)
    return p


def prepare_params(params, bt=B_TILE):
    """One-time repack of the PyTorch-layout weights into the fused-kernel
    operand layout (all transposes / padding / im2col folding happen here,
    never inside the jitted forward)."""
    w1 = np.asarray(params["conv1_w"], np.float32)
    b1 = np.asarray(params["conv1_b"], np.float32)
    w2 = np.asarray(params["conv2_w"], np.float32)
    b2 = np.asarray(params["conv2_b"], np.float32)
    f1w = np.asarray(params["fc1_w"], np.float32)
    f1b = np.asarray(params["fc1_b"], np.float32)
    f2w = np.asarray(params["fc2_w"], np.float32)
    f2b = np.asarray(params["fc2_b"], np.float32)
    f3w = np.asarray(params["fc3_w"], np.float32)
    f3b = np.asarray(params["fc3_b"], np.float32)
    m = bt * HQ

    # conv1: for output parity (ph, pw) and row shift dh, a (64,128) matrix
    # mapping input lanes (32*qh + 16*qw + wq) -> output lanes (8*wp + c).
    w1m = np.zeros((4, 3, 4 * HQ, L1), np.float32)
    for ph in range(2):
        for pw in range(2):
            pidx = 2 * ph + pw
            for kh in range(KS):
                dh, qh = divmod(ph + kh, 2)
                for kw in range(KS):
                    dw, qw = divmod(pw + kw, 2)
                    for wp in range(HQ):
                        wq = wp + dw
                        if wq >= HQ:
                            continue
                        lsrc = 32 * qh + 16 * qw + wq
                        for c in range(C1):
                            w1m[pidx, dh, lsrc, 8 * wp + c] += w1[c, 0, kh, kw]
    b1v = np.zeros((1, L1), np.float32)
    for wp in range(HQ):
        b1v[0, 8 * wp:8 * wp + C1] = b1

    # conv2: one (128,160) matrix per kh mapping pool1 lanes (8*wp + ci) to
    # conv2 lanes (16*w2 + c2); kw = wp - w2 is folded in.
    w2m = np.zeros((KS, L1, L2), np.float32)
    for kh in range(KS):
        for kw in range(KS):
            for w2o in range(W2O):
                wp = w2o + kw
                for ci in range(C1):
                    for co in range(C2):
                        w2m[kh, 8 * wp + ci, 16 * w2o + co] = w2[co, ci, kh, kw]
    b2v = np.zeros((1, L2), np.float32)
    for w2o in range(W2O):
        b2v[0, 16 * w2o:16 * w2o + C2] = b2

    # 0/1 gather matrix: row hp2*bt + b selects conv2-grid row b*16 + 2*hp2.
    sel = np.zeros((5 * bt, m - 1), np.float32)
    for hp2 in range(5):
        for b in range(bt):
            sel[hp2 * bt + b, b * HQ + 2 * hp2] = 1.0

    # fc1: fold the NCHW flatten (c2*25 + hp2*5 + wp2) and the pool2 lane
    # layout (32*wp2 + c2) into five (144,128) matrices.
    v1 = np.zeros((5, 5, 32, LPAD), np.float32)
    v1[:, :, :C2, :D1] = f1w.reshape(D1, C2, 5, 5).transpose(2, 3, 1, 0)
    v1 = np.ascontiguousarray(v1.reshape(5, 160, LPAD)[:, :LH, :])

    fb1 = np.zeros((1, LPAD), np.float32); fb1[0, :D1] = f1b
    wf2 = np.zeros((LPAD, LPAD), np.float32); wf2[:D1, :D2] = f2w.T
    fb2 = np.zeros((1, LPAD), np.float32); fb2[0, :D2] = f2b
    wf3 = np.zeros((LPAD, LPAD), np.float32); wf3[:D2, :D3] = f3w.T
    fb3 = np.zeros((1, LPAD), np.float32); fb3[0, :D3] = f3b

    prep = dict(w1m=w1m, b1v=b1v, w2m=w2m, b2v=b2v, sel=sel, v1=v1,
                fb1=fb1, wf2=wf2, fb2=fb2, wf3=wf3, fb3=fb3)
    return {k: jnp.asarray(v) for k, v in prep.items()}


# ---------------------------------------------------------------------------
# Forward pass wrapper (the only XLA work is the one-time input repack).
# ---------------------------------------------------------------------------
@jax.jit
def lenet_forward(prep, image):
    """image: (N, 1, 32, 32) float32 NCHW -> logits (N, 10)."""
    n = image.shape[0]
    bt = prep["sel"].shape[0] // 5
    n_tiles = -(-n // bt)
    npad = n_tiles * bt

    x = image.reshape(n, H0, W0).astype(jnp.float32)
    if npad != n:
        x = jnp.concatenate([x, jnp.zeros((npad - n, H0, W0), jnp.float32)], 0)
    # space-to-depth (2x2): rows = (b, hq), lanes = 32*qh + 16*qw + wq.
    xp = x.reshape(npad, HQ, 2, HQ, 2).transpose(0, 1, 2, 4, 3)
    xp = xp.reshape(npad * HQ, 4 * HQ)

    logits = _fused_forward(n_tiles, bt)(
        xp, prep["w1m"], prep["b1v"], prep["w2m"], prep["b2v"], prep["sel"],
        prep["v1"], prep["fb1"], prep["wf2"], prep["fb2"], prep["wf3"],
        prep["fb3"])
    return logits[:n, :D3]


# ---------------------------------------------------------------------------
# Plain-JAX reference of the same forward pass (verification only).
# ---------------------------------------------------------------------------
def lenet_reference(params, image):
    hp = jax.lax.Precision.HIGHEST

    def pool(x):
        return jnp.maximum(
            jnp.maximum(x[:, :, 0::2, 0::2], x[:, :, 0::2, 1::2]),
            jnp.maximum(x[:, :, 1::2, 0::2], x[:, :, 1::2, 1::2]))

    x = image.astype(jnp.float32)
    x = jax.lax.conv(x, params["conv1_w"], (1, 1), "VALID", precision=hp)
    x = jnp.maximum(x + params["conv1_b"].reshape(1, -1, 1, 1), 0.0)
    x = pool(x)
    x = jax.lax.conv(x, params["conv2_w"], (1, 1), "VALID", precision=hp)
    x = jnp.maximum(x + params["conv2_b"].reshape(1, -1, 1, 1), 0.0)
    x = pool(x)
    x = x.reshape(x.shape[0], -1)
    x = jnp.maximum(jnp.dot(x, params["fc1_w"].T, precision=hp) + params["fc1_b"], 0.0)
    x = jnp.maximum(jnp.dot(x, params["fc2_w"].T, precision=hp) + params["fc2_b"], 0.0)
    return jnp.dot(x, params["fc3_w"].T, precision=hp) + params["fc3_b"]


if __name__ == "__main__":
    # TODO(synk): only the MNIST/LeNet branch of Model is implemented here;
    # the CIFAR10/ImageNet ResNet branches and save()/load() are out of scope.
    key = jax.random.PRNGKey(0)
    pkey, xkey = jax.random.split(key)
    params = init_lenet_params(pkey, input_dim=1)
    prep = prepare_params(params)

    # LeNet's fc1 (16*5*5) implies a 32x32 single-channel input; batch = 2.
    image = jax.random.normal(xkey, (2, 1, 32, 32), jnp.float32)

    logits = lenet_forward(prep, image)
    jax.block_until_ready(logits)
    assert logits.shape == (2, D3), logits.shape

    ref = lenet_reference(params, image)
    np.testing.assert_allclose(np.asarray(logits), np.asarray(ref),
                               rtol=2e-2, atol=3e-3)
    print("KERNEL_OK")
</pallas_src>

<mosaic_0001>
module attributes {stable_mosaic.version = 11 : i64} {
  func.func @_lenet_kernel(%arg0: i32, %arg1: memref<128x64xf32, #tpu.memory_space<vmem>>, %arg2: memref<4x3x64x128xf32, #tpu.memory_space<vmem>>, %arg3: memref<1x128xf32, #tpu.memory_space<vmem>>, %arg4: memref<5x128x160xf32, #tpu.memory_space<vmem>>, %arg5: memref<1x160xf32, #tpu.memory_space<vmem>>, %arg6: memref<40x127xf32, #tpu.memory_space<vmem>>, %arg7: memref<5x144x128xf32, #tpu.memory_space<vmem>>, %arg8: memref<1x128xf32, #tpu.memory_space<vmem>>, %arg9: memref<128x128xf32, #tpu.memory_space<vmem>>, %arg10: memref<1x128xf32, #tpu.memory_space<vmem>>, %arg11: memref<128x128xf32, #tpu.memory_space<vmem>>, %arg12: memref<1x128xf32, #tpu.memory_space<vmem>>, %arg13: memref<8x128xf32, #tpu.memory_space<vmem>>, %arg14: memref<136x64xf32, #tpu.memory_space<vmem>>, %arg15: memref<136x128xf32, #tpu.memory_space<vmem>>) attributes {dimension_semantics = [#tpu.dimension_semantics<parallel>], iteration_bounds = array<i64: 1>, scalar_prefetch = 0 : i64, scratch_operands = 2 : i64, tpu.core_type = #tpu.core_type<tc>, window_params = [{transform_indices = @transform_0, window_bounds = array<i64: 128, 64>}, {pipeline_mode = #tpu.pipeline_mode<synchronous>, transform_indices = @transform_1, window_bounds = array<i64: 4, 3, 64, 128>}, {pipeline_mode = #tpu.pipeline_mode<synchronous>, transform_indices = @transform_2, window_bounds = array<i64: 1, 128>}, {pipeline_mode = #tpu.pipeline_mode<synchronous>, transform_indices = @transform_3, window_bounds = array<i64: 5, 128, 160>}, {pipeline_mode = #tpu.pipeline_mode<synchronous>, transform_indices = @transform_4, window_bounds = array<i64: 1, 160>}, {pipeline_mode = #tpu.pipeline_mode<synchronous>, transform_indices = @transform_5, window_bounds = array<i64: 40, 127>}, {pipeline_mode = #tpu.pipeline_mode<synchronous>, transform_indices = @transform_6, window_bounds = array<i64: 5, 144, 128>}, {pipeline_mode = #tpu.pipeline_mode<synchronous>, transform_indices = @transform_7, window_bounds = array<i64: 1, 128>}, {pipeline_mode = #tpu.pipeline_mode<synchronous>, transform_indices = @transform_8, window_bounds = array<i64: 128, 128>}, {pipeline_mode = #tpu.pipeline_mode<synchronous>, transform_indices = @transform_9, window_bounds = array<i64: 1, 128>}, {pipeline_mode = #tpu.pipeline_mode<synchronous>, transform_indices = @transform_10, window_bounds = array<i64: 128, 128>}, {pipeline_mode = #tpu.pipeline_mode<synchronous>, transform_indices = @transform_11, window_bounds = array<i64: 1, 128>}, {transform_indices = @transform_12, window_bounds = array<i64: 8, 128>}]} {
    %c0 = arith.constant 0 : index
    %c0_0 = arith.constant 0 : index
    %0 = vector.load %arg1[%c0, %c0_0] : memref<128x64xf32, #tpu.memory_space<vmem>>, vector<128x64xf32>
    %c0_1 = arith.constant 0 : index
    %c0_2 = arith.constant 0 : index
    %1 = vector.load %arg14[%c0_1, %c0_2] : memref<136x64xf32, #tpu.memory_space<vmem>>, vector<128x64xf32>
    tpu.vector_store %arg14[%c0_1, %c0_2], %0 {strides = array<i32>} : memref<136x64xf32, #tpu.memory_space<vmem>>, vector<128x64xf32>,
    %cst = arith.constant 0.000000e+00 : f32
    %2 = vector.broadcast %cst : f32 to vector<8x64xf32>
    %c128 = arith.constant 128 : index
    %c0_3 = arith.constant 0 : index
    %3 = vector.load %arg14[%c128, %c0_3] : memref<136x64xf32, #tpu.memory_space<vmem>>, vector<8x64xf32>
    tpu.vector_store %arg14[%c128, %c0_3], %2 {strides = array<i32>} : memref<136x64xf32, #tpu.memory_space<vmem>>, vector<8x64xf32>,
    %c0_4 = arith.constant 0 : index
    %c0_5 = arith.constant 0 : index
    %4 = vector.load %arg3[%c0_4, %c0_5] : memref<1x128xf32, #tpu.memory_space<vmem>>, vector<1x128xf32>
    %c0_6 = arith.constant 0 : index
    %c0_7 = arith.constant 0 : index
    %5 = vector.load %arg14[%c0_6, %c0_7] : memref<136x64xf32, #tpu.memory_space<vmem>>, vector<128x64xf32>
    %c0_8 = arith.constant 0 : index
    %c0_9 = arith.constant 0 : index
    %c0_10 = arith.constant 0 : index
    %c0_11 = arith.constant 0 : index
    %6 = vector.load %arg2[%c0_8, %c0_9, %c0_10, %c0_11] : memref<4x3x64x128xf32, #tpu.memory_space<vmem>>, vector<1x1x64x128xf32>
    %7 = vector.shape_cast %6 : vector<1x1x64x128xf32> to vector<64x128xf32>
    %cst_12 = arith.constant dense<0.000000e+00> : vector<128x128xf32>
    %8 = tpu.matmul %5, %7, %cst_12 {dimension_numbers = #tpu.dot_dimension_numbers<[1], [0], [0], [1], [0, 0, 1, 1], [], []>} : vector<128x64xf32>, vector<64x128xf32>, vector<128x128xf32> -> vector<128x128xf32>
    %9 = vector.broadcast %4 : vector<1x128xf32> to vector<128x128xf32>
    %10 = arith.addf %9, %8 : vector<128x128xf32>
    %c1 = arith.constant 1 : index
    %c0_13 = arith.constant 0 : index
    %11 = vector.load %arg14[%c1, %c0_13] : memref<136x64xf32, #tpu.memory_space<vmem>>, vector<128x64xf32>
    %c0_14 = arith.constant 0 : index
    %c1_15 = arith.constant 1 : index
    %c0_16 = arith.constant 0 : index
    %c0_17 = arith.constant 0 : index
    %12 = vector.load %arg2[%c0_14, %c1_15, %c0_16, %c0_17] : memref<4x3x64x128xf32, #tpu.memory_space<vmem>>, vector<1x1x64x128xf32>
    %13 = vector.shape_cast %12 : vector<1x1x64x128xf32> to vector<64x128xf32>
    %cst_18 = arith.constant dense<0.000000e+00> : vector<128x128xf32>
    %14 = tpu.matmul %11, %13, %cst_18 {dimension_numbers = #tpu.dot_dimension_numbers<[1], [0], [0], [1], [0, 0, 1, 1], [], []>} : vector<128x64xf32>, vector<64x128xf32>, vector<128x128xf32> -> vector<128x128xf32>
    %15 = arith.addf %10, %14 : vector<128x128xf32>
    %c2 = arith.constant 2 : index
    %c0_19 = arith.constant 0 : index
    %16 = vector.load %arg14[%c2, %c0_19] : memref<136x64xf32, #tpu.memory_space<vmem>>, vector<128x64xf32>
    %c0_20 = arith.constant 0 : index
    %c2_21 = arith.constant 2 : index
    %c0_22 = arith.constant 0 : index
    %c0_23 = arith.constant 0 : index
    %17 = vector.load %arg2[%c0_20, %c2_21, %c0_22, %c0_23] : memref<4x3x64x128xf32, #tpu.memory_space<vmem>>, vector<1x1x64x128xf32>
    %18 = vector.shape_cast %17 : vector<1x1x64x128xf32> to vector<64x128xf32>
    %cst_24 = arith.constant dense<0.000000e+00> : vector<128x128xf32>
    %19 = tpu.matmul %16, %18, %cst_24 {dimension_numbers = #tpu.dot_dimension_numbers<[1], [0], [0], [1], [0, 0, 1, 1], [], []>} : vector<128x64xf32>, vector<64x128xf32>, vector<128x128xf32> -> vector<128x128xf32>
    %20 = arith.addf %15, %19 : vector<128x128xf32>
    %c0_25 = arith.constant 0 : index
    %c0_26 = arith.constant 0 : index
    %21 = vector.load %arg3[%c0_25, %c0_26] : memref<1x128xf32, #tpu.memory_space<vmem>>, vector<1x128xf32>
    %c0_27 = arith.constant 0 : index
    %c0_28 = arith.constant 0 : index
    %22 = vector.load %arg14[%c0_27, %c0_28] : memref<136x64xf32, #tpu.memory_space<vmem>>, vector<128x64xf32>
    %c1_29 = arith.constant 1 : index
    %c0_30 = arith.constant 0 : index
    %c0_31 = arith.constant 0 : index
    %c0_32 = arith.constant 0 : index
    %23 = vector.load %arg2[%c1_29, %c0_30, %c0_31, %c0_32] : memref<4x3x64x128xf32, #tpu.memory_space<vmem>>, vector<1x1x64x128xf32>
    %24 = vector.shape_cast %23 : vector<1x1x64x128xf32> to vector<64x128xf32>
    %cst_33 = arith.constant dense<0.000000e+00> : vector<128x128xf32>
    %25 = tpu.matmul %22, %24, %cst_33 {dimension_numbers = #tpu.dot_dimension_numbers<[1], [0], [0], [1], [0, 0, 1, 1], [], []>} : vector<128x64xf32>, vector<64x128xf32>, vector<128x128xf32> -> vector<128x128xf32>
    %26 = vector.broadcast %21 : vector<1x128xf32> to vector<128x128xf32>
    %27 = arith.addf %26, %25 : vector<128x128xf32>
    %c1_34 = arith.constant 1 : index
    %c0_35 = arith.constant 0 : index
    %28 = vector.load %arg14[%c1_34, %c0_35] : memref<136x64xf32, #tpu.memory_space<vmem>>, vector<128x64xf32>
    %c1_36 = arith.constant 1 : index
    %c1_37 = arith.constant 1 : index
    %c0_38 = arith.constant 0 : index
    %c0_39 = arith.constant 0 : index
    %29 = vector.load %arg2[%c1_36, %c1_37, %c0_38, %c0_39] : memref<4x3x64x128xf32, #tpu.memory_space<vmem>>, vector<1x1x64x128xf32>
    %30 = vector.shape_cast %29 : vector<1x1x64x128xf32> to vector<64x128xf32>
    %cst_40 = arith.constant dense<0.000000e+00> : vector<128x128xf32>
    %31 = tpu.matmul %28, %30, %cst_40 {dimension_numbers = #tpu.dot_dimension_numbers<[1], [0], [0], [1], [0, 0, 1, 1], [], []>} : vector<128x64xf32>, vector<64x128xf32>, vector<128x128xf32> -> vector<128x128xf32>
    %32 = arith.addf %27, %31 : vector<128x128xf32>
    %c2_41 = arith.constant 2 : index
    %c0_42 = arith.constant 0 : index
    %33 = vector.load %arg14[%c2_41, %c0_42] : memref<136x64xf32, #tpu.memory_space<vmem>>, vector<128x64xf32>
    %c1_43 = arith.constant 1 : index
    %c2_44 = arith.constant 2 : index
    %c0_45 = arith.constant 0 : index
    %c0_46 = arith.constant 0 : index
    %34 = vector.load %arg2[%c1_43, %c2_44, %c0_45, %c0_46] : memref<4x3x64x128xf32, #tpu.memory_space<vmem>>, vector<1x1x64x128xf32>
    %35 = vector.shape_cast %34 : vector<1x1x64x128xf32> to vector<64x128xf32>
    %cst_47 = arith.constant dense<0.000000e+00> : vector<128x128xf32>
    %36 = tpu.matmul %33, %35, %cst_47 {dimension_numbers = #tpu.dot_dimension_numbers<[1], [0], [0], [1], [0, 0, 1, 1], [], []>} : vector<128x64xf32>, vector<64x128xf32>, vector<128x128xf32> -> vector<128x128xf32>
    %37 = arith.addf %32, %36 : vector<128x128xf32>
    %38 = arith.maximumf %20, %37 : vector<128x128xf32>
    %c0_48 = arith.constant 0 : index
    %c0_49 = arith.constant 0 : index
    %39 = vector.load %arg3[%c0_48, %c0_49] : memref<1x128xf32, #tpu.memory_space<vmem>>, vector<1x128xf32>
    %c0_50 = arith.constant 0 : index
    %c0_51 = arith.constant 0 : index
    %40 = vector.load %arg14[%c0_50, %c0_51] : memref<136x64xf32, #tpu.memory_space<vmem>>, vector<128x64xf32>
    %c2_52 = arith.constant 2 : index
    %c0_53 = arith.constant 0 : index
    %c0_54 = arith.constant 0 : index
    %c0_55 = arith.constant 0 : index
    %41 = vector.load %arg2[%c2_52, %c0_53, %c0_54, %c0_55] : memref<4x3x64x128xf32, #tpu.memory_space<vmem>>, vector<1x1x64x128xf32>
    %42 = vector.shape_cast %41 : vector<1x1x64x128xf32> to vector<64x128xf32>
    %cst_56 = arith.constant dense<0.000000e+00> : vector<128x128xf32>
    %43 = tpu.matmul %40, %42, %cst_56 {dimension_numbers = #tpu.dot_dimension_numbers<[1], [0], [0], [1], [0, 0, 1, 1], [], []>} : vector<128x64xf32>, vector<64x128xf32>, vector<128x128xf32> -> vector<128x128xf32>
    %44 = vector.broadcast %39 : vector<1x128xf32> to vector<128x128xf32>
    %45 = arith.addf %44, %43 : vector<128x128xf32>
    %c1_57 = arith.constant 1 : index
    %c0_58 = arith.constant 0 : index
    %46 = vector.load %arg14[%c1_57, %c0_58] : memref<136x64xf32, #tpu.memory_space<vmem>>, vector<128x64xf32>
    %c2_59 = arith.constant 2 : index
    %c1_60 = arith.constant 1 : index
    %c0_61 = arith.constant 0 : index
    %c0_62 = arith.constant 0 : index
    %47 = vector.load %arg2[%c2_59, %c1_60, %c0_61, %c0_62] : memref<4x3x64x128xf32, #tpu.memory_space<vmem>>, vector<1x1x64x128xf32>
    %48 = vector.shape_cast %47 : vector<1x1x64x128xf32> to vector<64x128xf32>
    %cst_63 = arith.constant dense<0.000000e+00> : vector<128x128xf32>
    %49 = tpu.matmul %46, %48, %cst_63 {dimension_numbers = #tpu.dot_dimension_numbers<[1], [0], [0], [1], [0, 0, 1, 1], [], []>} : vector<128x64xf32>, vector<64x128xf32>, vector<128x128xf32> -> vector<128x128xf32>
    %50 = arith.addf %45, %49 : vector<128x128xf32>
    %c2_64 = arith.constant 2 : index
    %c0_65 = arith.constant 0 : index
    %51 = vector.load %arg14[%c2_64, %c0_65] : memref<136x64xf32, #tpu.memory_space<vmem>>, vector<128x64xf32>
    %c2_66 = arith.constant 2 : index
    %c2_67 = arith.constant 2 : index
    %c0_68 = arith.constant 0 : index
    %c0_69 = arith.constant 0 : index
    %52 = vector.load %arg2[%c2_66, %c2_67, %c0_68, %c0_69] : memref<4x3x64x128xf32, #tpu.memory_space<vmem>>, vector<1x1x64x128xf32>
    %53 = vector.shape_cast %52 : vector<1x1x64x128xf32> to vector<64x128xf32>
    %cst_70 = arith.constant dense<0.000000e+00> : vector<128x128xf32>
    %54 = tpu.matmul %51, %53, %cst_70 {dimension_numbers = #tpu.dot_dimension_numbers<[1], [0], [0], [1], [0, 0, 1, 1], [], []>} : vector<128x64xf32>, vector<64x128xf32>, vector<128x128xf32> -> vector<128x128xf32>
    %55 = arith.addf %50, %54 : vector<128x128xf32>
    %56 = arith.maximumf %38, %55 : vector<128x128xf32>
    %c0_71 = arith.constant 0 : index
    %c0_72 = arith.constant 0 : index
    %57 = vector.load %arg3[%c0_71, %c0_72] : memref<1x128xf32, #tpu.memory_space<vmem>>, vector<1x128xf32>
    %c0_73 = arith.constant 0 : index
    %c0_74 = arith.constant 0 : index
    %58 = vector.load %arg14[%c0_73, %c0_74] : memref<136x64xf32, #tpu.memory_space<vmem>>, vector<128x64xf32>
    %c3 = arith.constant 3 : index
    %c0_75 = arith.constant 0 : index
    %c0_76 = arith.constant 0 : index
    %c0_77 = arith.constant 0 : index
    %59 = vector.load %arg2[%c3, %c0_75, %c0_76, %c0_77] : memref<4x3x64x128xf32, #tpu.memory_space<vmem>>, vector<1x1x64x128xf32>
    %60 = vector.shape_cast %59 : vector<1x1x64x128xf32> to vector<64x128xf32>
    %cst_78 = arith.constant dense<0.000000e+00> : vector<128x128xf32>
    %61 = tpu.matmul %58, %60, %cst_78 {dimension_numbers = #tpu.dot_dimension_numbers<[1], [0], [0], [1], [0, 0, 1, 1], [], []>} : vector<128x64xf32>, vector<64x128xf32>, vector<128x128xf32> -> vector<128x128xf32>
    %62 = vector.broadcast %57 : vector<1x128xf32> to vector<128x128xf32>
    %63 = arith.addf %62, %61 : vector<128x128xf32>
    %c1_79 = arith.constant 1 : index
    %c0_80 = arith.constant 0 : index
    %64 = vector.load %arg14[%c1_79, %c0_80] : memref<136x64xf32, #tpu.memory_space<vmem>>, vector<128x64xf32>
    %c3_81 = arith.constant 3 : index
    %c1_82 = arith.constant 1 : index
    %c0_83 = arith.constant 0 : index
    %c0_84 = arith.constant 0 : index
    %65 = vector.load %arg2[%c3_81, %c1_82, %c0_83, %c0_84] : memref<4x3x64x128xf32, #tpu.memory_space<vmem>>, vector<1x1x64x128xf32>
    %66 = vector.shape_cast %65 : vector<1x1x64x128xf32> to vector<64x128xf32>
    %cst_85 = arith.constant dense<0.000000e+00> : vector<128x128xf32>
    %67 = tpu.matmul %64, %66, %cst_85 {dimension_numbers = #tpu.dot_dimension_numbers<[1], [0], [0], [1], [0, 0, 1, 1], [], []>} : vector<128x64xf32>, vector<64x128xf32>, vector<128x128xf32> -> vector<128x128xf32>
    %68 = arith.addf %63, %67 : vector<128x128xf32>
    %c2_86 = arith.constant 2 : index
    %c0_87 = arith.constant 0 : index
    %69 = vector.load %arg14[%c2_86, %c0_87] : memref<136x64xf32, #tpu.memory_space<vmem>>, vector<128x64xf32>
    %c3_88 = arith.constant 3 : index
    %c2_89 = arith.constant 2 : index
    %c0_90 = arith.constant 0 : index
    %c0_91 = arith.constant 0 : index
    %70 = vector.load %arg2[%c3_88, %c2_89, %c0_90, %c0_91] : memref<4x3x64x128xf32, #tpu.memory_space<vmem>>, vector<1x1x64x128xf32>
    %71 = vector.shape_cast %70 : vector<1x1x64x128xf32> to vector<64x128xf32>
    %cst_92 = arith.constant dense<0.000000e+00> : vector<128x128xf32>
    %72 = tpu.matmul %69, %71, %cst_92 {dimension_numbers = #tpu.dot_dimension_numbers<[1], [0], [0], [1], [0, 0, 1, 1], [], []>} : vector<128x64xf32>, vector<64x128xf32>, vector<128x128xf32> -> vector<128x128xf32>
    %73 = arith.addf %68, %72 : vector<128x128xf32>
    %74 = arith.maximumf %56, %73 : vector<128x128xf32>
    %cst_93 = arith.constant 0.000000e+00 : f32
    %75 = vector.broadcast %cst_93 : f32 to vector<128x128xf32>
    %76 = arith.maximumf %74, %75 : vector<128x128xf32>
    %c0_94 = arith.constant 0 : index
    %c0_95 = arith.constant 0 : index
    %77 = vector.load %arg15[%c0_94, %c0_95] : memref<136x128xf32, #tpu.memory_space<vmem>>, vector<128x128xf32>
    tpu.vector_store %arg15[%c0_94, %c0_95], %76 {strides = array<i32>} : memref<136x128xf32, #tpu.memory_space<vmem>>, vector<128x128xf32>,
    %cst_96 = arith.constant 0.000000e+00 : f32
    %78 = vector.broadcast %cst_96 : f32 to vector<8x128xf32>
    %c128_97 = arith.constant 128 : index
    %c0_98 = arith.constant 0 : index
    %79 = vector.load %arg15[%c128_97, %c0_98] : memref<136x128xf32, #tpu.memory_space<vmem>>, vector<8x128xf32>
    tpu.vector_store %arg15[%c128_97, %c0_98], %78 {strides = array<i32>} : memref<136x128xf32, #tpu.memory_space<vmem>>, vector<8x128xf32>,
    %c0_99 = arith.constant 0 : index
    %c0_100 = arith.constant 0 : index
    %80 = vector.load %arg5[%c0_99, %c0_100] : memref<1x160xf32, #tpu.memory_space<vmem>>, vector<1x160xf32>
    %c0_101 = arith.constant 0 : index
    %c0_102 = arith.constant 0 : index
    %81 = vector.load %arg15[%c0_101, %c0_102] : memref<136x128xf32, #tpu.memory_space<vmem>>, vector<128x128xf32>
    %c0_103 = arith.constant 0 : index
    %c0_104 = arith.constant 0 : index
    %c0_105 = arith.constant 0 : index
    %82 = vector.load %arg4[%c0_103, %c0_104, %c0_105] : memref<5x128x160xf32, #tpu.memory_space<vmem>>, vector<1x128x160xf32>
    %83 = vector.shape_cast %82 : vector<1x128x160xf32> to vector<128x160xf32>
    %cst_106 = arith.constant dense<0.000000e+00> : vector<128x160xf32>
    %84 = tpu.matmul %81, %83, %cst_106 {dimension_numbers = #tpu.dot_dimension_numbers<[1], [0], [0], [1], [0, 0, 1, 1], [], []>} : vector<128x128xf32>, vector<128x160xf32>, vector<128x160xf32> -> vector<128x160xf32>
    %85 = vector.broadcast %80 : vector<1x160xf32> to vector<128x160xf32>
    %86 = arith.addf %85, %84 : vector<128x160xf32>
    %c1_107 = arith.constant 1 : index
    %c0_108 = arith.constant 0 : index
    %87 = vector.load %arg15[%c1_107, %c0_108] : memref<136x128xf32, #tpu.memory_space<vmem>>, vector<128x128xf32>
    %c1_109 = arith.constant 1 : index
    %c0_110 = arith.constant 0 : index
    %c0_111 = arith.constant 0 : index
    %88 = vector.load %arg4[%c1_109, %c0_110, %c0_111] : memref<5x128x160xf32, #tpu.memory_space<vmem>>, vector<1x128x160xf32>
    %89 = vector.shape_cast %88 : vector<1x128x160xf32> to vector<128x160xf32>
    %cst_112 = arith.constant dense<0.000000e+00> : vector<128x160xf32>
    %90 = tpu.matmul %87, %89, %cst_112 {dimension_numbers = #tpu.dot_dimension_numbers<[1], [0], [0], [1], [0, 0, 1, 1], [], []>} : vector<128x128xf32>, vector<128x160xf32>, vector<128x160xf32> -> vector<128x160xf32>
    %91 = arith.addf %86, %90 : vector<128x160xf32>
    %c2_113 = arith.constant 2 : index
    %c0_114 = arith.constant 0 : index
    %92 = vector.load %arg15[%c2_113, %c0_114] : memref<136x128xf32, #tpu.memory_space<vmem>>, vector<128x128xf32>
    %c2_115 = arith.constant 2 : index
    %c0_116 = arith.constant 0 : index
    %c0_117 = arith.constant 0 : index
    %93 = vector.load %arg4[%c2_115, %c0_116, %c0_117] : memref<5x128x160xf32, #tpu.memory_space<vmem>>, vector<1x128x160xf32>
    %94 = vector.shape_cast %93 : vector<1x128x160xf32> to vector<128x160xf32>
    %cst_118 = arith.constant dense<0.000000e+00> : vector<128x160xf32>
    %95 = tpu.matmul %92, %94, %cst_118 {dimension_numbers = #tpu.dot_dimension_numbers<[1], [0], [0], [1], [0, 0, 1, 1], [], []>} : vector<128x128xf32>, vector<128x160xf32>, vector<128x160xf32> -> vector<128x160xf32>
    %96 = arith.addf %91, %95 : vector<128x160xf32>
    %c3_119 = arith.constant 3 : index
    %c0_120 = arith.constant 0 : index
    %97 = vector.load %arg15[%c3_119, %c0_120] : memref<136x128xf32, #tpu.memory_space<vmem>>, vector<128x128xf32>
    %c3_121 = arith.constant 3 : index
    %c0_122 = arith.constant 0 : index
    %c0_123 = arith.constant 0 : index
    %98 = vector.load %arg4[%c3_121, %c0_122, %c0_123] : memref<5x128x160xf32, #tpu.memory_space<vmem>>, vector<1x128x160xf32>
    %99 = vector.shape_cast %98 : vector<1x128x160xf32> to vector<128x160xf32>
    %cst_124 = arith.constant dense<0.000000e+00> : vector<128x160xf32>
    %100 = tpu.matmul %97, %99, %cst_124 {dimension_numbers = #tpu.dot_dimension_numbers<[1], [0], [0], [1], [0, 0, 1, 1], [], []>} : vector<128x128xf32>, vector<128x160xf32>, vector<128x160xf32> -> vector<128x160xf32>
    %101 = arith.addf %96, %100 : vector<128x160xf32>
    %c4 = arith.constant 4 : index
    %c0_125 = arith.constant 0 : index
    %102 = vector.load %arg15[%c4, %c0_125] : memref<136x128xf32, #tpu.memory_space<vmem>>, vector<128x128xf32>
    %c4_126 = arith.constant 4 : index
    %c0_127 = arith.constant 0 : index
    %c0_128 = arith.constant 0 : index
    %103 = vector.load %arg4[%c4_126, %c0_127, %c0_128] : memref<5x128x160xf32, #tpu.memory_space<vmem>>, vector<1x128x160xf32>
    %104 = vector.shape_cast %103 : vector<1x128x160xf32> to vector<128x160xf32>
    %cst_129 = arith.constant dense<0.000000e+00> : vector<128x160xf32>
    %105 = tpu.matmul %102, %104, %cst_129 {dimension_numbers = #tpu.dot_dimension_numbers<[1], [0], [0], [1], [0, 0, 1, 1], [], []>} : vector<128x128xf32>, vector<128x160xf32>, vector<128x160xf32> -> vector<128x160xf32>
    %106 = arith.addf %101, %105 : vector<128x160xf32>
    %cst_130 = arith.constant 0.000000e+00 : f32
    %107 = vector.broadcast %cst_130 : f32 to vector<128x160xf32>
    %108 = arith.maximumf %106, %107 : vector<128x160xf32>
    %109 = vector.extract_strided_slice %108 {offsets = [0, 0], sizes = [127, 160], strides = [1, 1]} : vector<128x160xf32> to vector<127x160xf32>
    %110 = vector.extract_strided_slice %108 {offsets = [1, 0], sizes = [127, 160], strides = [1, 1]} : vector<128x160xf32> to vector<127x160xf32>
    %111 = arith.maximumf %109, %110 : vector<127x160xf32>
    %c0_131 = arith.constant 0 : index
    %c0_132 = arith.constant 0 : index
    %112 = vector.load %arg6[%c0_131, %c0_132] : memref<40x127xf32, #tpu.memory_space<vmem>>, vector<40x127xf32>
    %cst_133 = arith.constant dense<0.000000e+00> : vector<40x160xf32>
    %113 = tpu.matmul %112, %111, %cst_133 {dimension_numbers = #tpu.dot_dimension_numbers<[1], [0], [0], [1], [0, 0, 1, 1], [], []>} : vector<40x127xf32>, vector<127x160xf32>, vector<40x160xf32> -> vector<40x160xf32>
    %114 = vector.extract_strided_slice %113 {offsets = [0, 0], sizes = [40, 144], strides = [1, 1]} : vector<40x160xf32> to vector<40x144xf32>
    %115 = vector.extract_strided_slice %113 {offsets = [0, 16], sizes = [40, 144], strides = [1, 1]} : vector<40x160xf32> to vector<40x144xf32>
    %116 = arith.maximumf %114, %115 : vector<40x144xf32>
    %c0_134 = arith.constant 0 : index
    %c0_135 = arith.constant 0 : index
    %117 = vector.load %arg8[%c0_134, %c0_135] : memref<1x128xf32, #tpu.memory_space<vmem>>, vector<1x128xf32>
    %118 = vector.extract_strided_slice %116 {offsets = [0, 0], sizes = [8, 144], strides = [1, 1]} : vector<40x144xf32> to vector<8x144xf32>
    %c0_136 = arith.constant 0 : index
    %c0_137 = arith.constant 0 : index
    %c0_138 = arith.constant 0 : index
    %119 = vector.load %arg7[%c0_136, %c0_137, %c0_138] : memref<5x144x128xf32, #tpu.memory_space<vmem>>, vector<1x144x128xf32>
    %120 = vector.shape_cast %119 : vector<1x144x128xf32> to vector<144x128xf32>
    %cst_139 = arith.constant dense<0.000000e+00> : vector<8x128xf32>
    %121 = tpu.matmul %118, %120, %cst_139 {dimension_numbers = #tpu.dot_dimension_numbers<[1], [0], [0], [1], [0, 0, 1, 1], [], []>} : vector<8x144xf32>, vector<144x128xf32>, vector<8x128xf32> -> vector<8x128xf32>
    %122 = vector.broadcast %117 : vector<1x128xf32> to vector<8x128xf32>
    %123 = arith.addf %122, %121 : vector<8x128xf32>
    %124 = vector.extract_strided_slice %116 {offsets = [8, 0], sizes = [8, 144], strides = [1, 1]} : vector<40x144xf32> to vector<8x144xf32>
    %c1_140 = arith.constant 1 : index
    %c0_141 = arith.constant 0 : index
    %c0_142 = arith.constant 0 : index
    %125 = vector.load %arg7[%c1_140, %c0_141, %c0_142] : memref<5x144x128xf32, #tpu.memory_space<vmem>>, vector<1x144x128xf32>
    %126 = vector.shape_cast %125 : vector<1x144x128xf32> to vector<144x128xf32>
    %cst_143 = arith.constant dense<0.000000e+00> : vector<8x128xf32>
    %127 = tpu.matmul %124, %126, %cst_143 {dimension_numbers = #tpu.dot_dimension_numbers<[1], [0], [0], [1], [0, 0, 1, 1], [], []>} : vector<8x144xf32>, vector<144x128xf32>, vector<8x128xf32> -> vector<8x128xf32>
    %128 = arith.addf %123, %127 : vector<8x128xf32>
    %129 = vector.extract_strided_slice %116 {offsets = [16, 0], sizes = [8, 144], strides = [1, 1]} : vector<40x144xf32> to vector<8x144xf32>
    %c2_144 = arith.constant 2 : index
    %c0_145 = arith.constant 0 : index
    %c0_146 = arith.constant 0 : index
    %130 = vector.load %arg7[%c2_144, %c0_145, %c0_146] : memref<5x144x128xf32, #tpu.memory_space<vmem>>, vector<1x144x128xf32>
    %131 = vector.shape_cast %130 : vector<1x144x128xf32> to vector<144x128xf32>
    %cst_147 = arith.constant dense<0.000000e+00> : vector<8x128xf32>
    %132 = tpu.matmul %129, %131, %cst_147 {dimension_numbers = #tpu.dot_dimension_numbers<[1], [0], [0], [1], [0, 0, 1, 1], [], []>} : vector<8x144xf32>, vector<144x128xf32>, vector<8x128xf32> -> vector<8x128xf32>
    %133 = arith.addf %128, %132 : vector<8x128xf32>
    %134 = vector.extract_strided_slice %116 {offsets = [24, 0], sizes = [8, 144], strides = [1, 1]} : vector<40x144xf32> to vector<8x144xf32>
    %c3_148 = arith.constant 3 : index
    %c0_149 = arith.constant 0 : index
    %c0_150 = arith.constant 0 : index
    %135 = vector.load %arg7[%c3_148, %c0_149, %c0_150] : memref<5x144x128xf32, #tpu.memory_space<vmem>>, vector<1x144x128xf32>
    %136 = vector.shape_cast %135 : vector<1x144x128xf32> to vector<144x128xf32>
    %cst_151 = arith.constant dense<0.000000e+00> : vector<8x128xf32>
    %137 = tpu.matmul %134, %136, %cst_151 {dimension_numbers = #tpu.dot_dimension_numbers<[1], [0], [0], [1], [0, 0, 1, 1], [], []>} : vector<8x144xf32>, vector<144x128xf32>, vector<8x128xf32> -> vector<8x128xf32>
    %138 = arith.addf %133, %137 : vector<8x128xf32>
    %139 = vector.extract_strided_slice %116 {offsets = [32, 0], sizes = [8, 144], strides = [1, 1]} : vector<40x144xf32> to vector<8x144xf32>
    %c4_152 = arith.constant 4 : index
    %c0_153 = arith.constant 0 : index
    %c0_154 = arith.constant 0 : index
    %140 = vector.load %arg7[%c4_152, %c0_153, %c0_154] : memref<5x144x128xf32, #tpu.memory_space<vmem>>, vector<1x144x128xf32>
    %141 = vector.shape_cast %140 : vector<1x144x128xf32> to vector<144x128xf32>
    %cst_155 = arith.constant dense<0.000000e+00> : vector<8x128xf32>
    %142 = tpu.matmul %139, %141, %cst_155 {dimension_numbers = #tpu.dot_dimension_numbers<[1], [0], [0], [1], [0, 0, 1, 1], [], []>} : vector<8x144xf32>, vector<144x128xf32>, vector<8x128xf32> -> vector<8x128xf32>
    %143 = arith.addf %138, %142 : vector<8x128xf32>
    %cst_156 = arith.constant 0.000000e+00 : f32
    %144 = vector.broadcast %cst_156 : f32 to vector<8x128xf32>
    %145 = arith.maximumf %143, %144 : vector<8x128xf32>
    %c0_157 = arith.constant 0 : index
    %c0_158 = arith.constant 0 : index
    %146 = vector.load %arg10[%c0_157, %c0_158] : memref<1x128xf32, #tpu.memory_space<vmem>>, vector<1x128xf32>
    %c0_159 = arith.constant 0 : index
    %c0_160 = arith.constant 0 : index
    %147 = vector.load %arg9[%c0_159, %c0_160] : memref<128x128xf32, #tpu.memory_space<vmem>>, vector<128x128xf32>
    %cst_161 = arith.constant dense<0.000000e+00> : vector<8x128xf32>
    %148 = tpu.matmul %145, %147, %cst_161 {dimension_numbers = #tpu.dot_dimension_numbers<[1], [0], [0], [1], [0, 0, 1, 1], [], []>} : vector<8x128xf32>, vector<128x128xf32>, vector<8x128xf32> -> vector<8x128xf32>
    %149 = vector.broadcast %146 : vector<1x128xf32> to vector<8x128xf32>
    %150 = arith.addf %149, %148 : vector<8x128xf32>
    %cst_162 = arith.constant 0.000000e+00 : f32
    %151 = vector.broadcast %cst_162 : f32 to vector<8x128xf32>
    %152 = arith.maximumf %150, %151 : vector<8x128xf32>
    %c0_163 = arith.constant 0 : index
    %c0_164 = arith.constant 0 : index
    %153 = vector.load %arg12[%c0_163, %c0_164] : memref<1x128xf32, #tpu.memory_space<vmem>>, vector<1x128xf32>
    %c0_165 = arith.constant 0 : index
    %c0_166 = arith.constant 0 : index
    %154 = vector.load %arg11[%c0_165, %c0_166] : memref<128x128xf32, #tpu.memory_space<vmem>>, vector<128x128xf32>
    %cst_167 = arith.constant dense<0.000000e+00> : vector<8x128xf32>
    %155 = tpu.matmul %152, %154, %cst_167 {dimension_numbers = #tpu.dot_dimension_numbers<[1], [0], [0], [1], [0, 0, 1, 1], [], []>} : vector<8x128xf32>, vector<128x128xf32>, vector<8x128xf32> -> vector<8x128xf32>
    %156 = vector.broadcast %153 : vector<1x128xf32> to vector<8x128xf32>
    %157 = arith.addf %156, %155 : vector<8x128xf32>
    %c0_168 = arith.constant 0 : index
    %c0_169 = arith.constant 0 : index
    %158 = vector.load %arg13[%c0_168, %c0_169] : memref<8x128xf32, #tpu.memory_space<vmem>>, vector<8x128xf32>
    tpu.vector_store %arg13[%c0_168, %c0_169], %157 {strides = array<i32>} : memref<8x128xf32, #tpu.memory_space<vmem>>, vector<8x128xf32>,
    return
  }
  func.func @transform_0(%arg0: i32) -> (i32, i32) {
    %c0_i32 = arith.constant 0 : i32
    %c0_i32_0 = arith.constant 0 : i32
    return %arg0, %c0_i32 : i32, i32
  }
  func.func @transform_1(%arg0: i32) -> (i32, i32, i32, i32) {
    %c0_i32 = arith.constant 0 : i32
    %c0_i32_0 = arith.constant 0 : i32
    %c0_i32_1 = arith.constant 0 : i32
    %c0_i32_2 = arith.constant 0 : i32
    %c0_i32_3 = arith.constant 0 : i32
    return %c0_i32, %c0_i32_0, %c0_i32_1, %c0_i32_2 : i32, i32, i32, i32
  }
  func.func @transform_2(%arg0: i32) -> (i32, i32) {
    %c0_i32 = arith.constant 0 : i32
    %c0_i32_0 = arith.constant 0 : i32
    %c0_i32_1 = arith.constant 0 : i32
    return %c0_i32, %c0_i32_0 : i32, i32
  }
  func.func @transform_3(%arg0: i32) -> (i32, i32, i32) {
    %c0_i32 = arith.constant 0 : i32
    %c0_i32_0 = arith.constant 0 : i32
    %c0_i32_1 = arith.constant 0 : i32
    %c0_i32_2 = arith.constant 0 : i32
    return %c0_i32, %c0_i32_0, %c0_i32_1 : i32, i32, i32
  }
  func.func @transform_4(%arg0: i32) -> (i32, i32) {
    %c0_i32 = arith.constant 0 : i32
    %c0_i32_0 = arith.constant 0 : i32
    %c0_i32_1 = arith.constant 0 : i32
    return %c0_i32, %c0_i32_0 : i32, i32
  }
  func.func @transform_5(%arg0: i32) -> (i32, i32) {
    %c0_i32 = arith.constant 0 : i32
    %c0_i32_0 = arith.constant 0 : i32
    %c0_i32_1 = arith.constant 0 : i32
    return %c0_i32, %c0_i32_0 : i32, i32
  }
  func.func @transform_6(%arg0: i32) -> (i32, i32, i32) {
    %c0_i32 = arith.constant 0 : i32
    %c0_i32_0 = arith.constant 0 : i32
    %c0_i32_1 = arith.constant 0 : i32
    %c0_i32_2 = arith.constant 0 : i32
    return %c0_i32, %c0_i32_0, %c0_i32_1 : i32, i32, i32
  }
  func.func @transform_7(%arg0: i32) -> (i32, i32) {
    %c0_i32 = arith.constant 0 : i32
    %c0_i32_0 = arith.constant 0 : i32
    %c0_i32_1 = arith.constant 0 : i32
    return %c0_i32, %c0_i32_0 : i32, i32
  }
  func.func @transform_8(%arg0: i32) -> (i32, i32) {
    %c0_i32 = arith.constant 0 : i32
    %c0_i32_0 = arith.constant 0 : i32
    %c0_i32_1 = arith.constant 0 : i32
    return %c0_i32, %c0_i32_0 : i32, i32
  }
  func.func @transform_9(%arg0: i32) -> (i32, i32) {
    %c0_i32 = arith.constant 0 : i32
    %c0_i32_0 = arith.constant 0 : i32
    %c0_i32_1 = arith.constant 0 : i32
    return %c0_i32, %c0_i32_0 : i32, i32
  }
  func.func @transform_10(%arg0: i32) -> (i32, i32) {
    %c0_i32 = arith.constant 0 : i32
    %c0_i32_0 = arith.constant 0 : i32
    %c0_i32_1 = arith.constant 0 : i32
    return %c0_i32, %c0_i32_0 : i32, i32
  }
  func.func @transform_11(%arg0: i32) -> (i32, i32) {
    %c0_i32 = arith.constant 0 : i32
    %c0_i32_0 = arith.constant 0 : i32
    %c0_i32_1 = arith.constant 0 : i32
    return %c0_i32, %c0_i32_0 : i32, i32
  }
  func.func @transform_12(%arg0: i32) -> (i32, i32) {
    %c0_i32 = arith.constant 0 : i32
    %c0_i32_0 = arith.constant 0 : i32
    return %arg0, %c0_i32 : i32, i32
  }
}

</mosaic_0001>

<llo_original>
// kernel: lenet_forward.1
$region0: #{lenet_forward.1}
  #allocation0 [shape = 'u32[]', space=smem, size = 0x4, offset = 0x4, fixed_abs, tag = 'smem constant byte address 0x4 - core index']
  #allocation1 [shape = 'u32[144,128]{1,0:T(1,128)}', space=vmem, size = 0x12000, scoped, tag = 'internal scratch']
  #allocation2 [shape = 'f32[136,64]{1,0:T(8,128)}', space=vmem, size = 0x11000, scoped, tag = 'scratch operand']
  #allocation3 [shape = 'f32[136,128]{1,0:T(8,128)}', space=vmem, size = 0x11000, scoped, tag = 'scratch operand']
  %s0 = inlined_call_operand.vmem [shape: f32[128,64], index: 0, kind: input, shape index: {}]
  %s1 = inlined_call_operand.vmem [shape: f32[4,3,64,128], index: 1, kind: input, shape index: {}]
  %s2 = inlined_call_operand.vmem [shape: f32[1,128], index: 2, kind: input, shape index: {}]
  %s3 = inlined_call_operand.vmem [shape: f32[5,128,160], index: 3, kind: input, shape index: {}]
  %s4 = inlined_call_operand.vmem [shape: f32[1,160], index: 4, kind: input, shape index: {}]
  %s5 = inlined_call_operand.vmem [shape: f32[40,127], index: 5, kind: input, shape index: {}]
  %s6 = inlined_call_operand.vmem [shape: f32[5,144,128], index: 6, kind: input, shape index: {}]
  %s7 = inlined_call_operand.vmem [shape: f32[1,128], index: 7, kind: input, shape index: {}]
  %s8 = inlined_call_operand.vmem [shape: f32[128,128], index: 8, kind: input, shape index: {}]
  %s9 = inlined_call_operand.vmem [shape: f32[1,128], index: 9, kind: input, shape index: {}]
  %s10 = inlined_call_operand.vmem [shape: f32[128,128], index: 10, kind: input, shape index: {}]
  %s11 = inlined_call_operand.vmem [shape: f32[1,128], index: 11, kind: input, shape index: {}]
  %s12 = inlined_call_operand.vmem [shape: f32[8,128], index: 12, kind: output, shape index: {}]
  %s13 = sld [smem:[#allocation0]]
  $region58: #{lenet_forward.1} parent=0
    _
  %s15 = ssub.s32 1, %s13
  %s16 = scalar_select 0, %s15, %s13
  // Predicated region
  $region2: #{lenet_forward.1} parent=0 // pred_check
    _
  $region3: #{lenet_forward.1} parent=0 // pred_check_branch
    %18 = sbr.rel (0) target = $region5
  $region4: #{lenet_forward.1} parent=0 // pred_region
    _
  $region5: #{lenet_forward.1} parent=0 // pred_fallthru
    _
  // Predicated region
  $region6: #{lenet_forward.1} parent=0 // pred_check
    _
  $region7: #{lenet_forward.1} parent=0 // pred_check_branch
    %20 = sbr.rel (0) target = $region9
  $region8: #{lenet_forward.1} parent=0 // pred_region
    _
  $region9: #{lenet_forward.1} parent=0 // pred_fallthru
    _
  // Predicated region
  $region10: #{lenet_forward.1} parent=0 // pred_check
    _
  $region11: #{lenet_forward.1} parent=0 // pred_check_branch
    %22 = sbr.rel (0) target = $region13
  $region12: #{lenet_forward.1} parent=0 // pred_region
    _
  $region13: #{lenet_forward.1} parent=0 // pred_fallthru
    _
  // Predicated region
  $region14: #{lenet_forward.1} parent=0 // pred_check
    _
  $region15: #{lenet_forward.1} parent=0 // pred_check_branch
    %24 = sbr.rel (0) target = $region17
  $region16: #{lenet_forward.1} parent=0 // pred_region
    _
  $region17: #{lenet_forward.1} parent=0 // pred_fallthru
    _
  // Predicated region
  $region18: #{lenet_forward.1} parent=0 // pred_check
    _
  $region19: #{lenet_forward.1} parent=0 // pred_check_branch
    %26 = sbr.rel (0) target = $region21
  $region20: #{lenet_forward.1} parent=0 // pred_region
    _
  $region21: #{lenet_forward.1} parent=0 // pred_fallthru
    _
  // Predicated region
  $region22: #{lenet_forward.1} parent=0 // pred_check
    _
  $region23: #{lenet_forward.1} parent=0 // pred_check_branch
    %28 = sbr.rel (0) target = $region25
  $region24: #{lenet_forward.1} parent=0 // pred_region
    _
  $region25: #{lenet_forward.1} parent=0 // pred_fallthru
    _
  // Predicated region
  $region26: #{lenet_forward.1} parent=0 // pred_check
    _
  $region27: #{lenet_forward.1} parent=0 // pred_check_branch
    %30 = sbr.rel (0) target = $region29
  $region28: #{lenet_forward.1} parent=0 // pred_region
    _
  $region29: #{lenet_forward.1} parent=0 // pred_fallthru
    _
  // Predicated region
  $region30: #{lenet_forward.1} parent=0 // pred_check
    _
  $region31: #{lenet_forward.1} parent=0 // pred_check_branch
    %32 = sbr.rel (0) target = $region33
  $region32: #{lenet_forward.1} parent=0 // pred_region
    _
  $region33: #{lenet_forward.1} parent=0 // pred_fallthru
    _
  // Predicated region
  $region34: #{lenet_forward.1} parent=0 // pred_check
    _
  $region35: #{lenet_forward.1} parent=0 // pred_check_branch
    %34 = sbr.rel (0) target = $region37
  $region36: #{lenet_forward.1} parent=0 // pred_region
    _
  $region37: #{lenet_forward.1} parent=0 // pred_fallthru
    _
  // Predicated region
  $region38: #{lenet_forward.1} parent=0 // pred_check
    _
  $region39: #{lenet_forward.1} parent=0 // pred_check_branch
    %36 = sbr.rel (0) target = $region41
  $region40: #{lenet_forward.1} parent=0 // pred_region
    _
  $region41: #{lenet_forward.1} parent=0 // pred_fallthru
    _
  // Predicated region
  $region42: #{lenet_forward.1} parent=0 // pred_check
    _
  $region43: #{lenet_forward.1} parent=0 // pred_check_branch
    %38 = sbr.rel (0) target = $region45
  $region44: #{lenet_forward.1} parent=0 // pred_region
    _
  $region45: #{lenet_forward.1} parent=0 // pred_fallthru
    _
  // Predicated region
  $region46: #{lenet_forward.1} parent=0 // pred_check
    _
  $region47: #{lenet_forward.1} parent=0 // pred_check_branch
    %40 = sbr.rel (0) target = $region49
  $region48: #{lenet_forward.1} parent=0 // pred_region
    _
  $region49: #{lenet_forward.1} parent=0 // pred_fallthru
    _
  %v41 = vld [vmem:[%s0] sm:$0xff]
  %v42 = vld [vmem:[%s0 + $0x8] sm:$0xff]
  %v43 = vld [vmem:[%s0 + $0x10] sm:$0xff]
  %v44 = vld [vmem:[%s0 + $0x18] sm:$0xff]
  %v45 = vld [vmem:[%s0 + $0x20] sm:$0xff]
  %v46 = vld [vmem:[%s0 + $0x28] sm:$0xff]
  %v47 = vld [vmem:[%s0 + $0x30] sm:$0xff]
  %v48 = vld [vmem:[%s0 + $0x38] sm:$0xff]
  %v49 = vld [vmem:[%s0 + $0x40] sm:$0xff]
  %v50 = vld [vmem:[%s0 + $0x48] sm:$0xff]
  %v51 = vld [vmem:[%s0 + $0x50] sm:$0xff]
  %v52 = vld [vmem:[%s0 + $0x58] sm:$0xff]
  %v53 = vld [vmem:[%s0 + $0x60] sm:$0xff]
  %v54 = vld [vmem:[%s0 + $0x68] sm:$0xff]
  %v55 = vld [vmem:[%s0 + $0x70] sm:$0xff]
  %v56 = vld [vmem:[%s0 + $0x78] sm:$0xff]
  %vm57 = vcmask 523264
  %58 = vst.msk [vmem:[#allocation2] sm:$0xff] %vm57, %v41
  %59 = vst.msk [vmem:[#allocation2 + $0x8] sm:$0xff] %vm57, %v42
  %60 = vst.msk [vmem:[#allocation2 + $0x10] sm:$0xff] %vm57, %v43
  %61 = vst.msk [vmem:[#allocation2 + $0x18] sm:$0xff] %vm57, %v44
  %62 = vst.msk [vmem:[#allocation2 + $0x20] sm:$0xff] %vm57, %v45
  %63 = vst.msk [vmem:[#allocation2 + $0x28] sm:$0xff] %vm57, %v46
  %64 = vst.msk [vmem:[#allocation2 + $0x30] sm:$0xff] %vm57, %v47
  %65 = vst.msk [vmem:[#allocation2 + $0x38] sm:$0xff] %vm57, %v48
  %66 = vst.msk [vmem:[#allocation2 + $0x40] sm:$0xff] %vm57, %v49
  %67 = vst.msk [vmem:[#allocation2 + $0x48] sm:$0xff] %vm57, %v50
  %68 = vst.msk [vmem:[#allocation2 + $0x50] sm:$0xff] %vm57, %v51
  %69 = vst.msk [vmem:[#allocation2 + $0x58] sm:$0xff] %vm57, %v52
  %70 = vst.msk [vmem:[#allocation2 + $0x60] sm:$0xff] %vm57, %v53
  %71 = vst.msk [vmem:[#allocation2 + $0x68] sm:$0xff] %vm57, %v54
  %72 = vst.msk [vmem:[#allocation2 + $0x70] sm:$0xff] %vm57, %v55
  %73 = vst.msk [vmem:[#allocation2 + $0x78] sm:$0xff] %vm57, %v56
  %74 = vst.msk [vmem:[#allocation2 + $0x80] sm:$0xff] %vm57, 0.0
  %v75 = vld [vmem:[%s2] sm:$0x1]
  %v76 = vld [vmem:[#allocation2] sm:$0xff]
  %v77 = vld [vmem:[#allocation2 + $0x8] sm:$0xff]
  %v78 = vld [vmem:[#allocation2 + $0x10] sm:$0xff]
  %v79 = vld [vmem:[#allocation2 + $0x18] sm:$0xff]
  %v80 = vld [vmem:[#allocation2 + $0x20] sm:$0xff]
  %v81 = vld [vmem:[#allocation2 + $0x28] sm:$0xff]
  %v82 = vld [vmem:[#allocation2 + $0x30] sm:$0xff]
  %v83 = vld [vmem:[#allocation2 + $0x38] sm:$0xff]
  %v84 = vld [vmem:[#allocation2 + $0x40] sm:$0xff]
  %v85 = vld [vmem:[#allocation2 + $0x48] sm:$0xff]
  %v86 = vld [vmem:[#allocation2 + $0x50] sm:$0xff]
  %v87 = vld [vmem:[#allocation2 + $0x58] sm:$0xff]
  %v88 = vld [vmem:[#allocation2 + $0x60] sm:$0xff]
  %v89 = vld [vmem:[#allocation2 + $0x68] sm:$0xff]
  %v90 = vld [vmem:[#allocation2 + $0x70] sm:$0xff]
  %v91 = vld [vmem:[#allocation2 + $0x78] sm:$0xff]
  %v92 = vld [vmem:[%s1] sm:$0xff]
  %v93 = vld [vmem:[%s1 + $0x8] sm:$0xff]
  %v94 = vld [vmem:[%s1 + $0x10] sm:$0xff]
  %v95 = vld [vmem:[%s1 + $0x18] sm:$0xff]
  %v96 = vld [vmem:[%s1 + $0x20] sm:$0xff]
  %v97 = vld [vmem:[%s1 + $0x28] sm:$0xff]
  %v98 = vld [vmem:[%s1 + $0x30] sm:$0xff]
  %v99 = vld [vmem:[%s1 + $0x38] sm:$0xff]
  %v101 = vsel %vm57, %v76, 0
  %v104 = vsel %vm57, %v77, 0
  %v107 = vsel %vm57, %v78, 0
  %v110 = vsel %vm57, %v79, 0
  %v113 = vsel %vm57, %v80, 0
  %v116 = vsel %vm57, %v81, 0
  %v119 = vsel %vm57, %v82, 0
  %v122 = vsel %vm57, %v83, 0
  %v125 = vsel %vm57, %v84, 0
  %v128 = vsel %vm57, %v85, 0
  %v131 = vsel %vm57, %v86, 0
  %v134 = vsel %vm57, %v87, 0
  %v137 = vsel %vm57, %v88, 0
  %v140 = vsel %vm57, %v89, 0
  %v143 = vsel %vm57, %v90, 0
  %v146 = vsel %vm57, %v91, 0
  %148 = vmatprep.subr.mxu0 0.0
  %149 = vmatpush1.msra.mxu0 0.0
  %150 = vmatprep.subr.mxu0 0.0
  %151 = vmatpush1.msra.mxu0 0.0
  %152 = vmatprep.subr.mxu0 0.0
  %153 = vmatpush1.msra.mxu0 0.0
  %154 = vmatprep.subr.mxu0 0.0
  %155 = vmatpush1.msra.mxu0 0.0
  %156 = vmatprep.subr.mxu0 0.0
  %157 = vmatpush1.msra.mxu0 0.0
  %158 = vmatprep.subr.mxu0 0.0
  %159 = vmatpush1.msra.mxu0 0.0
  %160 = vmatprep.subr.mxu0 0.0
  %161 = vmatpush1.msra.mxu0 0.0
  %162 = vmatprep.subr.mxu0 0.0
  %163 = vmatpush1.msra.mxu0 0.0
  %164 = vmatprep.subr.mxu0 0.0
  %165 = vmatpush1.msra.mxu0 %v99
  %166 = vmatprep.subr.mxu0 0.0
  %167 = vmatpush1.msra.mxu0 %v98
  %168 = vmatprep.subr.mxu0 0.0
  %169 = vmatpush1.msra.mxu0 %v97
  %170 = vmatprep.subr.mxu0 0.0
  %171 = vmatpush1.msra.mxu0 %v96
  %172 = vmatprep.subr.mxu0 0.0
  %173 = vmatpush1.msra.mxu0 %v95
  %174 = vmatprep.subr.mxu0 0.0
  %175 = vmatpush1.msra.mxu0 %v94
  %176 = vmatprep.subr.mxu0 0.0
  %177 = vmatpush1.msra.mxu0 %v93
  %178 = vmatprep.subr.mxu0 0.0
  %179 = vmatpush1.msra.mxu0 %v92
  %180 = vmatprep.subr.mxu0 0.0
  %181 = vmatpush2.msra.mxu0 0.0
  %182 = vmatprep.subr.mxu0 0.0
  %183 = vmatpush2.msra.mxu0 0.0
  %184 = vmatprep.subr.mxu0 0.0
  %185 = vmatpush2.msra.mxu0 0.0
  %186 = vmatprep.subr.mxu0 0.0
  %187 = vmatpush2.msra.mxu0 0.0
  %188 = vmatprep.subr.mxu0 0.0
  %189 = vmatpush2.msra.mxu0 0.0
  %190 = vmatprep.subr.mxu0 0.0
  %191 = vmatpush2.msra.mxu0 0.0
  %192 = vmatprep.subr.mxu0 0.0
  %193 = vmatpush2.msra.mxu0 0.0
  %194 = vmatprep.subr.mxu0 0.0
  %195 = vmatpush2.msra.mxu0 0.0
  %196 = vmatprep.subr.mxu0 0.0
  %197 = vmatpush2.msra.mxu0 0.0
  %198 = vmatprep.subr.mxu0 0.0
  %199 = vmatpush2.msra.mxu0 0.0
  %200 = vmatprep.subr.mxu0 0.0
  %201 = vmatpush2.msra.mxu0 0.0
  %202 = vmatprep.subr.mxu0 0.0
  %203 = vmatpush2.msra.mxu0 0.0
  %204 = vmatprep.subr.mxu0 0.0
  %205 = vmatpush2.msra.mxu0 0.0
  %206 = vmatprep.subr.mxu0 0.0
  %207 = vmatpush2.msra.mxu0 0.0
  %208 = vmatprep.subr.mxu0 0.0
  %209 = vmatpush2.msra.mxu0 0.0
  %210 = vmatprep.subr.mxu0 0.0
  %211 = vmatpush2.msra.mxu0 0.0
  %212 = vmatprep.mubr.f32.mxu0 0.0
  %213 = vmatmul.mubr.f32.gmra.mxu0 %v101
  %v214 = vpop.f32.mrf.mxu0
  %v215 = vadd.f32 0.0, %v214
  %v216 = vpop.f32.mrf.mxu0
  %217 = vmatprep.mubr.f32.mxu0 0.0
  %218 = vmatmul.mubr.f32.gmra.mxu0 %v104
  %v219 = vpop.f32.mrf.mxu0
  %v220 = vadd.f32 0.0, %v219
  %v221 = vpop.f32.mrf.mxu0
  %222 = vmatprep.mubr.f32.mxu0 0.0
  %223 = vmatmul.mubr.f32.gmra.mxu0 %v107
  %v224 = vpop.f32.mrf.mxu0
  %v225 = vadd.f32 0.0, %v224
  %v226 = vpop.f32.mrf.mxu0
  %227 = vmatprep.mubr.f32.mxu0 0.0
  %228 = vmatmul.mubr.f32.gmra.mxu0 %v110
  %v229 = vpop.f32.mrf.mxu0
  %v230 = vadd.f32 0.0, %v229
  %v231 = vpop.f32.mrf.mxu0
  %232 = vmatprep.mubr.f32.mxu0 0.0
  %233 = vmatmul.mubr.f32.gmra.mxu0 %v113
  %v234 = vpop.f32.mrf.mxu0
  %v235 = vadd.f32 0.0, %v234
  %v236 = vpop.f32.mrf.mxu0
  %237 = vmatprep.mubr.f32.mxu0 0.0
  %238 = vmatmul.mubr.f32.gmra.mxu0 %v116
  %v239 = vpop.f32.mrf.mxu0
  %v240 = vadd.f32 0.0, %v239
  %v241 = vpop.f32.mrf.mxu0
  %242 = vmatprep.mubr.f32.mxu0 0.0
  %243 = vmatmul.mubr.f32.gmra.mxu0 %v119
  %v244 = vpop.f32.mrf.mxu0
  %v245 = vadd.f32 0.0, %v244
  %v246 = vpop.f32.mrf.mxu0
  %247 = vmatprep.mubr.f32.mxu0 0.0
  %248 = vmatmul.mubr.f32.gmra.mxu0 %v122
  %v249 = vpop.f32.mrf.mxu0
  %v250 = vadd.f32 0.0, %v249
  %v251 = vpop.f32.mrf.mxu0
  %252 = vmatprep.mubr.f32.mxu0 0.0
  %253 = vmatmul.mubr.f32.gmra.mxu0 %v125
  %v254 = vpop.f32.mrf.mxu0
  %v255 = vadd.f32 0.0, %v254
  %v256 = vpop.f32.mrf.mxu0
  %257 = vmatprep.mubr.f32.mxu0 0.0
  %258 = vmatmul.mubr.f32.gmra.mxu0 %v128
  %v259 = vpop.f32.mrf.mxu0
  %v260 = vadd.f32 0.0, %v259
  %v261 = vpop.f32.mrf.mxu0
  %262 = vmatprep.mubr.f32.mxu0 0.0
  %263 = vmatmul.mubr.f32.gmra.mxu0 %v131
  %v264 = vpop.f32.mrf.mxu0
  %v265 = vadd.f32 0.0, %v264
  %v266 = vpop.f32.mrf.mxu0
  %267 = vmatprep.mubr.f32.mxu0 0.0
  %268 = vmatmul.mubr.f32.gmra.mxu0 %v134
  %v269 = vpop.f32.mrf.mxu0
  %v270 = vadd.f32 0.0, %v269
  %v271 = vpop.f32.mrf.mxu0
  %272 = vmatprep.mubr.f32.mxu0 0.0
  %273 = vmatmul.mubr.f32.gmra.mxu0 %v137
  %v274 = vpop.f32.mrf.mxu0
  %v275 = vadd.f32 0.0, %v274
  %v276 = vpop.f32.mrf.mxu0
  %277 = vmatprep.mubr.f32.mxu0 0.0
  %278 = vmatmul.mubr.f32.gmra.mxu0 %v140
  %v279 = vpop.f32.mrf.mxu0
  %v280 = vadd.f32 0.0, %v279
  %v281 = vpop.f32.mrf.mxu0
  %282 = vmatprep.mubr.f32.mxu0 0.0
  %283 = vmatmul.mubr.f32.gmra.mxu0 %v143
  %v284 = vpop.f32.mrf.mxu0
  %v285 = vadd.f32 0.0, %v284
  %v286 = vpop.f32.mrf.mxu0
  %287 = vmatprep.mubr.f32.mxu0 0.0
  %288 = vmatmul.mubr.f32.gmra.mxu0 %v146
  %v289 = vpop.f32.mrf.mxu0
  %v290 = vadd.f32 0.0, %v289
  %v291 = vpop.f32.mrf.mxu0
  %292 = vdwg.mxu0
  %v294 = vlaneseq
  %v295 = vshrl.u32 %v294, 7
  %v296 = vsub.s32 0, %v295
  %v297 = vrot.slane %v75, %v296
  %v299 = vadd.f32 %v297, %v215
  %v300 = vadd.f32 %v297, %v220
  %v301 = vadd.f32 %v297, %v225
  %v302 = vadd.f32 %v297, %v230
  %v303 = vadd.f32 %v297, %v235
  %v304 = vadd.f32 %v297, %v240
  %v305 = vadd.f32 %v297, %v245
  %v306 = vadd.f32 %v297, %v250
  %v307 = vadd.f32 %v297, %v255
  %v308 = vadd.f32 %v297, %v260
  %v309 = vadd.f32 %v297, %v265
  %v310 = vadd.f32 %v297, %v270
  %v311 = vadd.f32 %v297, %v275
  %v312 = vadd.f32 %v297, %v280
  %v313 = vadd.f32 %v297, %v285
  %v314 = vadd.f32 %v297, %v290
  %v315 = vld [vmem:[#allocation2 + $0x1] sm:$0xff]
  %v316 = vld [vmem:[#allocation2 + $0x9] sm:$0xff]
  %v317 = vld [vmem:[#allocation2 + $0x11] sm:$0xff]
  %v318 = vld [vmem:[#allocation2 + $0x19] sm:$0xff]
  %v319 = vld [vmem:[#allocation2 + $0x21] sm:$0xff]
  %v320 = vld [vmem:[#allocation2 + $0x29] sm:$0xff]
  %v321 = vld [vmem:[#allocation2 + $0x31] sm:$0xff]
  %v322 = vld [vmem:[#allocation2 + $0x39] sm:$0xff]
  %v323 = vld [vmem:[#allocation2 + $0x41] sm:$0xff]
  %v324 = vld [vmem:[#allocation2 + $0x49] sm:$0xff]
  %v325 = vld [vmem:[#allocation2 + $0x51] sm:$0xff]
  %v326 = vld [vmem:[#allocation2 + $0x59] sm:$0xff]
  %v327 = vld [vmem:[#allocation2 + $0x61] sm:$0xff]
  %v328 = vld [vmem:[#allocation2 + $0x69] sm:$0xff]
  %v329 = vld [vmem:[#allocation2 + $0x71] sm:$0xff]
  %v330 = vld [vmem:[#allocation2 + $0x79] sm:$0xff]
  %s331 = scalar_lea.vmem %s1, 64
  %v332 = vld [vmem:[%s331] sm:$0xff]
  %v333 = vld [vmem:[%s331 + $0x8] sm:$0xff]
  %v334 = vld [vmem:[%s331 + $0x10] sm:$0xff]
  %v335 = vld [vmem:[%s331 + $0x18] sm:$0xff]
  %v336 = vld [vmem:[%s331 + $0x20] sm:$0xff]
  %v337 = vld [vmem:[%s331 + $0x28] sm:$0xff]
  %v338 = vld [vmem:[%s331 + $0x30] sm:$0xff]
  %v339 = vld [vmem:[%s331 + $0x38] sm:$0xff]
  %v341 = vsel %vm57, %v315, 0
  %v344 = vsel %vm57, %v316, 0
  %v347 = vsel %vm57, %v317, 0
  %v350 = vsel %vm57, %v318, 0
  %v353 = vsel %vm57, %v319, 0
  %v356 = vsel %vm57, %v320, 0
  %v359 = vsel %vm57, %v321, 0
  %v362 = vsel %vm57, %v322, 0
  %v365 = vsel %vm57, %v323, 0
  %v368 = vsel %vm57, %v324, 0
  %v371 = vsel %vm57, %v325, 0
  %v374 = vsel %vm57, %v326, 0
  %v377 = vsel %vm57, %v327, 0
  %v380 = vsel %vm57, %v328, 0
  %v383 = vsel %vm57, %v329, 0
  %v386 = vsel %vm57, %v330, 0
  %388 = vmatprep.subr.mxu0 0.0
  %389 = vmatpush1.msra.mxu0 0.0
  %390 = vmatprep.subr.mxu0 0.0
  %391 = vmatpush1.msra.mxu0 0.0
  %392 = vmatprep.subr.mxu0 0.0
  %393 = vmatpush1.msra.mxu0 0.0
  %394 = vmatprep.subr.mxu0 0.0
  %395 = vmatpush1.msra.mxu0 0.0
  %396 = vmatprep.subr.mxu0 0.0
  %397 = vmatpush1.msra.mxu0 0.0
  %398 = vmatprep.subr.mxu0 0.0
  %399 = vmatpush1.msra.mxu0 0.0
  %400 = vmatprep.subr.mxu0 0.0
  %401 = vmatpush1.msra.mxu0 0.0
  %402 = vmatprep.subr.mxu0 0.0
  %403 = vmatpush1.msra.mxu0 0.0
  %404 = vmatprep.subr.mxu0 0.0
  %405 = vmatpush1.msra.mxu0 %v339
  %406 = vmatprep.subr.mxu0 0.0
  %407 = vmatpush1.msra.mxu0 %v338
  %408 = vmatprep.subr.mxu0 0.0
  %409 = vmatpush1.msra.mxu0 %v337
  %410 = vmatprep.subr.mxu0 0.0
  %411 = vmatpush1.msra.mxu0 %v336
  %412 = vmatprep.subr.mxu0 0.0
  %413 = vmatpush1.msra.mxu0 %v335
  %414 = vmatprep.subr.mxu0 0.0
  %415 = vmatpush1.msra.mxu0 %v334
  %416 = vmatprep.subr.mxu0 0.0
  %417 = vmatpush1.msra.mxu0 %v333
  %418 = vmatprep.subr.mxu0 0.0
  %419 = vmatpush1.msra.mxu0 %v332
  %420 = vmatprep.subr.mxu0 0.0
  %421 = vmatpush2.msra.mxu0 0.0
  %422 = vmatprep.subr.mxu0 0.0
  %423 = vmatpush2.msra.mxu0 0.0
  %424 = vmatprep.subr.mxu0 0.0
  %425 = vmatpush2.msra.mxu0 0.0
  %426 = vmatprep.subr.mxu0 0.0
  %427 = vmatpush2.msra.mxu0 0.0
  %428 = vmatprep.subr.mxu0 0.0
  %429 = vmatpush2.msra.mxu0 0.0
  %430 = vmatprep.subr.mxu0 0.0
  %431 = vmatpush2.msra.mxu0 0.0
  %432 = vmatprep.subr.mxu0 0.0
  %433 = vmatpush2.msra.mxu0 0.0
  %434 = vmatprep.subr.mxu0 0.0
  %435 = vmatpush2.msra.mxu0 0.0
  %436 = vmatprep.subr.mxu0 0.0
  %437 = vmatpush2.msra.mxu0 0.0
  %438 = vmatprep.subr.mxu0 0.0
  %439 = vmatpush2.msra.mxu0 0.0
  %440 = vmatprep.subr.mxu0 0.0
  %441 = vmatpush2.msra.mxu0 0.0
  %442 = vmatprep.subr.mxu0 0.0
  %443 = vmatpush2.msra.mxu0 0.0
  %444 = vmatprep.subr.mxu0 0.0
  %445 = vmatpush2.msra.mxu0 0.0
  %446 = vmatprep.subr.mxu0 0.0
  %447 = vmatpush2.msra.mxu0 0.0
  %448 = vmatprep.subr.mxu0 0.0
  %449 = vmatpush2.msra.mxu0 0.0
  %450 = vmatprep.subr.mxu0 0.0
  %451 = vmatpush2.msra.mxu0 0.0
  %452 = vmatprep.mubr.f32.mxu0 0.0
  %453 = vmatmul.mubr.f32.gmra.mxu0 %v341
  %v454 = vpop.f32.mrf.mxu0
  %v455 = vadd.f32 0.0, %v454
  %v456 = vpop.f32.mrf.mxu0
  %457 = vmatprep.mubr.f32.mxu0 0.0
  %458 = vmatmul.mubr.f32.gmra.mxu0 %v344
  %v459 = vpop.f32.mrf.mxu0
  %v460 = vadd.f32 0.0, %v459
  %v461 = vpop.f32.mrf.mxu0
  %462 = vmatprep.mubr.f32.mxu0 0.0
  %463 = vmatmul.mubr.f32.gmra.mxu0 %v347
  %v464 = vpop.f32.mrf.mxu0
  %v465 = vadd.f32 0.0, %v464
  %v466 = vpop.f32.mrf.mxu0
  %467 = vmatprep.mubr.f32.mxu0 0.0
  %468 = vmatmul.mubr.f32.gmra.mxu0 %v350
  %v469 = vpop.f32.mrf.mxu0
  %v470 = vadd.f32 0.0, %v469
  %v471 = vpop.f32.mrf.mxu0
  %472 = vmatprep.mubr.f32.mxu0 0.0
  %473 = vmatmul.mubr.f32.gmra.mxu0 %v353
  %v474 = vpop.f32.mrf.mxu0
  %v475 = vadd.f32 0.0, %v474
  %v476 = vpop.f32.mrf.mxu0
  %477 = vmatprep.mubr.f32.mxu0 0.0
  %478 = vmatmul.mubr.f32.gmra.mxu0 %v356
  %v479 = vpop.f32.mrf.mxu0
  %v480 = vadd.f32 0.0, %v479
  %v481 = vpop.f32.mrf.mxu0
  %482 = vmatprep.mubr.f32.mxu0 0.0
  %483 = vmatmul.mubr.f32.gmra.mxu0 %v359
  %v484 = vpop.f32.mrf.mxu0
  %v485 = vadd.f32 0.0, %v484
  %v486 = vpop.f32.mrf.mxu0
  %487 = vmatprep.mubr.f32.mxu0 0.0
  %488 = vmatmul.mubr.f32.gmra.mxu0 %v362
  %v489 = vpop.f32.mrf.mxu0
  %v490 = vadd.f32 0.0, %v489
  %v491 = vpop.f32.mrf.mxu0
  %492 = vmatprep.mubr.f32.mxu0 0.0
  %493 = vmatmul.mubr.f32.gmra.mxu0 %v365
  %v494 = vpop.f32.mrf.mxu0
  %v495 = vadd.f32 0.0, %v494
  %v496 = vpop.f32.mrf.mxu0
  %497 = vmatprep.mubr.f32.mxu0 0.0
  %498 = vmatmul.mubr.f32.gmra.mxu0 %v368
  %v499 = vpop.f32.mrf.mxu0
  %v500 = vadd.f32 0.0, %v499
  %v501 = vpop.f32.mrf.mxu0
  %502 = vmatprep.mubr.f32.mxu0 0.0
  %503 = vmatmul.mubr.f32.gmra.mxu0 %v371
  %v504 = vpop.f32.mrf.mxu0
  %v505 = vadd.f32 0.0, %v504
  %v506 = vpop.f32.mrf.mxu0
  %507 = vmatprep.mubr.f32.mxu0 0.0
  %508 = vmatmul.mubr.f32.gmra.mxu0 %v374
  %v509 = vpop.f32.mrf.mxu0
  %v510 = vadd.f32 0.0, %v509
  %v511 = vpop.f32.mrf.mxu0
  %512 = vmatprep.mubr.f32.mxu0 0.0
  %513 = vmatmul.mubr.f32.gmra.mxu0 %v377
  %v514 = vpop.f32.mrf.mxu0
  %v515 = vadd.f32 0.0, %v514
  %v516 = vpop.f32.mrf.mxu0
  %517 = vmatprep.mubr.f32.mxu0 0.0
  %518 = vmatmul.mubr.f32.gmra.mxu0 %v380
  %v519 = vpop.f32.mrf.mxu0
  %v520 = vadd.f32 0.0, %v519
  %v521 = vpop.f32.mrf.mxu0
  %522 = vmatprep.mubr.f32.mxu0 0.0
  %523 = vmatmul.mubr.f32.gmra.mxu0 %v383
  %v524 = vpop.f32.mrf.mxu0
  %v525 = vadd.f32 0.0, %v524
  %v526 = vpop.f32.mrf.mxu0
  %527 = vmatprep.mubr.f32.mxu0 0.0
  %528 = vmatmul.mubr.f32.gmra.mxu0 %v386
  %v529 = vpop.f32.mrf.mxu0
  %v530 = vadd.f32 0.0, %v529
  %v531 = vpop.f32.mrf.mxu0
  %532 = vdwg.mxu0
  %v533 = vadd.f32 %v299, %v455
  %v534 = vadd.f32 %v300, %v460
  %v535 = vadd.f32 %v301, %v465
  %v536 = vadd.f32 %v302, %v470
  %v537 = vadd.f32 %v303, %v475
  %v538 = vadd.f32 %v304, %v480
  %v539 = vadd.f32 %v305, %v485
  %v540 = vadd.f32 %v306, %v490
  %v541 = vadd.f32 %v307, %v495
  %v542 = vadd.f32 %v308, %v500
  %v543 = vadd.f32 %v309, %v505
  %v544 = vadd.f32 %v310, %v510
  %v545 = vadd.f32 %v311, %v515
  %v546 = vadd.f32 %v312, %v520
  %v547 = vadd.f32 %v313, %v525
  %v548 = vadd.f32 %v314, %v530
  %v549 = vld [vmem:[#allocation2 + $0x2] sm:$0xff]
  %v550 = vld [vmem:[#allocation2 + $0xa] sm:$0xff]
  %v551 = vld [vmem:[#allocation2 + $0x12] sm:$0xff]
  %v552 = vld [vmem:[#allocation2 + $0x1a] sm:$0xff]
  %v553 = vld [vmem:[#allocation2 + $0x22] sm:$0xff]
  %v554 = vld [vmem:[#allocation2 + $0x2a] sm:$0xff]
  %v555 = vld [vmem:[#allocation2 + $0x32] sm:$0xff]
  %v556 = vld [vmem:[#allocation2 + $0x3a] sm:$0xff]
  %v557 = vld [vmem:[#allocation2 + $0x42] sm:$0xff]
  %v558 = vld [vmem:[#allocation2 + $0x4a] sm:$0xff]
  %v559 = vld [vmem:[#allocation2 + $0x52] sm:$0xff]
  %v560 = vld [vmem:[#allocation2 + $0x5a] sm:$0xff]
  %v561 = vld [vmem:[#allocation2 + $0x62] sm:$0xff]
  %v562 = vld [vmem:[#allocation2 + $0x6a] sm:$0xff]
  %v563 = vld [vmem:[#allocation2 + $0x72] sm:$0xff]
  %v564 = vld [vmem:[#allocation2 + $0x7a] sm:$0xff]
  %s565 = scalar_lea.vmem %s1, 128
  %v566 = vld [vmem:[%s565] sm:$0xff]
  %v567 = vld [vmem:[%s565 + $0x8] sm:$0xff]
  %v568 = vld [vmem:[%s565 + $0x10] sm:$0xff]
  %v569 = vld [vmem:[%s565 + $0x18] sm:$0xff]
  %v570 = vld [vmem:[%s565 + $0x20] sm:$0xff]
  %v571 = vld [vmem:[%s565 + $0x28] sm:$0xff]
  %v572 = vld [vmem:[%s565 + $0x30] sm:$0xff]
  %v573 = vld [vmem:[%s565 + $0x38] sm:$0xff]
  %v575 = vsel %vm57, %v549, 0
  %v578 = vsel %vm57, %v550, 0
  %v581 = vsel %vm57, %v551, 0
  %v584 = vsel %vm57, %v552, 0
  %v587 = vsel %vm57, %v553, 0
  %v590 = vsel %vm57, %v554, 0
  %v593 = vsel %vm57, %v555, 0
  %v596 = vsel %vm57, %v556, 0
  %v599 = vsel %vm57, %v557, 0
  %v602 = vsel %vm57, %v558, 0
  %v605 = vsel %vm57, %v559, 0
  %v608 = vsel %vm57, %v560, 0
  %v611 = vsel %vm57, %v561, 0
  %v614 = vsel %vm57, %v562, 0
  %v617 = vsel %vm57, %v563, 0
  %v620 = vsel %vm57, %v564, 0
  %622 = vmatprep.subr.mxu0 0.0
  %623 = vmatpush1.msra.mxu0 0.0
  %624 = vmatprep.subr.mxu0 0.0
  %625 = vmatpush1.msra.mxu0 0.0
  %626 = vmatprep.subr.mxu0 0.0
  %627 = vmatpush1.msra.mxu0 0.0
  %628 = vmatprep.subr.mxu0 0.0
  %629 = vmatpush1.msra.mxu0 0.0
  %630 = vmatprep.subr.mxu0 0.0
  %631 = vmatpush1.msra.mxu0 0.0
  %632 = vmatprep.subr.mxu0 0.0
  %633 = vmatpush1.msra.mxu0 0.0
  %634 = vmatprep.subr.mxu0 0.0
  %635 = vmatpush1.msra.mxu0 0.0
  %636 = vmatprep.subr.mxu0 0.0
  %637 = vmatpush1.msra.mxu0 0.0
  %638 = vmatprep.subr.mxu0 0.0
  %639 = vmatpush1.msra.mxu0 %v573
  %640 = vmatprep.subr.mxu0 0.0
  %641 = vmatpush1.msra.mxu0 %v572
  %642 = vmatprep.subr.mxu0 0.0
  %643 = vmatpush1.msra.mxu0 %v571
  %644 = vmatprep.subr.mxu0 0.0
  %645 = vmatpush1.msra.mxu0 %v570
  %646 = vmatprep.subr.mxu0 0.0
  %647 = vmatpush1.msra.mxu0 %v569
  %648 = vmatprep.subr.mxu0 0.0
  %649 = vmatpush1.msra.mxu0 %v568
  %650 = vmatprep.subr.mxu0 0.0
  %651 = vmatpush1.msra.mxu0 %v567
  %652 = vmatprep.subr.mxu0 0.0
  %653 = vmatpush1.msra.mxu0 %v566
  %654 = vmatprep.subr.mxu0 0.0
  %655 = vmatpush2.msra.mxu0 0.0
  %656 = vmatprep.subr.mxu0 0.0
  %657 = vmatpush2.msra.mxu0 0.0
  %658 = vmatprep.subr.mxu0 0.0
  %659 = vmatpush2.msra.mxu0 0.0
  %660 = vmatprep.subr.mxu0 0.0
  %661 = vmatpush2.msra.mxu0 0.0
  %662 = vmatprep.subr.mxu0 0.0
  %663 = vmatpush2.msra.mxu0 0.0
  %664 = vmatprep.subr.mxu0 0.0
  %665 = vmatpush2.msra.mxu0 0.0
  %666 = vmatprep.subr.mxu0 0.0
  %667 = vmatpush2.msra.mxu0 0.0
  %668 = vmatprep.subr.mxu0 0.0
  %669 = vmatpush2.msra.mxu0 0.0
  %670 = vmatprep.subr.mxu0 0.0
  %671 = vmatpush2.msra.mxu0 0.0
  %672 = vmatprep.subr.mxu0 0.0
  %673 = vmatpush2.msra.mxu0 0.0
  %674 = vmatprep.subr.mxu0 0.0
  %675 = vmatpush2.msra.mxu0 0.0
  %676 = vmatprep.subr.mxu0 0.0
  %677 = vmatpush2.msra.mxu0 0.0
  %678 = vmatprep.subr.mxu0 0.0
  %679 = vmatpush2.msra.mxu0 0.0
  %680 = vmatprep.subr.mxu0 0.0
  %681 = vmatpush2.msra.mxu0 0.0
  %682 = vmatprep.subr.mxu0 0.0
  %683 = vmatpush2.msra.mxu0 0.0
  %684 = vmatprep.subr.mxu0 0.0
  %685 = vmatpush2.msra.mxu0 0.0
  %686 = vmatprep.mubr.f32.mxu0 0.0
  %687 = vmatmul.mubr.f32.gmra.mxu0 %v575
  %v688 = vpop.f32.mrf.mxu0
  %v689 = vadd.f32 0.0, %v688
  %v690 = vpop.f32.mrf.mxu0
  %691 = vmatprep.mubr.f32.mxu0 0.0
  %692 = vmatmul.mubr.f32.gmra.mxu0 %v578
  %v693 = vpop.f32.mrf.mxu0
  %v694 = vadd.f32 0.0, %v693
  %v695 = vpop.f32.mrf.mxu0
  %696 = vmatprep.mubr.f32.mxu0 0.0
  %697 = vmatmul.mubr.f32.gmra.mxu0 %v581
  %v698 = vpop.f32.mrf.mxu0
  %v699 = vadd.f32 0.0, %v698
  %v700 = vpop.f32.mrf.mxu0
  %701 = vmatprep.mubr.f32.mxu0 0.0
  %702 = vmatmul.mubr.f32.gmra.mxu0 %v584
  %v703 = vpop.f32.mrf.mxu0
  %v704 = vadd.f32 0.0, %v703
  %v705 = vpop.f32.mrf.mxu0
  %706 = vmatprep.mubr.f32.mxu0 0.0
  %707 = vmatmul.mubr.f32.gmra.mxu0 %v587
  %v708 = vpop.f32.mrf.mxu0
  %v709 = vadd.f32 0.0, %v708
  %v710 = vpop.f32.mrf.mxu0
  %711 = vmatprep.mubr.f32.mxu0 0.0
  %712 = vmatmul.mubr.f32.gmra.mxu0 %v590
  %v713 = vpop.f32.mrf.mxu0
  %v714 = vadd.f32 0.0, %v713
  %v715 = vpop.f32.mrf.mxu0
  %716 = vmatprep.mubr.f32.mxu0 0.0
  %717 = vmatmul.mubr.f32.gmra.mxu0 %v593
  %v718 = vpop.f32.mrf.mxu0
  %v719 = vadd.f32 0.0, %v718
  %v720 = vpop.f32.mrf.mxu0
  %721 = vmatprep.mubr.f32.mxu0 0.0
  %722 = vmatmul.mubr.f32.gmra.mxu0 %v596
  %v723 = vpop.f32.mrf.mxu0
  %v724 = vadd.f32 0.0, %v723
  %v725 = vpop.f32.mrf.mxu0
  %726 = vmatprep.mubr.f32.mxu0 0.0
  %727 = vmatmul.mubr.f32.gmra.mxu0 %v599
  %v728 = vpop.f32.mrf.mxu0
  %v729 = vadd.f32 0.0, %v728
  %v730 = vpop.f32.mrf.mxu0
  %731 = vmatprep.mubr.f32.mxu0 0.0
  %732 = vmatmul.mubr.f32.gmra.mxu0 %v602
  %v733 = vpop.f32.mrf.mxu0
  %v734 = vadd.f32 0.0, %v733
  %v735 = vpop.f32.mrf.mxu0
  %736 = vmatprep.mubr.f32.mxu0 0.0
  %737 = vmatmul.mubr.f32.gmra.mxu0 %v605
  %v738 = vpop.f32.mrf.mxu0
  %v739 = vadd.f32 0.0, %v738
  %v740 = vpop.f32.mrf.mxu0
  %741 = vmatprep.mubr.f32.mxu0 0.0
  %742 = vmatmul.mubr.f32.gmra.mxu0 %v608
  %v743 = vpop.f32.mrf.mxu0
  %v744 = vadd.f32 0.0, %v743
  %v745 = vpop.f32.mrf.mxu0
  %746 = vmatprep.mubr.f32.mxu0 0.0
  %747 = vmatmul.mubr.f32.gmra.mxu0 %v611
  %v748 = vpop.f32.mrf.mxu0
  %v749 = vadd.f32 0.0, %v748
  %v750 = vpop.f32.mrf.mxu0
  %751 = vmatprep.mubr.f32.mxu0 0.0
  %752 = vmatmul.mubr.f32.gmra.mxu0 %v614
  %v753 = vpop.f32.mrf.mxu0
  %v754 = vadd.f32 0.0, %v753
  %v755 = vpop.f32.mrf.mxu0
  %756 = vmatprep.mubr.f32.mxu0 0.0
  %757 = vmatmul.mubr.f32.gmra.mxu0 %v617
  %v758 = vpop.f32.mrf.mxu0
  %v759 = vadd.f32 0.0, %v758
  %v760 = vpop.f32.mrf.mxu0
  %761 = vmatprep.mubr.f32.mxu0 0.0
  %762 = vmatmul.mubr.f32.gmra.mxu0 %v620
  %v763 = vpop.f32.mrf.mxu0
  %v764 = vadd.f32 0.0, %v763
  %v765 = vpop.f32.mrf.mxu0
  %766 = vdwg.mxu0
  %v767 = vadd.f32 %v533, %v689
  %v768 = vadd.f32 %v534, %v694
  %v769 = vadd.f32 %v535, %v699
  %v770 = vadd.f32 %v536, %v704
  %v771 = vadd.f32 %v537, %v709
  %v772 = vadd.f32 %v538, %v714
  %v773 = vadd.f32 %v539, %v719
  %v774 = vadd.f32 %v540, %v724
  %v775 = vadd.f32 %v541, %v729
  %v776 = vadd.f32 %v542, %v734
  %v777 = vadd.f32 %v543, %v739
  %v778 = vadd.f32 %v544, %v744
  %v779 = vadd.f32 %v545, %v749
  %v780 = vadd.f32 %v546, %v754
  %v781 = vadd.f32 %v547, %v759
  %v782 = vadd.f32 %v548, %v764
  %s783 = scalar_lea.vmem %s1, 192
  %v784 = vld [vmem:[%s783] sm:$0xff]
  %v785 = vld [vmem:[%s783 + $0x8] sm:$0xff]
  %v786 = vld [vmem:[%s783 + $0x10] sm:$0xff]
  %v787 = vld [vmem:[%s783 + $0x18] sm:$0xff]
  %v788 = vld [vmem:[%s783 + $0x20] sm:$0xff]
  %v789 = vld [vmem:[%s783 + $0x28] sm:$0xff]
  %v790 = vld [vmem:[%s783 + $0x30] sm:$0xff]
  %v791 = vld [vmem:[%s783 + $0x38] sm:$0xff]
  %792 = vmatprep.subr.mxu0 0.0
  %793 = vmatpush1.msra.mxu0 0.0
  %794 = vmatprep.subr.mxu0 0.0
  %795 = vmatpush1.msra.mxu0 0.0
  %796 = vmatprep.subr.mxu0 0.0
  %797 = vmatpush1.msra.mxu0 0.0
  %798 = vmatprep.subr.mxu0 0.0
  %799 = vmatpush1.msra.mxu0 0.0
  %800 = vmatprep.subr.mxu0 0.0
  %801 = vmatpush1.msra.mxu0 0.0
  %802 = vmatprep.subr.mxu0 0.0
  %803 = vmatpush1.msra.mxu0 0.0
  %804 = vmatprep.subr.mxu0 0.0
  %805 = vmatpush1.msra.mxu0 0.0
  %806 = vmatprep.subr.mxu0 0.0
  %807 = vmatpush1.msra.mxu0 0.0
  %808 = vmatprep.subr.mxu0 0.0
  %809 = vmatpush1.msra.mxu0 %v791
  %810 = vmatprep.subr.mxu0 0.0
  %811 = vmatpush1.msra.mxu0 %v790
  %812 = vmatprep.subr.mxu0 0.0
  %813 = vmatpush1.msra.mxu0 %v789
  %814 = vmatprep.subr.mxu0 0.0
  %815 = vmatpush1.msra.mxu0 %v788
  %816 = vmatprep.subr.mxu0 0.0
  %817 = vmatpush1.msra.mxu0 %v787
  %818 = vmatprep.subr.mxu0 0.0
  %819 = vmatpush1.msra.mxu0 %v786
  %820 = vmatprep.subr.mxu0 0.0
  %821 = vmatpush1.msra.mxu0 %v785
  %822 = vmatprep.subr.mxu0 0.0
  %823 = vmatpush1.msra.mxu0 %v784
  %824 = vmatprep.subr.mxu0 0.0
  %825 = vmatpush2.msra.mxu0 0.0
  %826 = vmatprep.subr.mxu0 0.0
  %827 = vmatpush2.msra.mxu0 0.0
  %828 = vmatprep.subr.mxu0 0.0
  %829 = vmatpush2.msra.mxu0 0.0
  %830 = vmatprep.subr.mxu0 0.0
  %831 = vmatpush2.msra.mxu0 0.0
  %832 = vmatprep.subr.mxu0 0.0
  %833 = vmatpush2.msra.mxu0 0.0
  %834 = vmatprep.subr.mxu0 0.0
  %835 = vmatpush2.msra.mxu0 0.0
  %836 = vmatprep.subr.mxu0 0.0
  %837 = vmatpush2.msra.mxu0 0.0
  %838 = vmatprep.subr.mxu0 0.0
  %839 = vmatpush2.msra.mxu0 0.0
  %840 = vmatprep.subr.mxu0 0.0
  %841 = vmatpush2.msra.mxu0 0.0
  %842 = vmatprep.subr.mxu0 0.0
  %843 = vmatpush2.msra.mxu0 0.0
  %844 = vmatprep.subr.mxu0 0.0
  %845 = vmatpush2.msra.mxu0 0.0
  %846 = vmatprep.subr.mxu0 0.0
  %847 = vmatpush2.msra.mxu0 0.0
  %848 = vmatprep.subr.mxu0 0.0
  %849 = vmatpush2.msra.mxu0 0.0
  %850 = vmatprep.subr.mxu0 0.0
  %851 = vmatpush2.msra.mxu0 0.0
  %852 = vmatprep.subr.mxu0 0.0
  %853 = vmatpush2.msra.mxu0 0.0
  %854 = vmatprep.subr.mxu0 0.0
  %855 = vmatpush2.msra.mxu0 0.0
  %856 = vmatprep.mubr.f32.mxu0 0.0
  %857 = vmatmul.mubr.f32.gmra.mxu0 %v101
  %v858 = vpop.f32.mrf.mxu0
  %v859 = vadd.f32 0.0, %v858
  %v860 = vpop.f32.mrf.mxu0
  %861 = vmatprep.mubr.f32.mxu0 0.0
  %862 = vmatmul.mubr.f32.gmra.mxu0 %v104
  %v863 = vpop.f32.mrf.mxu0
  %v864 = vadd.f32 0.0, %v863
  %v865 = vpop.f32.mrf.mxu0
  %866 = vmatprep.mubr.f32.mxu0 0.0
  %867 = vmatmul.mubr.f32.gmra.mxu0 %v107
  %v868 = vpop.f32.mrf.mxu0
  %v869 = vadd.f32 0.0, %v868
  %v870 = vpop.f32.mrf.mxu0
  %871 = vmatprep.mubr.f32.mxu0 0.0
  %872 = vmatmul.mubr.f32.gmra.mxu0 %v110
  %v873 = vpop.f32.mrf.mxu0
  %v874 = vadd.f32 0.0, %v873
  %v875 = vpop.f32.mrf.mxu0
  %876 = vmatprep.mubr.f32.mxu0 0.0
  %877 = vmatmul.mubr.f32.gmra.mxu0 %v113
  %v878 = vpop.f32.mrf.mxu0
  %v879 = vadd.f32 0.0, %v878
  %v880 = vpop.f32.mrf.mxu0
  %881 = vmatprep.mubr.f32.mxu0 0.0
  %882 = vmatmul.mubr.f32.gmra.mxu0 %v116
  %v883 = vpop.f32.mrf.mxu0
  %v884 = vadd.f32 0.0, %v883
  %v885 = vpop.f32.mrf.mxu0
  %886 = vmatprep.mubr.f32.mxu0 0.0
  %887 = vmatmul.mubr.f32.gmra.mxu0 %v119
  %v888 = vpop.f32.mrf.mxu0
  %v889 = vadd.f32 0.0, %v888
  %v890 = vpop.f32.mrf.mxu0
  %891 = vmatprep.mubr.f32.mxu0 0.0
  %892 = vmatmul.mubr.f32.gmra.mxu0 %v122
  %v893 = vpop.f32.mrf.mxu0
  %v894 = vadd.f32 0.0, %v893
  %v895 = vpop.f32.mrf.mxu0
  %896 = vmatprep.mubr.f32.mxu0 0.0
  %897 = vmatmul.mubr.f32.gmra.mxu0 %v125
  %v898 = vpop.f32.mrf.mxu0
  %v899 = vadd.f32 0.0, %v898
  %v900 = vpop.f32.mrf.mxu0
  %901 = vmatprep.mubr.f32.mxu0 0.0
  %902 = vmatmul.mubr.f32.gmra.mxu0 %v128
  %v903 = vpop.f32.mrf.mxu0
  %v904 = vadd.f32 0.0, %v903
  %v905 = vpop.f32.mrf.mxu0
  %906 = vmatprep.mubr.f32.mxu0 0.0
  %907 = vmatmul.mubr.f32.gmra.mxu0 %v131
  %v908 = vpop.f32.mrf.mxu0
  %v909 = vadd.f32 0.0, %v908
  %v910 = vpop.f32.mrf.mxu0
  %911 = vmatprep.mubr.f32.mxu0 0.0
  %912 = vmatmul.mubr.f32.gmra.mxu0 %v134
  %v913 = vpop.f32.mrf.mxu0
  %v914 = vadd.f32 0.0, %v913
  %v915 = vpop.f32.mrf.mxu0
  %916 = vmatprep.mubr.f32.mxu0 0.0
  %917 = vmatmul.mubr.f32.gmra.mxu0 %v137
  %v918 = vpop.f32.mrf.mxu0
  %v919 = vadd.f32 0.0, %v918
  %v920 = vpop.f32.mrf.mxu0
  %921 = vmatprep.mubr.f32.mxu0 0.0
  %922 = vmatmul.mubr.f32.gmra.mxu0 %v140
  %v923 = vpop.f32.mrf.mxu0
  %v924 = vadd.f32 0.0, %v923
  %v925 = vpop.f32.mrf.mxu0
  %926 = vmatprep.mubr.f32.mxu0 0.0
  %927 = vmatmul.mubr.f32.gmra.mxu0 %v143
  %v928 = vpop.f32.mrf.mxu0
  %v929 = vadd.f32 0.0, %v928
  %v930 = vpop.f32.mrf.mxu0
  %931 = vmatprep.mubr.f32.mxu0 0.0
  %932 = vmatmul.mubr.f32.gmra.mxu0 %v146
  %v933 = vpop.f32.mrf.mxu0
  %v934 = vadd.f32 0.0, %v933
  %v935 = vpop.f32.mrf.mxu0
  %936 = vdwg.mxu0
  %v937 = vadd.f32 %v297, %v859
  %v938 = vadd.f32 %v297, %v864
  %v939 = vadd.f32 %v297, %v869
  %v940 = vadd.f32 %v297, %v874
  %v941 = vadd.f32 %v297, %v879
  %v942 = vadd.f32 %v297, %v884
  %v943 = vadd.f32 %v297, %v889
  %v944 = vadd.f32 %v297, %v894
  %v945 = vadd.f32 %v297, %v899
  %v946 = vadd.f32 %v297, %v904
  %v947 = vadd.f32 %v297, %v909
  %v948 = vadd.f32 %v297, %v914
  %v949 = vadd.f32 %v297, %v919
  %v950 = vadd.f32 %v297, %v924
  %v951 = vadd.f32 %v297, %v929
  %v952 = vadd.f32 %v297, %v934
  %s953 = scalar_lea.vmem %s1, 256
  %v954 = vld [vmem:[%s953] sm:$0xff]
  %v955 = vld [vmem:[%s953 + $0x8] sm:$0xff]
  %v956 = vld [vmem:[%s953 + $0x10] sm:$0xff]
  %v957 = vld [vmem:[%s953 + $0x18] sm:$0xff]
  %v958 = vld [vmem:[%s953 + $0x20] sm:$0xff]
  %v959 = vld [vmem:[%s953 + $0x28] sm:$0xff]
  %v960 = vld [vmem:[%s953 + $0x30] sm:$0xff]
  %v961 = vld [vmem:[%s953 + $0x38] sm:$0xff]
  %962 = vmatprep.subr.mxu0 0.0
  %963 = vmatpush1.msra.mxu0 0.0
  %964 = vmatprep.subr.mxu0 0.0
  %965 = vmatpush1.msra.mxu0 0.0
  %966 = vmatprep.subr.mxu0 0.0
  %967 = vmatpush1.msra.mxu0 0.0
  %968 = vmatprep.subr.mxu0 0.0
  %969 = vmatpush1.msra.mxu0 0.0
  %970 = vmatprep.subr.mxu0 0.0
  %971 = vmatpush1.msra.mxu0 0.0
  %972 = vmatprep.subr.mxu0 0.0
  %973 = vmatpush1.msra.mxu0 0.0
  %974 = vmatprep.subr.mxu0 0.0
  %975 = vmatpush1.msra.mxu0 0.0
  %976 = vmatprep.subr.mxu0 0.0
  %977 = vmatpush1.msra.mxu0 0.0
  %978 = vmatprep.subr.mxu0 0.0
  %979 = vmatpush1.msra.mxu0 %v961
  %980 = vmatprep.subr.mxu0 0.0
  %981 = vmatpush1.msra.mxu0 %v960
  %982 = vmatprep.subr.mxu0 0.0
  %983 = vmatpush1.msra.mxu0 %v959
  %984 = vmatprep.subr.mxu0 0.0
  %985 = vmatpush1.msra.mxu0 %v958
  %986 = vmatprep.subr.mxu0 0.0
  %987 = vmatpush1.msra.mxu0 %v957
  %988 = vmatprep.subr.mxu0 0.0
  %989 = vmatpush1.msra.mxu0 %v956
  %990 = vmatprep.subr.mxu0 0.0
  %991 = vmatpush1.msra.mxu0 %v955
  %992 = vmatprep.subr.mxu0 0.0
  %993 = vmatpush1.msra.mxu0 %v954
  %994 = vmatprep.subr.mxu0 0.0
  %995 = vmatpush2.msra.mxu0 0.0
  %996 = vmatprep.subr.mxu0 0.0
  %997 = vmatpush2.msra.mxu0 0.0
  %998 = vmatprep.subr.mxu0 0.0
  %999 = vmatpush2.msra.mxu0 0.0
  %1000 = vmatprep.subr.mxu0 0.0
  %1001 = vmatpush2.msra.mxu0 0.0
  %1002 = vmatprep.subr.mxu0 0.0
  %1003 = vmatpush2.msra.mxu0 0.0
  %1004 = vmatprep.subr.mxu0 0.0
  %1005 = vmatpush2.msra.mxu0 0.0
  %1006 = vmatprep.subr.mxu0 0.0
  %1007 = vmatpush2.msra.mxu0 0.0
  %1008 = vmatprep.subr.mxu0 0.0
  %1009 = vmatpush2.msra.mxu0 0.0
  %1010 = vmatprep.subr.mxu0 0.0
  %1011 = vmatpush2.msra.mxu0 0.0
  %1012 = vmatprep.subr.mxu0 0.0
  %1013 = vmatpush2.msra.mxu0 0.0
  %1014 = vmatprep.subr.mxu0 0.0
  %1015 = vmatpush2.msra.mxu0 0.0
  %1016 = vmatprep.subr.mxu0 0.0
  %1017 = vmatpush2.msra.mxu0 0.0
  %1018 = vmatprep.subr.mxu0 0.0
  %1019 = vmatpush2.msra.mxu0 0.0
  %1020 = vmatprep.subr.mxu0 0.0
  %1021 = vmatpush2.msra.mxu0 0.0
  %1022 = vmatprep.subr.mxu0 0.0
  %1023 = vmatpush2.msra.mxu0 0.0
  %1024 = vmatprep.subr.mxu0 0.0
  %1025 = vmatpush2.msra.mxu0 0.0
  %1026 = vmatprep.mubr.f32.mxu0 0.0
  %1027 = vmatmul.mubr.f32.gmra.mxu0 %v341
  %v1028 = vpop.f32.mrf.mxu0
  %v1029 = vadd.f32 0.0, %v1028
  %v1030 = vpop.f32.mrf.mxu0
  %1031 = vmatprep.mubr.f32.mxu0 0.0
  %1032 = vmatmul.mubr.f32.gmra.mxu0 %v344
  %v1033 = vpop.f32.mrf.mxu0
  %v1034 = vadd.f32 0.0, %v1033
  %v1035 = vpop.f32.mrf.mxu0
  %1036 = vmatprep.mubr.f32.mxu0 0.0
  %1037 = vmatmul.mubr.f32.gmra.mxu0 %v347
  %v1038 = vpop.f32.mrf.mxu0
  %v1039 = vadd.f32 0.0, %v1038
  %v1040 = vpop.f32.mrf.mxu0
  %1041 = vmatprep.mubr.f32.mxu0 0.0
  %1042 = vmatmul.mubr.f32.gmra.mxu0 %v350
  %v1043 = vpop.f32.mrf.mxu0
  %v1044 = vadd.f32 0.0, %v1043
  %v1045 = vpop.f32.mrf.mxu0
  %1046 = vmatprep.mubr.f32.mxu0 0.0
  %1047 = vmatmul.mubr.f32.gmra.mxu0 %v353
  %v1048 = vpop.f32.mrf.mxu0
  %v1049 = vadd.f32 0.0, %v1048
  %v1050 = vpop.f32.mrf.mxu0
  %1051 = vmatprep.mubr.f32.mxu0 0.0
  %1052 = vmatmul.mubr.f32.gmra.mxu0 %v356
  %v1053 = vpop.f32.mrf.mxu0
  %v1054 = vadd.f32 0.0, %v1053
  %v1055 = vpop.f32.mrf.mxu0
  %1056 = vmatprep.mubr.f32.mxu0 0.0
  %1057 = vmatmul.mubr.f32.gmra.mxu0 %v359
  %v1058 = vpop.f32.mrf.mxu0
  %v1059 = vadd.f32 0.0, %v1058
  %v1060 = vpop.f32.mrf.mxu0
  %1061 = vmatprep.mubr.f32.mxu0 0.0
  %1062 = vmatmul.mubr.f32.gmra.mxu0 %v362
  %v1063 = vpop.f32.mrf.mxu0
  %v1064 = vadd.f32 0.0, %v1063
  %v1065 = vpop.f32.mrf.mxu0
  %1066 = vmatprep.mubr.f32.mxu0 0.0
  %1067 = vmatmul.mubr.f32.gmra.mxu0 %v365
  %v1068 = vpop.f32.mrf.mxu0
  %v1069 = vadd.f32 0.0, %v1068
  %v1070 = vpop.f32.mrf.mxu0
  %1071 = vmatprep.mubr.f32.mxu0 0.0
  %1072 = vmatmul.mubr.f32.gmra.mxu0 %v368
  %v1073 = vpop.f32.mrf.mxu0
  %v1074 = vadd.f32 0.0, %v1073
  %v1075 = vpop.f32.mrf.mxu0
  %1076 = vmatprep.mubr.f32.mxu0 0.0
  %1077 = vmatmul.mubr.f32.gmra.mxu0 %v371
  %v1078 = vpop.f32.mrf.mxu0
  %v1079 = vadd.f32 0.0, %v1078
  %v1080 = vpop.f32.mrf.mxu0
  %1081 = vmatprep.mubr.f32.mxu0 0.0
  %1082 = vmatmul.mubr.f32.gmra.mxu0 %v374
  %v1083 = vpop.f32.mrf.mxu0
  %v1084 = vadd.f32 0.0, %v1083
  %v1085 = vpop.f32.mrf.mxu0
  %1086 = vmatprep.mubr.f32.mxu0 0.0
  %1087 = vmatmul.mubr.f32.gmra.mxu0 %v377
  %v1088 = vpop.f32.mrf.mxu0
  %v1089 = vadd.f32 0.0, %v1088
  %v1090 = vpop.f32.mrf.mxu0
  %1091 = vmatprep.mubr.f32.mxu0 0.0
  %1092 = vmatmul.mubr.f32.gmra.mxu0 %v380
  %v1093 = vpop.f32.mrf.mxu0
  %v1094 = vadd.f32 0.0, %v1093
  %v1095 = vpop.f32.mrf.mxu0
  %1096 = vmatprep.mubr.f32.mxu0 0.0
  %1097 = vmatmul.mubr.f32.gmra.mxu0 %v383
  %v1098 = vpop.f32.mrf.mxu0
  %v1099 = vadd.f32 0.0, %v1098
  %v1100 = vpop.f32.mrf.mxu0
  %1101 = vmatprep.mubr.f32.mxu0 0.0
  %1102 = vmatmul.mubr.f32.gmra.mxu0 %v386
  %v1103 = vpop.f32.mrf.mxu0
  %v1104 = vadd.f32 0.0, %v1103
  %v1105 = vpop.f32.mrf.mxu0
  %1106 = vdwg.mxu0
  %v1107 = vadd.f32 %v937, %v1029
  %v1108 = vadd.f32 %v938, %v1034
  %v1109 = vadd.f32 %v939, %v1039
  %v1110 = vadd.f32 %v940, %v1044
  %v1111 = vadd.f32 %v941, %v1049
  %v1112 = vadd.f32 %v942, %v1054
  %v1113 = vadd.f32 %v943, %v1059
  %v1114 = vadd.f32 %v944, %v1064
  %v1115 = vadd.f32 %v945, %v1069
  %v1116 = vadd.f32 %v946, %v1074
  %v1117 = vadd.f32 %v947, %v1079
  %v1118 = vadd.f32 %v948, %v1084
  %v1119 = vadd.f32 %v949, %v1089
  %v1120 = vadd.f32 %v950, %v1094
  %v1121 = vadd.f32 %v951, %v1099
  %v1122 = vadd.f32 %v952, %v1104
  %s1123 = scalar_lea.vmem %s1, 320
  %v1124 = vld [vmem:[%s1123] sm:$0xff]
  %v1125 = vld [vmem:[%s1123 + $0x8] sm:$0xff]
  %v1126 = vld [vmem:[%s1123 + $0x10] sm:$0xff]
  %v1127 = vld [vmem:[%s1123 + $0x18] sm:$0xff]
  %v1128 = vld [vmem:[%s1123 + $0x20] sm:$0xff]
  %v1129 = vld [vmem:[%s1123 + $0x28] sm:$0xff]
  %v1130 = vld [vmem:[%s1123 + $0x30] sm:$0xff]
  %v1131 = vld [vmem:[%s1123 + $0x38] sm:$0xff]
  %1132 = vmatprep.subr.mxu0 0.0
  %1133 = vmatpush1.msra.mxu0 0.0
  %1134 = vmatprep.subr.mxu0 0.0
  %1135 = vmatpush1.msra.mxu0 0.0
  %1136 = vmatprep.subr.mxu0 0.0
  %1137 = vmatpush1.msra.mxu0 0.0
  %1138 = vmatprep.subr.mxu0 0.0
  %1139 = vmatpush1.msra.mxu0 0.0
  %1140 = vmatprep.subr.mxu0 0.0
  %1141 = vmatpush1.msra.mxu0 0.0
  %1142 = vmatprep.subr.mxu0 0.0
  %1143 = vmatpush1.msra.mxu0 0.0
  %1144 = vmatprep.subr.mxu0 0.0
  %1145 = vmatpush1.msra.mxu0 0.0
  %1146 = vmatprep.subr.mxu0 0.0
  %1147 = vmatpush1.msra.mxu0 0.0
  %1148 = vmatprep.subr.mxu0 0.0
  %1149 = vmatpush1.msra.mxu0 %v1131
  %1150 = vmatprep.subr.mxu0 0.0
  %1151 = vmatpush1.msra.mxu0 %v1130
  %1152 = vmatprep.subr.mxu0 0.0
  %1153 = vmatpush1.msra.mxu0 %v1129
  %1154 = vmatprep.subr.mxu0 0.0
  %1155 = vmatpush1.msra.mxu0 %v1128
  %1156 = vmatprep.subr.mxu0 0.0
  %1157 = vmatpush1.msra.mxu0 %v1127
  %1158 = vmatprep.subr.mxu0 0.0
  %1159 = vmatpush1.msra.mxu0 %v1126
  %1160 = vmatprep.subr.mxu0 0.0
  %1161 = vmatpush1.msra.mxu0 %v1125
  %1162 = vmatprep.subr.mxu0 0.0
  %1163 = vmatpush1.msra.mxu0 %v1124
  %1164 = vmatprep.subr.mxu0 0.0
  %1165 = vmatpush2.msra.mxu0 0.0
  %1166 = vmatprep.subr.mxu0 0.0
  %1167 = vmatpush2.msra.mxu0 0.0
  %1168 = vmatprep.subr.mxu0 0.0
  %1169 = vmatpush2.msra.mxu0 0.0
  %1170 = vmatprep.subr.mxu0 0.0
  %1171 = vmatpush2.msra.mxu0 0.0
  %1172 = vmatprep.subr.mxu0 0.0
  %1173 = vmatpush2.msra.mxu0 0.0
  %1174 = vmatprep.subr.mxu0 0.0
  %1175 = vmatpush2.msra.mxu0 0.0
  %1176 = vmatprep.subr.mxu0 0.0
  %1177 = vmatpush2.msra.mxu0 0.0
  %1178 = vmatprep.subr.mxu0 0.0
  %1179 = vmatpush2.msra.mxu0 0.0
  %1180 = vmatprep.subr.mxu0 0.0
  %1181 = vmatpush2.msra.mxu0 0.0
  %1182 = vmatprep.subr.mxu0 0.0
  %1183 = vmatpush2.msra.mxu0 0.0
  %1184 = vmatprep.subr.mxu0 0.0
  %1185 = vmatpush2.msra.mxu0 0.0
  %1186 = vmatprep.subr.mxu0 0.0
  %1187 = vmatpush2.msra.mxu0 0.0
  %1188 = vmatprep.subr.mxu0 0.0
  %1189 = vmatpush2.msra.mxu0 0.0
  %1190 = vmatprep.subr.mxu0 0.0
  %1191 = vmatpush2.msra.mxu0 0.0
  %1192 = vmatprep.subr.mxu0 0.0
  %1193 = vmatpush2.msra.mxu0 0.0
  %1194 = vmatprep.subr.mxu0 0.0
  %1195 = vmatpush2.msra.mxu0 0.0
  %1196 = vmatprep.mubr.f32.mxu0 0.0
  %1197 = vmatmul.mubr.f32.gmra.mxu0 %v575
  %v1198 = vpop.f32.mrf.mxu0
  %v1199 = vadd.f32 0.0, %v1198
  %v1200 = vpop.f32.mrf.mxu0
  %1201 = vmatprep.mubr.f32.mxu0 0.0
  %1202 = vmatmul.mubr.f32.gmra.mxu0 %v578
  %v1203 = vpop.f32.mrf.mxu0
  %v1204 = vadd.f32 0.0, %v1203
  %v1205 = vpop.f32.mrf.mxu0
  %1206 = vmatprep.mubr.f32.mxu0 0.0
  %1207 = vmatmul.mubr.f32.gmra.mxu0 %v581
  %v1208 = vpop.f32.mrf.mxu0
  %v1209 = vadd.f32 0.0, %v1208
  %v1210 = vpop.f32.mrf.mxu0
  %1211 = vmatprep.mubr.f32.mxu0 0.0
  %1212 = vmatmul.mubr.f32.gmra.mxu0 %v584
  %v1213 = vpop.f32.mrf.mxu0
  %v1214 = vadd.f32 0.0, %v1213
  %v1215 = vpop.f32.mrf.mxu0
  %1216 = vmatprep.mubr.f32.mxu0 0.0
  %1217 = vmatmul.mubr.f32.gmra.mxu0 %v587
  %v1218 = vpop.f32.mrf.mxu0
  %v1219 = vadd.f32 0.0, %v1218
  %v1220 = vpop.f32.mrf.mxu0
  %1221 = vmatprep.mubr.f32.mxu0 0.0
  %1222 = vmatmul.mubr.f32.gmra.mxu0 %v590
  %v1223 = vpop.f32.mrf.mxu0
  %v1224 = vadd.f32 0.0, %v1223
  %v1225 = vpop.f32.mrf.mxu0
  %1226 = vmatprep.mubr.f32.mxu0 0.0
  %1227 = vmatmul.mubr.f32.gmra.mxu0 %v593
  %v1228 = vpop.f32.mrf.mxu0
  %v1229 = vadd.f32 0.0, %v1228
  %v1230 = vpop.f32.mrf.mxu0
  %1231 = vmatprep.mubr.f32.mxu0 0.0
  %1232 = vmatmul.mubr.f32.gmra.mxu0 %v596
  %v1233 = vpop.f32.mrf.mxu0
  %v1234 = vadd.f32 0.0, %v1233
  %v1235 = vpop.f32.mrf.mxu0
  %1236 = vmatprep.mubr.f32.mxu0 0.0
  %1237 = vmatmul.mubr.f32.gmra.mxu0 %v599
  %v1238 = vpop.f32.mrf.mxu0
  %v1239 = vadd.f32 0.0, %v1238
  %v1240 = vpop.f32.mrf.mxu0
  %1241 = vmatprep.mubr.f32.mxu0 0.0
  %1242 = vmatmul.mubr.f32.gmra.mxu0 %v602
  %v1243 = vpop.f32.mrf.mxu0
  %v1244 = vadd.f32 0.0, %v1243
  %v1245 = vpop.f32.mrf.mxu0
  %1246 = vmatprep.mubr.f32.mxu0 0.0
  %1247 = vmatmul.mubr.f32.gmra.mxu0 %v605
  %v1248 = vpop.f32.mrf.mxu0
  %v1249 = vadd.f32 0.0, %v1248
  %v1250 = vpop.f32.mrf.mxu0
  %1251 = vmatprep.mubr.f32.mxu0 0.0
  %1252 = vmatmul.mubr.f32.gmra.mxu0 %v608
  %v1253 = vpop.f32.mrf.mxu0
  %v1254 = vadd.f32 0.0, %v1253
  %v1255 = vpop.f32.mrf.mxu0
  %1256 = vmatprep.mubr.f32.mxu0 0.0
  %1257 = vmatmul.mubr.f32.gmra.mxu0 %v611
  %v1258 = vpop.f32.mrf.mxu0
  %v1259 = vadd.f32 0.0, %v1258
  %v1260 = vpop.f32.mrf.mxu0
  %1261 = vmatprep.mubr.f32.mxu0 0.0
  %1262 = vmatmul.mubr.f32.gmra.mxu0 %v614
  %v1263 = vpop.f32.mrf.mxu0
  %v1264 = vadd.f32 0.0, %v1263
  %v1265 = vpop.f32.mrf.mxu0
  %1266 = vmatprep.mubr.f32.mxu0 0.0
  %1267 = vmatmul.mubr.f32.gmra.mxu0 %v617
  %v1268 = vpop.f32.mrf.mxu0
  %v1269 = vadd.f32 0.0, %v1268
  %v1270 = vpop.f32.mrf.mxu0
  %1271 = vmatprep.mubr.f32.mxu0 0.0
  %1272 = vmatmul.mubr.f32.gmra.mxu0 %v620
  %v1273 = vpop.f32.mrf.mxu0
  %v1274 = vadd.f32 0.0, %v1273
  %v1275 = vpop.f32.mrf.mxu0
  %1276 = vdwg.mxu0
  %v1277 = vadd.f32 %v1107, %v1199
  %v1278 = vadd.f32 %v1108, %v1204
  %v1279 = vadd.f32 %v1109, %v1209
  %v1280 = vadd.f32 %v1110, %v1214
  %v1281 = vadd.f32 %v1111, %v1219
  %v1282 = vadd.f32 %v1112, %v1224
  %v1283 = vadd.f32 %v1113, %v1229
  %v1284 = vadd.f32 %v1114, %v1234
  %v1285 = vadd.f32 %v1115, %v1239
  %v1286 = vadd.f32 %v1116, %v1244
  %v1287 = vadd.f32 %v1117, %v1249
  %v1288 = vadd.f32 %v1118, %v1254
  %v1289 = vadd.f32 %v1119, %v1259
  %v1290 = vadd.f32 %v1120, %v1264
  %v1291 = vadd.f32 %v1121, %v1269
  %v1292 = vadd.f32 %v1122, %v1274
  %v1293 = vmax.f32 %v767, %v1277
  %v1294 = vmax.f32 %v768, %v1278
  %v1295 = vmax.f32 %v769, %v1279
  %v1296 = vmax.f32 %v770, %v1280
  %v1297 = vmax.f32 %v771, %v1281
  %v1298 = vmax.f32 %v772, %v1282
  %v1299 = vmax.f32 %v773, %v1283
  %v1300 = vmax.f32 %v774, %v1284
  %v1301 = vmax.f32 %v775, %v1285
  %v1302 = vmax.f32 %v776, %v1286
  %v1303 = vmax.f32 %v777, %v1287
  %v1304 = vmax.f32 %v778, %v1288
  %v1305 = vmax.f32 %v779, %v1289
  %v1306 = vmax.f32 %v780, %v1290
  %v1307 = vmax.f32 %v781, %v1291
  %v1308 = vmax.f32 %v782, %v1292
  %s1309 = scalar_lea.vmem %s1, 384
  %v1310 = vld [vmem:[%s1309] sm:$0xff]
  %v1311 = vld [vmem:[%s1309 + $0x8] sm:$0xff]
  %v1312 = vld [vmem:[%s1309 + $0x10] sm:$0xff]
  %v1313 = vld [vmem:[%s1309 + $0x18] sm:$0xff]
  %v1314 = vld [vmem:[%s1309 + $0x20] sm:$0xff]
  %v1315 = vld [vmem:[%s1309 + $0x28] sm:$0xff]
  %v1316 = vld [vmem:[%s1309 + $0x30] sm:$0xff]
  %v1317 = vld [vmem:[%s1309 + $0x38] sm:$0xff]
  %1318 = vmatprep.subr.mxu0 0.0
  %1319 = vmatpush1.msra.mxu0 0.0
  %1320 = vmatprep.subr.mxu0 0.0
  %1321 = vmatpush1.msra.mxu0 0.0
  %1322 = vmatprep.subr.mxu0 0.0
  %1323 = vmatpush1.msra.mxu0 0.0
  %1324 = vmatprep.subr.mxu0 0.0
  %1325 = vmatpush1.msra.mxu0 0.0
  %1326 = vmatprep.subr.mxu0 0.0
  %1327 = vmatpush1.msra.mxu0 0.0
  %1328 = vmatprep.subr.mxu0 0.0
  %1329 = vmatpush1.msra.mxu0 0.0
  %1330 = vmatprep.subr.mxu0 0.0
  %1331 = vmatpush1.msra.mxu0 0.0
  %1332 = vmatprep.subr.mxu0 0.0
  %1333 = vmatpush1.msra.mxu0 0.0
  %1334 = vmatprep.subr.mxu0 0.0
  %1335 = vmatpush1.msra.mxu0 %v1317
  %1336 = vmatprep.subr.mxu0 0.0
  %1337 = vmatpush1.msra.mxu0 %v1316
  %1338 = vmatprep.subr.mxu0 0.0
  %1339 = vmatpush1.msra.mxu0 %v1315
  %1340 = vmatprep.subr.mxu0 0.0
  %1341 = vmatpush1.msra.mxu0 %v1314
  %1342 = vmatprep.subr.mxu0 0.0
  %1343 = vmatpush1.msra.mxu0 %v1313
  %1344 = vmatprep.subr.mxu0 0.0
  %1345 = vmatpush1.msra.mxu0 %v1312
  %1346 = vmatprep.subr.mxu0 0.0
  %1347 = vmatpush1.msra.mxu0 %v1311
  %1348 = vmatprep.subr.mxu0 0.0
  %1349 = vmatpush1.msra.mxu0 %v1310
  %1350 = vmatprep.subr.mxu0 0.0
  %1351 = vmatpush2.msra.mxu0 0.0
  %1352 = vmatprep.subr.mxu0 0.0
  %1353 = vmatpush2.msra.mxu0 0.0
  %1354 = vmatprep.subr.mxu0 0.0
  %1355 = vmatpush2.msra.mxu0 0.0
  %1356 = vmatprep.subr.mxu0 0.0
  %1357 = vmatpush2.msra.mxu0 0.0
  %1358 = vmatprep.subr.mxu0 0.0
  %1359 = vmatpush2.msra.mxu0 0.0
  %1360 = vmatprep.subr.mxu0 0.0
  %1361 = vmatpush2.msra.mxu0 0.0
  %1362 = vmatprep.subr.mxu0 0.0
  %1363 = vmatpush2.msra.mxu0 0.0
  %1364 = vmatprep.subr.mxu0 0.0
  %1365 = vmatpush2.msra.mxu0 0.0
  %1366 = vmatprep.subr.mxu0 0.0
  %1367 = vmatpush2.msra.mxu0 0.0
  %1368 = vmatprep.subr.mxu0 0.0
  %1369 = vmatpush2.msra.mxu0 0.0
  %1370 = vmatprep.subr.mxu0 0.0
  %1371 = vmatpush2.msra.mxu0 0.0
  %1372 = vmatprep.subr.mxu0 0.0
  %1373 = vmatpush2.msra.mxu0 0.0
  %1374 = vmatprep.subr.mxu0 0.0
  %1375 = vmatpush2.msra.mxu0 0.0
  %1376 = vmatprep.subr.mxu0 0.0
  %1377 = vmatpush2.msra.mxu0 0.0
  %1378 = vmatprep.subr.mxu0 0.0
  %1379 = vmatpush2.msra.mxu0 0.0
  %1380 = vmatprep.subr.mxu0 0.0
  %1381 = vmatpush2.msra.mxu0 0.0
  %1382 = vmatprep.mubr.f32.mxu0 0.0
  %1383 = vmatmul.mubr.f32.gmra.mxu0 %v101
  %v1384 = vpop.f32.mrf.mxu0
  %v1385 = vadd.f32 0.0, %v1384
  %v1386 = vpop.f32.mrf.mxu0
  %1387 = vmatprep.mubr.f32.mxu0 0.0
  %1388 = vmatmul.mubr.f32.gmra.mxu0 %v104
  %v1389 = vpop.f32.mrf.mxu0
  %v1390 = vadd.f32 0.0, %v1389
  %v1391 = vpop.f32.mrf.mxu0
  %1392 = vmatprep.mubr.f32.mxu0 0.0
  %1393 = vmatmul.mubr.f32.gmra.mxu0 %v107
  %v1394 = vpop.f32.mrf.mxu0
  %v1395 = vadd.f32 0.0, %v1394
  %v1396 = vpop.f32.mrf.mxu0
  %1397 = vmatprep.mubr.f32.mxu0 0.0
  %1398 = vmatmul.mubr.f32.gmra.mxu0 %v110
  %v1399 = vpop.f32.mrf.mxu0
  %v1400 = vadd.f32 0.0, %v1399
  %v1401 = vpop.f32.mrf.mxu0
  %1402 = vmatprep.mubr.f32.mxu0 0.0
  %1403 = vmatmul.mubr.f32.gmra.mxu0 %v113
  %v1404 = vpop.f32.mrf.mxu0
  %v1405 = vadd.f32 0.0, %v1404
  %v1406 = vpop.f32.mrf.mxu0
  %1407 = vmatprep.mubr.f32.mxu0 0.0
  %1408 = vmatmul.mubr.f32.gmra.mxu0 %v116
  %v1409 = vpop.f32.mrf.mxu0
  %v1410 = vadd.f32 0.0, %v1409
  %v1411 = vpop.f32.mrf.mxu0
  %1412 = vmatprep.mubr.f32.mxu0 0.0
  %1413 = vmatmul.mubr.f32.gmra.mxu0 %v119
  %v1414 = vpop.f32.mrf.mxu0
  %v1415 = vadd.f32 0.0, %v1414
  %v1416 = vpop.f32.mrf.mxu0
  %1417 = vmatprep.mubr.f32.mxu0 0.0
  %1418 = vmatmul.mubr.f32.gmra.mxu0 %v122
  %v1419 = vpop.f32.mrf.mxu0
  %v1420 = vadd.f32 0.0, %v1419
  %v1421 = vpop.f32.mrf.mxu0
  %1422 = vmatprep.mubr.f32.mxu0 0.0
  %1423 = vmatmul.mubr.f32.gmra.mxu0 %v125
  %v1424 = vpop.f32.mrf.mxu0
  %v1425 = vadd.f32 0.0, %v1424
  %v1426 = vpop.f32.mrf.mxu0
  %1427 = vmatprep.mubr.f32.mxu0 0.0
  %1428 = vmatmul.mubr.f32.gmra.mxu0 %v128
  %v1429 = vpop.f32.mrf.mxu0
  %v1430 = vadd.f32 0.0, %v1429
  %v1431 = vpop.f32.mrf.mxu0
  %1432 = vmatprep.mubr.f32.mxu0 0.0
  %1433 = vmatmul.mubr.f32.gmra.mxu0 %v131
  %v1434 = vpop.f32.mrf.mxu0
  %v1435 = vadd.f32 0.0, %v1434
  %v1436 = vpop.f32.mrf.mxu0
  %1437 = vmatprep.mubr.f32.mxu0 0.0
  %1438 = vmatmul.mubr.f32.gmra.mxu0 %v134
  %v1439 = vpop.f32.mrf.mxu0
  %v1440 = vadd.f32 0.0, %v1439
  %v1441 = vpop.f32.mrf.mxu0
  %1442 = vmatprep.mubr.f32.mxu0 0.0
  %1443 = vmatmul.mubr.f32.gmra.mxu0 %v137
  %v1444 = vpop.f32.mrf.mxu0
  %v1445 = vadd.f32 0.0, %v1444
  %v1446 = vpop.f32.mrf.mxu0
  %1447 = vmatprep.mubr.f32.mxu0 0.0
  %1448 = vmatmul.mubr.f32.gmra.mxu0 %v140
  %v1449 = vpop.f32.mrf.mxu0
  %v1450 = vadd.f32 0.0, %v1449
  %v1451 = vpop.f32.mrf.mxu0
  %1452 = vmatprep.mubr.f32.mxu0 0.0
  %1453 = vmatmul.mubr.f32.gmra.mxu0 %v143
  %v1454 = vpop.f32.mrf.mxu0
  %v1455 = vadd.f32 0.0, %v1454
  %v1456 = vpop.f32.mrf.mxu0
  %1457 = vmatprep.mubr.f32.mxu0 0.0
  %1458 = vmatmul.mubr.f32.gmra.mxu0 %v146
  %v1459 = vpop.f32.mrf.mxu0
  %v1460 = vadd.f32 0.0, %v1459
  %v1461 = vpop.f32.mrf.mxu0
  %1462 = vdwg.mxu0
  %v1463 = vadd.f32 %v297, %v1385
  %v1464 = vadd.f32 %v297, %v1390
  %v1465 = vadd.f32 %v297, %v1395
  %v1466 = vadd.f32 %v297, %v1400
  %v1467 = vadd.f32 %v297, %v1405
  %v1468 = vadd.f32 %v297, %v1410
  %v1469 = vadd.f32 %v297, %v1415
  %v1470 = vadd.f32 %v297, %v1420
  %v1471 = vadd.f32 %v297, %v1425
  %v1472 = vadd.f32 %v297, %v1430
  %v1473 = vadd.f32 %v297, %v1435
  %v1474 = vadd.f32 %v297, %v1440
  %v1475 = vadd.f32 %v297, %v1445
  %v1476 = vadd.f32 %v297, %v1450
  %v1477 = vadd.f32 %v297, %v1455
  %v1478 = vadd.f32 %v297, %v1460
  %s1479 = scalar_lea.vmem %s1, 448
  %v1480 = vld [vmem:[%s1479] sm:$0xff]
  %v1481 = vld [vmem:[%s1479 + $0x8] sm:$0xff]
  %v1482 = vld [vmem:[%s1479 + $0x10] sm:$0xff]
  %v1483 = vld [vmem:[%s1479 + $0x18] sm:$0xff]
  %v1484 = vld [vmem:[%s1479 + $0x20] sm:$0xff]
  %v1485 = vld [vmem:[%s1479 + $0x28] sm:$0xff]
  %v1486 = vld [vmem:[%s1479 + $0x30] sm:$0xff]
  %v1487 = vld [vmem:[%s1479 + $0x38] sm:$0xff]
  %1488 = vmatprep.subr.mxu0 0.0
  %1489 = vmatpush1.msra.mxu0 0.0
  %1490 = vmatprep.subr.mxu0 0.0
  %1491 = vmatpush1.msra.mxu0 0.0
  %1492 = vmatprep.subr.mxu0 0.0
  %1493 = vmatpush1.msra.mxu0 0.0
  %1494 = vmatprep.subr.mxu0 0.0
  %1495 = vmatpush1.msra.mxu0 0.0
  %1496 = vmatprep.subr.mxu0 0.0
  %1497 = vmatpush1.msra.mxu0 0.0
  %1498 = vmatprep.subr.mxu0 0.0
  %1499 = vmatpush1.msra.mxu0 0.0
  %1500 = vmatprep.subr.mxu0 0.0
  %1501 = vmatpush1.msra.mxu0 0.0
  %1502 = vmatprep.subr.mxu0 0.0
  %1503 = vmatpush1.msra.mxu0 0.0
  %1504 = vmatprep.subr.mxu0 0.0
  %1505 = vmatpush1.msra.mxu0 %v1487
  %1506 = vmatprep.subr.mxu0 0.0
  %1507 = vmatpush1.msra.mxu0 %v1486
  %1508 = vmatprep.subr.mxu0 0.0
  %1509 = vmatpush1.msra.mxu0 %v1485
  %1510 = vmatprep.subr.mxu0 0.0
  %1511 = vmatpush1.msra.mxu0 %v1484
  %1512 = vmatprep.subr.mxu0 0.0
  %1513 = vmatpush1.msra.mxu0 %v1483
  %1514 = vmatprep.subr.mxu0 0.0
  %1515 = vmatpush1.msra.mxu0 %v1482
  %1516 = vmatprep.subr.mxu0 0.0
  %1517 = vmatpush1.msra.mxu0 %v1481
  %1518 = vmatprep.subr.mxu0 0.0
  %1519 = vmatpush1.msra.mxu0 %v1480
  %1520 = vmatprep.subr.mxu0 0.0
  %1521 = vmatpush2.msra.mxu0 0.0
  %1522 = vmatprep.subr.mxu0 0.0
  %1523 = vmatpush2.msra.mxu0 0.0
  %1524 = vmatprep.subr.mxu0 0.0
  %1525 = vmatpush2.msra.mxu0 0.0
  %1526 = vmatprep.subr.mxu0 0.0
  %1527 = vmatpush2.msra.mxu0 0.0
  %1528 = vmatprep.subr.mxu0 0.0
  %1529 = vmatpush2.msra.mxu0 0.0
  %1530 = vmatprep.subr.mxu0 0.0
  %1531 = vmatpush2.msra.mxu0 0.0
  %1532 = vmatprep.subr.mxu0 0.0
  %1533 = vmatpush2.msra.mxu0 0.0
  %1534 = vmatprep.subr.mxu0 0.0
  %1535 = vmatpush2.msra.mxu0 0.0
  %1536 = vmatprep.subr.mxu0 0.0
  %1537 = vmatpush2.msra.mxu0 0.0
  %1538 = vmatprep.subr.mxu0 0.0
  %1539 = vmatpush2.msra.mxu0 0.0
  %1540 = vmatprep.subr.mxu0 0.0
  %1541 = vmatpush2.msra.mxu0 0.0
  %1542 = vmatprep.subr.mxu0 0.0
  %1543 = vmatpush2.msra.mxu0 0.0
  %1544 = vmatprep.subr.mxu0 0.0
  %1545 = vmatpush2.msra.mxu0 0.0
  %1546 = vmatprep.subr.mxu0 0.0
  %1547 = vmatpush2.msra.mxu0 0.0
  %1548 = vmatprep.subr.mxu0 0.0
  %1549 = vmatpush2.msra.mxu0 0.0
  %1550 = vmatprep.subr.mxu0 0.0
  %1551 = vmatpush2.msra.mxu0 0.0
  %1552 = vmatprep.mubr.f32.mxu0 0.0
  %1553 = vmatmul.mubr.f32.gmra.mxu0 %v341
  %v1554 = vpop.f32.mrf.mxu0
  %v1555 = vadd.f32 0.0, %v1554
  %v1556 = vpop.f32.mrf.mxu0
  %1557 = vmatprep.mubr.f32.mxu0 0.0
  %1558 = vmatmul.mubr.f32.gmra.mxu0 %v344
  %v1559 = vpop.f32.mrf.mxu0
  %v1560 = vadd.f32 0.0, %v1559
  %v1561 = vpop.f32.mrf.mxu0
  %1562 = vmatprep.mubr.f32.mxu0 0.0
  %1563 = vmatmul.mubr.f32.gmra.mxu0 %v347
  %v1564 = vpop.f32.mrf.mxu0
  %v1565 = vadd.f32 0.0, %v1564
  %v1566 = vpop.f32.mrf.mxu0
  %1567 = vmatprep.mubr.f32.mxu0 0.0
  %1568 = vmatmul.mubr.f32.gmra.mxu0 %v350
  %v1569 = vpop.f32.mrf.mxu0
  %v1570 = vadd.f32 0.0, %v1569
  %v1571 = vpop.f32.mrf.mxu0
  %1572 = vmatprep.mubr.f32.mxu0 0.0
  %1573 = vmatmul.mubr.f32.gmra.mxu0 %v353
  %v1574 = vpop.f32.mrf.mxu0
  %v1575 = vadd.f32 0.0, %v1574
  %v1576 = vpop.f32.mrf.mxu0
  %1577 = vmatprep.mubr.f32.mxu0 0.0
  %1578 = vmatmul.mubr.f32.gmra.mxu0 %v356
  %v1579 = vpop.f32.mrf.mxu0
  %v1580 = vadd.f32 0.0, %v1579
  %v1581 = vpop.f32.mrf.mxu0
  %1582 = vmatprep.mubr.f32.mxu0 0.0
  %1583 = vmatmul.mubr.f32.gmra.mxu0 %v359
  %v1584 = vpop.f32.mrf.mxu0
  %v1585 = vadd.f32 0.0, %v1584
  %v1586 = vpop.f32.mrf.mxu0
  %1587 = vmatprep.mubr.f32.mxu0 0.0
  %1588 = vmatmul.mubr.f32.gmra.mxu0 %v362
  %v1589 = vpop.f32.mrf.mxu0
  %v1590 = vadd.f32 0.0, %v1589
  %v1591 = vpop.f32.mrf.mxu0
  %1592 = vmatprep.mubr.f32.mxu0 0.0
  %1593 = vmatmul.mubr.f32.gmra.mxu0 %v365
  %v1594 = vpop.f32.mrf.mxu0
  %v1595 = vadd.f32 0.0, %v1594
  %v1596 = vpop.f32.mrf.mxu0
  %1597 = vmatprep.mubr.f32.mxu0 0.0
  %1598 = vmatmul.mubr.f32.gmra.mxu0 %v368
  %v1599 = vpop.f32.mrf.mxu0
  %v1600 = vadd.f32 0.0, %v1599
  %v1601 = vpop.f32.mrf.mxu0
  %1602 = vmatprep.mubr.f32.mxu0 0.0
  %1603 = vmatmul.mubr.f32.gmra.mxu0 %v371
  %v1604 = vpop.f32.mrf.mxu0
  %v1605 = vadd.f32 0.0, %v1604
  %v1606 = vpop.f32.mrf.mxu0
  %1607 = vmatprep.mubr.f32.mxu0 0.0
  %1608 = vmatmul.mubr.f32.gmra.mxu0 %v374
  %v1609 = vpop.f32.mrf.mxu0
  %v1610 = vadd.f32 0.0, %v1609
  %v1611 = vpop.f32.mrf.mxu0
  %1612 = vmatprep.mubr.f32.mxu0 0.0
  %1613 = vmatmul.mubr.f32.gmra.mxu0 %v377
  %v1614 = vpop.f32.mrf.mxu0
  %v1615 = vadd.f32 0.0, %v1614
  %v1616 = vpop.f32.mrf.mxu0
  %1617 = vmatprep.mubr.f32.mxu0 0.0
  %1618 = vmatmul.mubr.f32.gmra.mxu0 %v380
  %v1619 = vpop.f32.mrf.mxu0
  %v1620 = vadd.f32 0.0, %v1619
  %v1621 = vpop.f32.mrf.mxu0
  %1622 = vmatprep.mubr.f32.mxu0 0.0
  %1623 = vmatmul.mubr.f32.gmra.mxu0 %v383
  %v1624 = vpop.f32.mrf.mxu0
  %v1625 = vadd.f32 0.0, %v1624
  %v1626 = vpop.f32.mrf.mxu0
  %1627 = vmatprep.mubr.f32.mxu0 0.0
  %1628 = vmatmul.mubr.f32.gmra.mxu0 %v386
  %v1629 = vpop.f32.mrf.mxu0
  %v1630 = vadd.f32 0.0, %v1629
  %v1631 = vpop.f32.mrf.mxu0
  %1632 = vdwg.mxu0
  %v1633 = vadd.f32 %v1463, %v1555
  %v1634 = vadd.f32 %v1464, %v1560
  %v1635 = vadd.f32 %v1465, %v1565
  %v1636 = vadd.f32 %v1466, %v1570
  %v1637 = vadd.f32 %v1467, %v1575
  %v1638 = vadd.f32 %v1468, %v1580
  %v1639 = vadd.f32 %v1469, %v1585
  %v1640 = vadd.f32 %v1470, %v1590
  %v1641 = vadd.f32 %v1471, %v1595
  %v1642 = vadd.f32 %v1472, %v1600
  %v1643 = vadd.f32 %v1473, %v1605
  %v1644 = vadd.f32 %v1474, %v1610
  %v1645 = vadd.f32 %v1475, %v1615
  %v1646 = vadd.f32 %v1476, %v1620
  %v1647 = vadd.f32 %v1477, %v1625
  %v1648 = vadd.f32 %v1478, %v1630
  %s1649 = scalar_lea.vmem %s1, 512
  %v1650 = vld [vmem:[%s1649] sm:$0xff]
  %v1651 = vld [vmem:[%s1649 + $0x8] sm:$0xff]
  %v1652 = vld [vmem:[%s1649 + $0x10] sm:$0xff]
  %v1653 = vld [vmem:[%s1649 + $0x18] sm:$0xff]
  %v1654 = vld [vmem:[%s1649 + $0x20] sm:$0xff]
  %v1655 = vld [vmem:[%s1649 + $0x28] sm:$0xff]
  %v1656 = vld [vmem:[%s1649 + $0x30] sm:$0xff]
  %v1657 = vld [vmem:[%s1649 + $0x38] sm:$0xff]
  %1658 = vmatprep.subr.mxu0 0.0
  %1659 = vmatpush1.msra.mxu0 0.0
  %1660 = vmatprep.subr.mxu0 0.0
  %1661 = vmatpush1.msra.mxu0 0.0
  %1662 = vmatprep.subr.mxu0 0.0
  %1663 = vmatpush1.msra.mxu0 0.0
  %1664 = vmatprep.subr.mxu0 0.0
  %1665 = vmatpush1.msra.mxu0 0.0
  %1666 = vmatprep.subr.mxu0 0.0
  %1667 = vmatpush1.msra.mxu0 0.0
  %1668 = vmatprep.subr.mxu0 0.0
  %1669 = vmatpush1.msra.mxu0 0.0
  %1670 = vmatprep.subr.mxu0 0.0
  %1671 = vmatpush1.msra.mxu0 0.0
  %1672 = vmatprep.subr.mxu0 0.0
  %1673 = vmatpush1.msra.mxu0 0.0
  %1674 = vmatprep.subr.mxu0 0.0
  %1675 = vmatpush1.msra.mxu0 %v1657
  %1676 = vmatprep.subr.mxu0 0.0
  %1677 = vmatpush1.msra.mxu0 %v1656
  %1678 = vmatprep.subr.mxu0 0.0
  %1679 = vmatpush1.msra.mxu0 %v1655
  %1680 = vmatprep.subr.mxu0 0.0
  %1681 = vmatpush1.msra.mxu0 %v1654
  %1682 = vmatprep.subr.mxu0 0.0
  %1683 = vmatpush1.msra.mxu0 %v1653
  %1684 = vmatprep.subr.mxu0 0.0
  %1685 = vmatpush1.msra.mxu0 %v1652
  %1686 = vmatprep.subr.mxu0 0.0
  %1687 = vmatpush1.msra.mxu0 %v1651
  %1688 = vmatprep.subr.mxu0 0.0
  %1689 = vmatpush1.msra.mxu0 %v1650
  %1690 = vmatprep.subr.mxu0 0.0
  %1691 = vmatpush2.msra.mxu0 0.0
  %1692 = vmatprep.subr.mxu0 0.0
  %1693 = vmatpush2.msra.mxu0 0.0
  %1694 = vmatprep.subr.mxu0 0.0
  %1695 = vmatpush2.msra.mxu0 0.0
  %1696 = vmatprep.subr.mxu0 0.0
  %1697 = vmatpush2.msra.mxu0 0.0
  %1698 = vmatprep.subr.mxu0 0.0
  %1699 = vmatpush2.msra.mxu0 0.0
  %1700 = vmatprep.subr.mxu0 0.0
  %1701 = vmatpush2.msra.mxu0 0.0
  %1702 = vmatprep.subr.mxu0 0.0
  %1703 = vmatpush2.msra.mxu0 0.0
  %1704 = vmatprep.subr.mxu0 0.0
  %1705 = vmatpush2.msra.mxu0 0.0
  %1706 = vmatprep.subr.mxu0 0.0
  %1707 = vmatpush2.msra.mxu0 0.0
  %1708 = vmatprep.subr.mxu0 0.0
  %1709 = vmatpush2.msra.mxu0 0.0
  %1710 = vmatprep.subr.mxu0 0.0
  %1711 = vmatpush2.msra.mxu0 0.0
  %1712 = vmatprep.subr.mxu0 0.0
  %1713 = vmatpush2.msra.mxu0 0.0
  %1714 = vmatprep.subr.mxu0 0.0
  %1715 = vmatpush2.msra.mxu0 0.0
  %1716 = vmatprep.subr.mxu0 0.0
  %1717 = vmatpush2.msra.mxu0 0.0
  %1718 = vmatprep.subr.mxu0 0.0
  %1719 = vmatpush2.msra.mxu0 0.0
  %1720 = vmatprep.subr.mxu0 0.0
  %1721 = vmatpush2.msra.mxu0 0.0
  %1722 = vmatprep.mubr.f32.mxu0 0.0
  %1723 = vmatmul.mubr.f32.gmra.mxu0 %v575
  %v1724 = vpop.f32.mrf.mxu0
  %v1725 = vadd.f32 0.0, %v1724
  %v1726 = vpop.f32.mrf.mxu0
  %1727 = vmatprep.mubr.f32.mxu0 0.0
  %1728 = vmatmul.mubr.f32.gmra.mxu0 %v578
  %v1729 = vpop.f32.mrf.mxu0
  %v1730 = vadd.f32 0.0, %v1729
  %v1731 = vpop.f32.mrf.mxu0
  %1732 = vmatprep.mubr.f32.mxu0 0.0
  %1733 = vmatmul.mubr.f32.gmra.mxu0 %v581
  %v1734 = vpop.f32.mrf.mxu0
  %v1735 = vadd.f32 0.0, %v1734
  %v1736 = vpop.f32.mrf.mxu0
  %1737 = vmatprep.mubr.f32.mxu0 0.0
  %1738 = vmatmul.mubr.f32.gmra.mxu0 %v584
  %v1739 = vpop.f32.mrf.mxu0
  %v1740 = vadd.f32 0.0, %v1739
  %v1741 = vpop.f32.mrf.mxu0
  %1742 = vmatprep.mubr.f32.mxu0 0.0
  %1743 = vmatmul.mubr.f32.gmra.mxu0 %v587
  %v1744 = vpop.f32.mrf.mxu0
  %v1745 = vadd.f32 0.0, %v1744
  %v1746 = vpop.f32.mrf.mxu0
  %1747 = vmatprep.mubr.f32.mxu0 0.0
  %1748 = vmatmul.mubr.f32.gmra.mxu0 %v590
  %v1749 = vpop.f32.mrf.mxu0
  %v1750 = vadd.f32 0.0, %v1749
  %v1751 = vpop.f32.mrf.mxu0
  %1752 = vmatprep.mubr.f32.mxu0 0.0
  %1753 = vmatmul.mubr.f32.gmra.mxu0 %v593
  %v1754 = vpop.f32.mrf.mxu0
  %v1755 = vadd.f32 0.0, %v1754
  %v1756 = vpop.f32.mrf.mxu0
  %1757 = vmatprep.mubr.f32.mxu0 0.0
  %1758 = vmatmul.mubr.f32.gmra.mxu0 %v596
  %v1759 = vpop.f32.mrf.mxu0
  %v1760 = vadd.f32 0.0, %v1759
  %v1761 = vpop.f32.mrf.mxu0
  %1762 = vmatprep.mubr.f32.mxu0 0.0
  %1763 = vmatmul.mubr.f32.gmra.mxu0 %v599
  %v1764 = vpop.f32.mrf.mxu0
  %v1765 = vadd.f32 0.0, %v1764
  %v1766 = vpop.f32.mrf.mxu0
  %1767 = vmatprep.mubr.f32.mxu0 0.0
  %1768 = vmatmul.mubr.f32.gmra.mxu0 %v602
  %v1769 = vpop.f32.mrf.mxu0
  %v1770 = vadd.f32 0.0, %v1769
  %v1771 = vpop.f32.mrf.mxu0
  %1772 = vmatprep.mubr.f32.mxu0 0.0
  %1773 = vmatmul.mubr.f32.gmra.mxu0 %v605
  %v1774 = vpop.f32.mrf.mxu0
  %v1775 = vadd.f32 0.0, %v1774
  %v1776 = vpop.f32.mrf.mxu0
  %1777 = vmatprep.mubr.f32.mxu0 0.0
  %1778 = vmatmul.mubr.f32.gmra.mxu0 %v608
  %v1779 = vpop.f32.mrf.mxu0
  %v1780 = vadd.f32 0.0, %v1779
  %v1781 = vpop.f32.mrf.mxu0
  %1782 = vmatprep.mubr.f32.mxu0 0.0
  %1783 = vmatmul.mubr.f32.gmra.mxu0 %v611
  %v1784 = vpop.f32.mrf.mxu0
  %v1785 = vadd.f32 0.0, %v1784
  %v1786 = vpop.f32.mrf.mxu0
  %1787 = vmatprep.mubr.f32.mxu0 0.0
  %1788 = vmatmul.mubr.f32.gmra.mxu0 %v614
  %v1789 = vpop.f32.mrf.mxu0
  %v1790 = vadd.f32 0.0, %v1789
  %v1791 = vpop.f32.mrf.mxu0
  %1792 = vmatprep.mubr.f32.mxu0 0.0
  %1793 = vmatmul.mubr.f32.gmra.mxu0 %v617
  %v1794 = vpop.f32.mrf.mxu0
  %v1795 = vadd.f32 0.0, %v1794
  %v1796 = vpop.f32.mrf.mxu0
  %1797 = vmatprep.mubr.f32.mxu0 0.0
  %1798 = vmatmul.mubr.f32.gmra.mxu0 %v620
  %v1799 = vpop.f32.mrf.mxu0
  %v1800 = vadd.f32 0.0, %v1799
  %v1801 = vpop.f32.mrf.mxu0
  %1802 = vdwg.mxu0
  %v1803 = vadd.f32 %v1633, %v1725
  %v1804 = vadd.f32 %v1634, %v1730
  %v1805 = vadd.f32 %v1635, %v1735
  %v1806 = vadd.f32 %v1636, %v1740
  %v1807 = vadd.f32 %v1637, %v1745
  %v1808 = vadd.f32 %v1638, %v1750
  %v1809 = vadd.f32 %v1639, %v1755
  %v1810 = vadd.f32 %v1640, %v1760
  %v1811 = vadd.f32 %v1641, %v1765
  %v1812 = vadd.f32 %v1642, %v1770
  %v1813 = vadd.f32 %v1643, %v1775
  %v1814 = vadd.f32 %v1644, %v1780
  %v1815 = vadd.f32 %v1645, %v1785
  %v1816 = vadd.f32 %v1646, %v1790
  %v1817 = vadd.f32 %v1647, %v1795
  %v1818 = vadd.f32 %v1648, %v1800
  %v1819 = vmax.f32 %v1293, %v1803
  %v1820 = vmax.f32 %v1294, %v1804
  %v1821 = vmax.f32 %v1295, %v1805
  %v1822 = vmax.f32 %v1296, %v1806
  %v1823 = vmax.f32 %v1297, %v1807
  %v1824 = vmax.f32 %v1298, %v1808
  %v1825 = vmax.f32 %v1299, %v1809
  %v1826 = vmax.f32 %v1300, %v1810
  %v1827 = vmax.f32 %v1301, %v1811
  %v1828 = vmax.f32 %v1302, %v1812
  %v1829 = vmax.f32 %v1303, %v1813
  %v1830 = vmax.f32 %v1304, %v1814
  %v1831 = vmax.f32 %v1305, %v1815
  %v1832 = vmax.f32 %v1306, %v1816
  %v1833 = vmax.f32 %v1307, %v1817
  %v1834 = vmax.f32 %v1308, %v1818
  %s1835 = scalar_lea.vmem %s1, 576
  %v1836 = vld [vmem:[%s1835] sm:$0xff]
  %v1837 = vld [vmem:[%s1835 + $0x8] sm:$0xff]
  %v1838 = vld [vmem:[%s1835 + $0x10] sm:$0xff]
  %v1839 = vld [vmem:[%s1835 + $0x18] sm:$0xff]
  %v1840 = vld [vmem:[%s1835 + $0x20] sm:$0xff]
  %v1841 = vld [vmem:[%s1835 + $0x28] sm:$0xff]
  %v1842 = vld [vmem:[%s1835 + $0x30] sm:$0xff]
  %v1843 = vld [vmem:[%s1835 + $0x38] sm:$0xff]
  %1844 = vmatprep.subr.mxu0 0.0
  %1845 = vmatpush1.msra.mxu0 0.0
  %1846 = vmatprep.subr.mxu0 0.0
  %1847 = vmatpush1.msra.mxu0 0.0
  %1848 = vmatprep.subr.mxu0 0.0
  %1849 = vmatpush1.msra.mxu0 0.0
  %1850 = vmatprep.subr.mxu0 0.0
  %1851 = vmatpush1.msra.mxu0 0.0
  %1852 = vmatprep.subr.mxu0 0.0
  %1853 = vmatpush1.msra.mxu0 0.0
  %1854 = vmatprep.subr.mxu0 0.0
  %1855 = vmatpush1.msra.mxu0 0.0
  %1856 = vmatprep.subr.mxu0 0.0
  %1857 = vmatpush1.msra.mxu0 0.0
  %1858 = vmatprep.subr.mxu0 0.0
  %1859 = vmatpush1.msra.mxu0 0.0
  %1860 = vmatprep.subr.mxu0 0.0
  %1861 = vmatpush1.msra.mxu0 %v1843
  %1862 = vmatprep.subr.mxu0 0.0
  %1863 = vmatpush1.msra.mxu0 %v1842
  %1864 = vmatprep.subr.mxu0 0.0
  %1865 = vmatpush1.msra.mxu0 %v1841
  %1866 = vmatprep.subr.mxu0 0.0
  %1867 = vmatpush1.msra.mxu0 %v1840
  %1868 = vmatprep.subr.mxu0 0.0
  %1869 = vmatpush1.msra.mxu0 %v1839
  %1870 = vmatprep.subr.mxu0 0.0
  %1871 = vmatpush1.msra.mxu0 %v1838
  %1872 = vmatprep.subr.mxu0 0.0
  %1873 = vmatpush1.msra.mxu0 %v1837
  %1874 = vmatprep.subr.mxu0 0.0
  %1875 = vmatpush1.msra.mxu0 %v1836
  %1876 = vmatprep.subr.mxu0 0.0
  %1877 = vmatpush2.msra.mxu0 0.0
  %1878 = vmatprep.subr.mxu0 0.0
  %1879 = vmatpush2.msra.mxu0 0.0
  %1880 = vmatprep.subr.mxu0 0.0
  %1881 = vmatpush2.msra.mxu0 0.0
  %1882 = vmatprep.subr.mxu0 0.0
  %1883 = vmatpush2.msra.mxu0 0.0
  %1884 = vmatprep.subr.mxu0 0.0
  %1885 = vmatpush2.msra.mxu0 0.0
  %1886 = vmatprep.subr.mxu0 0.0
  %1887 = vmatpush2.msra.mxu0 0.0
  %1888 = vmatprep.subr.mxu0 0.0
  %1889 = vmatpush2.msra.mxu0 0.0
  %1890 = vmatprep.subr.mxu0 0.0
  %1891 = vmatpush2.msra.mxu0 0.0
  %1892 = vmatprep.subr.mxu0 0.0
  %1893 = vmatpush2.msra.mxu0 0.0
  %1894 = vmatprep.subr.mxu0 0.0
  %1895 = vmatpush2.msra.mxu0 0.0
  %1896 = vmatprep.subr.mxu0 0.0
  %1897 = vmatpush2.msra.mxu0 0.0
  %1898 = vmatprep.subr.mxu0 0.0
  %1899 = vmatpush2.msra.mxu0 0.0
  %1900 = vmatprep.subr.mxu0 0.0
  %1901 = vmatpush2.msra.mxu0 0.0
  %1902 = vmatprep.subr.mxu0 0.0
  %1903 = vmatpush2.msra.mxu0 0.0
  %1904 = vmatprep.subr.mxu0 0.0
  %1905 = vmatpush2.msra.mxu0 0.0
  %1906 = vmatprep.subr.mxu0 0.0
  %1907 = vmatpush2.msra.mxu0 0.0
  %1908 = vmatprep.mubr.f32.mxu0 0.0
  %1909 = vmatmul.mubr.f32.gmra.mxu0 %v101
  %v1910 = vpop.f32.mrf.mxu0
  %v1911 = vadd.f32 0.0, %v1910
  %v1912 = vpop.f32.mrf.mxu0
  %1913 = vmatprep.mubr.f32.mxu0 0.0
  %1914 = vmatmul.mubr.f32.gmra.mxu0 %v104
  %v1915 = vpop.f32.mrf.mxu0
  %v1916 = vadd.f32 0.0, %v1915
  %v1917 = vpop.f32.mrf.mxu0
  %1918 = vmatprep.mubr.f32.mxu0 0.0
  %1919 = vmatmul.mubr.f32.gmra.mxu0 %v107
  %v1920 = vpop.f32.mrf.mxu0
  %v1921 = vadd.f32 0.0, %v1920
  %v1922 = vpop.f32.mrf.mxu0
  %1923 = vmatprep.mubr.f32.mxu0 0.0
  %1924 = vmatmul.mubr.f32.gmra.mxu0 %v110
  %v1925 = vpop.f32.mrf.mxu0
  %v1926 = vadd.f32 0.0, %v1925
  %v1927 = vpop.f32.mrf.mxu0
  %1928 = vmatprep.mubr.f32.mxu0 0.0
  %1929 = vmatmul.mubr.f32.gmra.mxu0 %v113
  %v1930 = vpop.f32.mrf.mxu0
  %v1931 = vadd.f32 0.0, %v1930
  %v1932 = vpop.f32.mrf.mxu0
  %1933 = vmatprep.mubr.f32.mxu0 0.0
  %1934 = vmatmul.mubr.f32.gmra.mxu0 %v116
  %v1935 = vpop.f32.mrf.mxu0
  %v1936 = vadd.f32 0.0, %v1935
  %v1937 = vpop.f32.mrf.mxu0
  %1938 = vmatprep.mubr.f32.mxu0 0.0
  %1939 = vmatmul.mubr.f32.gmra.mxu0 %v119
  %v1940 = vpop.f32.mrf.mxu0
  %v1941 = vadd.f32 0.0, %v1940
  %v1942 = vpop.f32.mrf.mxu0
  %1943 = vmatprep.mubr.f32.mxu0 0.0
  %1944 = vmatmul.mubr.f32.gmra.mxu0 %v122
  %v1945 = vpop.f32.mrf.mxu0
  %v1946 = vadd.f32 0.0, %v1945
  %v1947 = vpop.f32.mrf.mxu0
  %1948 = vmatprep.mubr.f32.mxu0 0.0
  %1949 = vmatmul.mubr.f32.gmra.mxu0 %v125
  %v1950 = vpop.f32.mrf.mxu0
  %v1951 = vadd.f32 0.0, %v1950
  %v1952 = vpop.f32.mrf.mxu0
  %1953 = vmatprep.mubr.f32.mxu0 0.0
  %1954 = vmatmul.mubr.f32.gmra.mxu0 %v128
  %v1955 = vpop.f32.mrf.mxu0
  %v1956 = vadd.f32 0.0, %v1955
  %v1957 = vpop.f32.mrf.mxu0
  %1958 = vmatprep.mubr.f32.mxu0 0.0
  %1959 = vmatmul.mubr.f32.gmra.mxu0 %v131
  %v1960 = vpop.f32.mrf.mxu0
  %v1961 = vadd.f32 0.0, %v1960
  %v1962 = vpop.f32.mrf.mxu0
  %1963 = vmatprep.mubr.f32.mxu0 0.0
  %1964 = vmatmul.mubr.f32.gmra.mxu0 %v134
  %v1965 = vpop.f32.mrf.mxu0
  %v1966 = vadd.f32 0.0, %v1965
  %v1967 = vpop.f32.mrf.mxu0
  %1968 = vmatprep.mubr.f32.mxu0 0.0
  %1969 = vmatmul.mubr.f32.gmra.mxu0 %v137
  %v1970 = vpop.f32.mrf.mxu0
  %v1971 = vadd.f32 0.0, %v1970
  %v1972 = vpop.f32.mrf.mxu0
  %1973 = vmatprep.mubr.f32.mxu0 0.0
  %1974 = vmatmul.mubr.f32.gmra.mxu0 %v140
  %v1975 = vpop.f32.mrf.mxu0
  %v1976 = vadd.f32 0.0, %v1975
  %v1977 = vpop.f32.mrf.mxu0
  %1978 = vmatprep.mubr.f32.mxu0 0.0
  %1979 = vmatmul.mubr.f32.gmra.mxu0 %v143
  %v1980 = vpop.f32.mrf.mxu0
  %v1981 = vadd.f32 0.0, %v1980
  %v1982 = vpop.f32.mrf.mxu0
  %1983 = vmatprep.mubr.f32.mxu0 0.0
  %1984 = vmatmul.mubr.f32.gmra.mxu0 %v146
  %v1985 = vpop.f32.mrf.mxu0
  %v1986 = vadd.f32 0.0, %v1985
  %v1987 = vpop.f32.mrf.mxu0
  %1988 = vdwg.mxu0
  %v1989 = vadd.f32 %v297, %v1911
  %v1990 = vadd.f32 %v297, %v1916
  %v1991 = vadd.f32 %v297, %v1921
  %v1992 = vadd.f32 %v297, %v1926
  %v1993 = vadd.f32 %v297, %v1931
  %v1994 = vadd.f32 %v297, %v1936
  %v1995 = vadd.f32 %v297, %v1941
  %v1996 = vadd.f32 %v297, %v1946
  %v1997 = vadd.f32 %v297, %v1951
  %v1998 = vadd.f32 %v297, %v1956
  %v1999 = vadd.f32 %v297, %v1961
  %v2000 = vadd.f32 %v297, %v1966
  %v2001 = vadd.f32 %v297, %v1971
  %v2002 = vadd.f32 %v297, %v1976
  %v2003 = vadd.f32 %v297, %v1981
  %v2004 = vadd.f32 %v297, %v1986
  %s2005 = scalar_lea.vmem %s1, 640
  %v2006 = vld [vmem:[%s2005] sm:$0xff]
  %v2007 = vld [vmem:[%s2005 + $0x8] sm:$0xff]
  %v2008 = vld [vmem:[%s2005 + $0x10] sm:$0xff]
  %v2009 = vld [vmem:[%s2005 + $0x18] sm:$0xff]
  %v2010 = vld [vmem:[%s2005 + $0x20] sm:$0xff]
  %v2011 = vld [vmem:[%s2005 + $0x28] sm:$0xff]
  %v2012 = vld [vmem:[%s2005 + $0x30] sm:$0xff]
  %v2013 = vld [vmem:[%s2005 + $0x38] sm:$0xff]
  %2014 = vmatprep.subr.mxu0 0.0
  %2015 = vmatpush1.msra.mxu0 0.0
  %2016 = vmatprep.subr.mxu0 0.0
  %2017 = vmatpush1.msra.mxu0 0.0
  %2018 = vmatprep.subr.mxu0 0.0
  %2019 = vmatpush1.msra.mxu0 0.0
  %2020 = vmatprep.subr.mxu0 0.0
  %2021 = vmatpush1.msra.mxu0 0.0
  %2022 = vmatprep.subr.mxu0 0.0
  %2023 = vmatpush1.msra.mxu0 0.0
  %2024 = vmatprep.subr.mxu0 0.0
  %2025 = vmatpush1.msra.mxu0 0.0
  %2026 = vmatprep.subr.mxu0 0.0
  %2027 = vmatpush1.msra.mxu0 0.0
  %2028 = vmatprep.subr.mxu0 0.0
  %2029 = vmatpush1.msra.mxu0 0.0
  %2030 = vmatprep.subr.mxu0 0.0
  %2031 = vmatpush1.msra.mxu0 %v2013
  %2032 = vmatprep.subr.mxu0 0.0
  %2033 = vmatpush1.msra.mxu0 %v2012
  %2034 = vmatprep.subr.mxu0 0.0
  %2035 = vmatpush1.msra.mxu0 %v2011
  %2036 = vmatprep.subr.mxu0 0.0
  %2037 = vmatpush1.msra.mxu0 %v2010
  %2038 = vmatprep.subr.mxu0 0.0
  %2039 = vmatpush1.msra.mxu0 %v2009
  %2040 = vmatprep.subr.mxu0 0.0
  %2041 = vmatpush1.msra.mxu0 %v2008
  %2042 = vmatprep.subr.mxu0 0.0
  %2043 = vmatpush1.msra.mxu0 %v2007
  %2044 = vmatprep.subr.mxu0 0.0
  %2045 = vmatpush1.msra.mxu0 %v2006
  %2046 = vmatprep.subr.mxu0 0.0
  %2047 = vmatpush2.msra.mxu0 0.0
  %2048 = vmatprep.subr.mxu0 0.0
  %2049 = vmatpush2.msra.mxu0 0.0
  %2050 = vmatprep.subr.mxu0 0.0
  %2051 = vmatpush2.msra.mxu0 0.0
  %2052 = vmatprep.subr.mxu0 0.0
  %2053 = vmatpush2.msra.mxu0 0.0
  %2054 = vmatprep.subr.mxu0 0.0
  %2055 = vmatpush2.msra.mxu0 0.0
  %2056 = vmatprep.subr.mxu0 0.0
  %2057 = vmatpush2.msra.mxu0 0.0
  %2058 = vmatprep.subr.mxu0 0.0
  %2059 = vmatpush2.msra.mxu0 0.0
  %2060 = vmatprep.subr.mxu0 0.0
  %2061 = vmatpush2.msra.mxu0 0.0
  %2062 = vmatprep.subr.mxu0 0.0
  %2063 = vmatpush2.msra.mxu0 0.0
  %2064 = vmatprep.subr.mxu0 0.0
  %2065 = vmatpush2.msra.mxu0 0.0
  %2066 = vmatprep.subr.mxu0 0.0
  %2067 = vmatpush2.msra.mxu0 0.0
  %2068 = vmatprep.subr.mxu0 0.0
  %2069 = vmatpush2.msra.mxu0 0.0
  %2070 = vmatprep.subr.mxu0 0.0
  %2071 = vmatpush2.msra.mxu0 0.0
  %2072 = vmatprep.subr.mxu0 0.0
  %2073 = vmatpush2.msra.mxu0 0.0
  %2074 = vmatprep.subr.mxu0 0.0
  %2075 = vmatpush2.msra.mxu0 0.0
  %2076 = vmatprep.subr.mxu0 0.0
  %2077 = vmatpush2.msra.mxu0 0.0
  %2078 = vmatprep.mubr.f32.mxu0 0.0
  %2079 = vmatmul.mubr.f32.gmra.mxu0 %v341
  %v2080 = vpop.f32.mrf.mxu0
  %v2081 = vadd.f32 0.0, %v2080
  %v2082 = vpop.f32.mrf.mxu0
  %2083 = vmatprep.mubr.f32.mxu0 0.0
  %2084 = vmatmul.mubr.f32.gmra.mxu0 %v344
  %v2085 = vpop.f32.mrf.mxu0
  %v2086 = vadd.f32 0.0, %v2085
  %v2087 = vpop.f32.mrf.mxu0
  %2088 = vmatprep.mubr.f32.mxu0 0.0
  %2089 = vmatmul.mubr.f32.gmra.mxu0 %v347
  %v2090 = vpop.f32.mrf.mxu0
  %v2091 = vadd.f32 0.0, %v2090
  %v2092 = vpop.f32.mrf.mxu0
  %2093 = vmatprep.mubr.f32.mxu0 0.0
  %2094 = vmatmul.mubr.f32.gmra.mxu0 %v350
  %v2095 = vpop.f32.mrf.mxu0
  %v2096 = vadd.f32 0.0, %v2095
  %v2097 = vpop.f32.mrf.mxu0
  %2098 = vmatprep.mubr.f32.mxu0 0.0
  %2099 = vmatmul.mubr.f32.gmra.mxu0 %v353
  %v2100 = vpop.f32.mrf.mxu0
  %v2101 = vadd.f32 0.0, %v2100
  %v2102 = vpop.f32.mrf.mxu0
  %2103 = vmatprep.mubr.f32.mxu0 0.0
  %2104 = vmatmul.mubr.f32.gmra.mxu0 %v356
  %v2105 = vpop.f32.mrf.mxu0
  %v2106 = vadd.f32 0.0, %v2105
  %v2107 = vpop.f32.mrf.mxu0
  %2108 = vmatprep.mubr.f32.mxu0 0.0
  %2109 = vmatmul.mubr.f32.gmra.mxu0 %v359
  %v2110 = vpop.f32.mrf.mxu0
  %v2111 = vadd.f32 0.0, %v2110
  %v2112 = vpop.f32.mrf.mxu0
  %2113 = vmatprep.mubr.f32.mxu0 0.0
  %2114 = vmatmul.mubr.f32.gmra.mxu0 %v362
  %v2115 = vpop.f32.mrf.mxu0
  %v2116 = vadd.f32 0.0, %v2115
  %v2117 = vpop.f32.mrf.mxu0
  %2118 = vmatprep.mubr.f32.mxu0 0.0
  %2119 = vmatmul.mubr.f32.gmra.mxu0 %v365
  %v2120 = vpop.f32.mrf.mxu0
  %v2121 = vadd.f32 0.0, %v2120
  %v2122 = vpop.f32.mrf.mxu0
  %2123 = vmatprep.mubr.f32.mxu0 0.0
  %2124 = vmatmul.mubr.f32.gmra.mxu0 %v368
  %v2125 = vpop.f32.mrf.mxu0
  %v2126 = vadd.f32 0.0, %v2125
  %v2127 = vpop.f32.mrf.mxu0
  %2128 = vmatprep.mubr.f32.mxu0 0.0
  %2129 = vmatmul.mubr.f32.gmra.mxu0 %v371
  %v2130 = vpop.f32.mrf.mxu0
  %v2131 = vadd.f32 0.0, %v2130
  %v2132 = vpop.f32.mrf.mxu0
  %2133 = vmatprep.mubr.f32.mxu0 0.0
  %2134 = vmatmul.mubr.f32.gmra.mxu0 %v374
  %v2135 = vpop.f32.mrf.mxu0
  %v2136 = vadd.f32 0.0, %v2135
  %v2137 = vpop.f32.mrf.mxu0
  %2138 = vmatprep.mubr.f32.mxu0 0.0
  %2139 = vmatmul.mubr.f32.gmra.mxu0 %v377
  %v2140 = vpop.f32.mrf.mxu0
  %v2141 = vadd.f32 0.0, %v2140
  %v2142 = vpop.f32.mrf.mxu0
  %2143 = vmatprep.mubr.f32.mxu0 0.0
  %2144 = vmatmul.mubr.f32.gmra.mxu0 %v380
  %v2145 = vpop.f32.mrf.mxu0
  %v2146 = vadd.f32 0.0, %v2145
  %v2147 = vpop.f32.mrf.mxu0
  %2148 = vmatprep.mubr.f32.mxu0 0.0
  %2149 = vmatmul.mubr.f32.gmra.mxu0 %v383
  %v2150 = vpop.f32.mrf.mxu0
  %v2151 = vadd.f32 0.0, %v2150
  %v2152 = vpop.f32.mrf.mxu0
  %2153 = vmatprep.mubr.f32.mxu0 0.0
  %2154 = vmatmul.mubr.f32.gmra.mxu0 %v386
  %v2155 = vpop.f32.mrf.mxu0
  %v2156 = vadd.f32 0.0, %v2155
  %v2157 = vpop.f32.mrf.mxu0
  %2158 = vdwg.mxu0
  %v2159 = vadd.f32 %v1989, %v2081
  %v2160 = vadd.f32 %v1990, %v2086
  %v2161 = vadd.f32 %v1991, %v2091
  %v2162 = vadd.f32 %v1992, %v2096
  %v2163 = vadd.f32 %v1993, %v2101
  %v2164 = vadd.f32 %v1994, %v2106
  %v2165 = vadd.f32 %v1995, %v2111
  %v2166 = vadd.f32 %v1996, %v2116
  %v2167 = vadd.f32 %v1997, %v2121
  %v2168 = vadd.f32 %v1998, %v2126
  %v2169 = vadd.f32 %v1999, %v2131
  %v2170 = vadd.f32 %v2000, %v2136
  %v2171 = vadd.f32 %v2001, %v2141
  %v2172 = vadd.f32 %v2002, %v2146
  %v2173 = vadd.f32 %v2003, %v2151
  %v2174 = vadd.f32 %v2004, %v2156
  %s2175 = scalar_lea.vmem %s1, 704
  %v2176 = vld [vmem:[%s2175] sm:$0xff]
  %v2177 = vld [vmem:[%s2175 + $0x8] sm:$0xff]
  %v2178 = vld [vmem:[%s2175 + $0x10] sm:$0xff]
  %v2179 = vld [vmem:[%s2175 + $0x18] sm:$0xff]
  %v2180 = vld [vmem:[%s2175 + $0x20] sm:$0xff]
  %v2181 = vld [vmem:[%s2175 + $0x28] sm:$0xff]
  %v2182 = vld [vmem:[%s2175 + $0x30] sm:$0xff]
  %v2183 = vld [vmem:[%s2175 + $0x38] sm:$0xff]
  %2184 = vmatprep.subr.mxu0 0.0
  %2185 = vmatpush1.msra.mxu0 0.0
  %2186 = vmatprep.subr.mxu0 0.0
  %2187 = vmatpush1.msra.mxu0 0.0
  %2188 = vmatprep.subr.mxu0 0.0
  %2189 = vmatpush1.msra.mxu0 0.0
  %2190 = vmatprep.subr.mxu0 0.0
  %2191 = vmatpush1.msra.mxu0 0.0
  %2192 = vmatprep.subr.mxu0 0.0
  %2193 = vmatpush1.msra.mxu0 0.0
  %2194 = vmatprep.subr.mxu0 0.0
  %2195 = vmatpush1.msra.mxu0 0.0
  %2196 = vmatprep.subr.mxu0 0.0
  %2197 = vmatpush1.msra.mxu0 0.0
  %2198 = vmatprep.subr.mxu0 0.0
  %2199 = vmatpush1.msra.mxu0 0.0
  %2200 = vmatprep.subr.mxu0 0.0
  %2201 = vmatpush1.msra.mxu0 %v2183
  %2202 = vmatprep.subr.mxu0 0.0
  %2203 = vmatpush1.msra.mxu0 %v2182
  %2204 = vmatprep.subr.mxu0 0.0
  %2205 = vmatpush1.msra.mxu0 %v2181
  %2206 = vmatprep.subr.mxu0 0.0
  %2207 = vmatpush1.msra.mxu0 %v2180
  %2208 = vmatprep.subr.mxu0 0.0
  %2209 = vmatpush1.msra.mxu0 %v2179
  %2210 = vmatprep.subr.mxu0 0.0
  %2211 = vmatpush1.msra.mxu0 %v2178
  %2212 = vmatprep.subr.mxu0 0.0
  %2213 = vmatpush1.msra.mxu0 %v2177
  %2214 = vmatprep.subr.mxu0 0.0
  %2215 = vmatpush1.msra.mxu0 %v2176
  %2216 = vmatprep.subr.mxu0 0.0
  %2217 = vmatpush2.msra.mxu0 0.0
  %2218 = vmatprep.subr.mxu0 0.0
  %2219 = vmatpush2.msra.mxu0 0.0
  %2220 = vmatprep.subr.mxu0 0.0
  %2221 = vmatpush2.msra.mxu0 0.0
  %2222 = vmatprep.subr.mxu0 0.0
  %2223 = vmatpush2.msra.mxu0 0.0
  %2224 = vmatprep.subr.mxu0 0.0
  %2225 = vmatpush2.msra.mxu0 0.0
  %2226 = vmatprep.subr.mxu0 0.0
  %2227 = vmatpush2.msra.mxu0 0.0
  %2228 = vmatprep.subr.mxu0 0.0
  %2229 = vmatpush2.msra.mxu0 0.0
  %2230 = vmatprep.subr.mxu0 0.0
  %2231 = vmatpush2.msra.mxu0 0.0
  %2232 = vmatprep.subr.mxu0 0.0
  %2233 = vmatpush2.msra.mxu0 0.0
  %2234 = vmatprep.subr.mxu0 0.0
  %2235 = vmatpush2.msra.mxu0 0.0
  %2236 = vmatprep.subr.mxu0 0.0
  %2237 = vmatpush2.msra.mxu0 0.0
  %2238 = vmatprep.subr.mxu0 0.0
  %2239 = vmatpush2.msra.mxu0 0.0
  %2240 = vmatprep.subr.mxu0 0.0
  %2241 = vmatpush2.msra.mxu0 0.0
  %2242 = vmatprep.subr.mxu0 0.0
  %2243 = vmatpush2.msra.mxu0 0.0
  %2244 = vmatprep.subr.mxu0 0.0
  %2245 = vmatpush2.msra.mxu0 0.0
  %2246 = vmatprep.subr.mxu0 0.0
  %2247 = vmatpush2.msra.mxu0 0.0
  %2248 = vmatprep.mubr.f32.mxu0 0.0
  %2249 = vmatmul.mubr.f32.gmra.mxu0 %v575
  %v2250 = vpop.f32.mrf.mxu0
  %v2251 = vadd.f32 0.0, %v2250
  %v2252 = vpop.f32.mrf.mxu0
  %2253 = vmatprep.mubr.f32.mxu0 0.0
  %2254 = vmatmul.mubr.f32.gmra.mxu0 %v578
  %v2255 = vpop.f32.mrf.mxu0
  %v2256 = vadd.f32 0.0, %v2255
  %v2257 = vpop.f32.mrf.mxu0
  %2258 = vmatprep.mubr.f32.mxu0 0.0
  %2259 = vmatmul.mubr.f32.gmra.mxu0 %v581
  %v2260 = vpop.f32.mrf.mxu0
  %v2261 = vadd.f32 0.0, %v2260
  %v2262 = vpop.f32.mrf.mxu0
  %2263 = vmatprep.mubr.f32.mxu0 0.0
  %2264 = vmatmul.mubr.f32.gmra.mxu0 %v584
  %v2265 = vpop.f32.mrf.mxu0
  %v2266 = vadd.f32 0.0, %v2265
  %v2267 = vpop.f32.mrf.mxu0
  %2268 = vmatprep.mubr.f32.mxu0 0.0
  %2269 = vmatmul.mubr.f32.gmra.mxu0 %v587
  %v2270 = vpop.f32.mrf.mxu0
  %v2271 = vadd.f32 0.0, %v2270
  %v2272 = vpop.f32.mrf.mxu0
  %2273 = vmatprep.mubr.f32.mxu0 0.0
  %2274 = vmatmul.mubr.f32.gmra.mxu0 %v590
  %v2275 = vpop.f32.mrf.mxu0
  %v2276 = vadd.f32 0.0, %v2275
  %v2277 = vpop.f32.mrf.mxu0
  %2278 = vmatprep.mubr.f32.mxu0 0.0
  %2279 = vmatmul.mubr.f32.gmra.mxu0 %v593
  %v2280 = vpop.f32.mrf.mxu0
  %v2281 = vadd.f32 0.0, %v2280
  %v2282 = vpop.f32.mrf.mxu0
  %2283 = vmatprep.mubr.f32.mxu0 0.0
  %2284 = vmatmul.mubr.f32.gmra.mxu0 %v596
  %v2285 = vpop.f32.mrf.mxu0
  %v2286 = vadd.f32 0.0, %v2285
  %v2287 = vpop.f32.mrf.mxu0
  %2288 = vmatprep.mubr.f32.mxu0 0.0
  %2289 = vmatmul.mubr.f32.gmra.mxu0 %v599
  %v2290 = vpop.f32.mrf.mxu0
  %v2291 = vadd.f32 0.0, %v2290
  %v2292 = vpop.f32.mrf.mxu0
  %2293 = vmatprep.mubr.f32.mxu0 0.0
  %2294 = vmatmul.mubr.f32.gmra.mxu0 %v602
  %v2295 = vpop.f32.mrf.mxu0
  %v2296 = vadd.f32 0.0, %v2295
  %v2297 = vpop.f32.mrf.mxu0
  %2298 = vmatprep.mubr.f32.mxu0 0.0
  %2299 = vmatmul.mubr.f32.gmra.mxu0 %v605
  %v2300 = vpop.f32.mrf.mxu0
  %v2301 = vadd.f32 0.0, %v2300
  %v2302 = vpop.f32.mrf.mxu0
  %2303 = vmatprep.mubr.f32.mxu0 0.0
  %2304 = vmatmul.mubr.f32.gmra.mxu0 %v608
  %v2305 = vpop.f32.mrf.mxu0
  %v2306 = vadd.f32 0.0, %v2305
  %v2307 = vpop.f32.mrf.mxu0
  %2308 = vmatprep.mubr.f32.mxu0 0.0
  %2309 = vmatmul.mubr.f32.gmra.mxu0 %v611
  %v2310 = vpop.f32.mrf.mxu0
  %v2311 = vadd.f32 0.0, %v2310
  %v2312 = vpop.f32.mrf.mxu0
  %2313 = vmatprep.mubr.f32.mxu0 0.0
  %2314 = vmatmul.mubr.f32.gmra.mxu0 %v614
  %v2315 = vpop.f32.mrf.mxu0
  %v2316 = vadd.f32 0.0, %v2315
  %v2317 = vpop.f32.mrf.mxu0
  %2318 = vmatprep.mubr.f32.mxu0 0.0
  %2319 = vmatmul.mubr.f32.gmra.mxu0 %v617
  %v2320 = vpop.f32.mrf.mxu0
  %v2321 = vadd.f32 0.0, %v2320
  %v2322 = vpop.f32.mrf.mxu0
  %2323 = vmatprep.mubr.f32.mxu0 0.0
  %2324 = vmatmul.mubr.f32.gmra.mxu0 %v620
  %v2325 = vpop.f32.mrf.mxu0
  %v2326 = vadd.f32 0.0, %v2325
  %v2327 = vpop.f32.mrf.mxu0
  %2328 = vdwg.mxu0
  %v2329 = vadd.f32 %v2159, %v2251
  %v2330 = vadd.f32 %v2160, %v2256
  %v2331 = vadd.f32 %v2161, %v2261
  %v2332 = vadd.f32 %v2162, %v2266
  %v2333 = vadd.f32 %v2163, %v2271
  %v2334 = vadd.f32 %v2164, %v2276
  %v2335 = vadd.f32 %v2165, %v2281
  %v2336 = vadd.f32 %v2166, %v2286
  %v2337 = vadd.f32 %v2167, %v2291
  %v2338 = vadd.f32 %v2168, %v2296
  %v2339 = vadd.f32 %v2169, %v2301
  %v2340 = vadd.f32 %v2170, %v2306
  %v2341 = vadd.f32 %v2171, %v2311
  %v2342 = vadd.f32 %v2172, %v2316
  %v2343 = vadd.f32 %v2173, %v2321
  %v2344 = vadd.f32 %v2174, %v2326
  %v2345 = vmax.f32 %v1819, %v2329
  %v2346 = vmax.f32 %v1820, %v2330
  %v2347 = vmax.f32 %v1821, %v2331
  %v2348 = vmax.f32 %v1822, %v2332
  %v2349 = vmax.f32 %v1823, %v2333
  %v2350 = vmax.f32 %v1824, %v2334
  %v2351 = vmax.f32 %v1825, %v2335
  %v2352 = vmax.f32 %v1826, %v2336
  %v2353 = vmax.f32 %v1827, %v2337
  %v2354 = vmax.f32 %v1828, %v2338
  %v2355 = vmax.f32 %v1829, %v2339
  %v2356 = vmax.f32 %v1830, %v2340
  %v2357 = vmax.f32 %v1831, %v2341
  %v2358 = vmax.f32 %v1832, %v2342
  %v2359 = vmax.f32 %v1833, %v2343
  %v2360 = vmax.f32 %v1834, %v2344
  %v2361 = vmax.f32 %v2345, 0.0
  %v2362 = vmax.f32 %v2346, 0.0
  %v2363 = vmax.f32 %v2347, 0.0
  %v2364 = vmax.f32 %v2348, 0.0
  %v2365 = vmax.f32 %v2349, 0.0
  %v2366 = vmax.f32 %v2350, 0.0
  %v2367 = vmax.f32 %v2351, 0.0
  %v2368 = vmax.f32 %v2352, 0.0
  %v2369 = vmax.f32 %v2353, 0.0
  %v2370 = vmax.f32 %v2354, 0.0
  %v2371 = vmax.f32 %v2355, 0.0
  %v2372 = vmax.f32 %v2356, 0.0
  %v2373 = vmax.f32 %v2357, 0.0
  %v2374 = vmax.f32 %v2358, 0.0
  %v2375 = vmax.f32 %v2359, 0.0
  %v2376 = vmax.f32 %v2360, 0.0
  %2377 = vst [vmem:[#allocation3] sm:$0xff] %v2361
  %2378 = vst [vmem:[#allocation3 + $0x8] sm:$0xff] %v2362
  %2379 = vst [vmem:[#allocation3 + $0x10] sm:$0xff] %v2363
  %2380 = vst [vmem:[#allocation3 + $0x18] sm:$0xff] %v2364
  %2381 = vst [vmem:[#allocation3 + $0x20] sm:$0xff] %v2365
  %2382 = vst [vmem:[#allocation3 + $0x28] sm:$0xff] %v2366
  %2383 = vst [vmem:[#allocation3 + $0x30] sm:$0xff] %v2367
  %2384 = vst [vmem:[#allocation3 + $0x38] sm:$0xff] %v2368
  %2385 = vst [vmem:[#allocation3 + $0x40] sm:$0xff] %v2369
  %2386 = vst [vmem:[#allocation3 + $0x48] sm:$0xff] %v2370
  %2387 = vst [vmem:[#allocation3 + $0x50] sm:$0xff] %v2371
  %2388 = vst [vmem:[#allocation3 + $0x58] sm:$0xff] %v2372
  %2389 = vst [vmem:[#allocation3 + $0x60] sm:$0xff] %v2373
  %2390 = vst [vmem:[#allocation3 + $0x68] sm:$0xff] %v2374
  %2391 = vst [vmem:[#allocation3 + $0x70] sm:$0xff] %v2375
  %2392 = vst [vmem:[#allocation3 + $0x78] sm:$0xff] %v2376
  %2393 = vst [vmem:[#allocation3 + $0x80] sm:$0xff] 0.0
  %v2394 = vld [vmem:[%s4] sm:$0x3]
  %v2395 = vld [vmem:[#allocation3] sm:$0xff]
  %v2396 = vld [vmem:[#allocation3 + $0x8] sm:$0xff]
  %v2397 = vld [vmem:[#allocation3 + $0x10] sm:$0xff]
  %v2398 = vld [vmem:[#allocation3 + $0x18] sm:$0xff]
  %v2399 = vld [vmem:[#allocation3 + $0x20] sm:$0xff]
  %v2400 = vld [vmem:[#allocation3 + $0x28] sm:$0xff]
  %v2401 = vld [vmem:[#allocation3 + $0x30] sm:$0xff]
  %v2402 = vld [vmem:[#allocation3 + $0x38] sm:$0xff]
  %v2403 = vld [vmem:[#allocation3 + $0x40] sm:$0xff]
  %v2404 = vld [vmem:[#allocation3 + $0x48] sm:$0xff]
  %v2405 = vld [vmem:[#allocation3 + $0x50] sm:$0xff]
  %v2406 = vld [vmem:[#allocation3 + $0x58] sm:$0xff]
  %v2407 = vld [vmem:[#allocation3 + $0x60] sm:$0xff]
  %v2408 = vld [vmem:[#allocation3 + $0x68] sm:$0xff]
  %v2409 = vld [vmem:[#allocation3 + $0x70] sm:$0xff]
  %v2410 = vld [vmem:[#allocation3 + $0x78] sm:$0xff]
  %v2411 = vld [vmem:[%s3] sm:$0xff]
  %v2412 = vld [vmem:[%s3 + $0x8] sm:$0xff]
  %v2413 = vld [vmem:[%s3 + $0x10] sm:$0xff]
  %v2414 = vld [vmem:[%s3 + $0x18] sm:$0xff]
  %v2415 = vld [vmem:[%s3 + $0x20] sm:$0xff]
  %v2416 = vld [vmem:[%s3 + $0x28] sm:$0xff]
  %v2417 = vld [vmem:[%s3 + $0x30] sm:$0xff]
  %v2418 = vld [vmem:[%s3 + $0x38] sm:$0xff]
  %v2419 = vld [vmem:[%s3 + $0x40] sm:$0xff]
  %v2420 = vld [vmem:[%s3 + $0x48] sm:$0xff]
  %v2421 = vld [vmem:[%s3 + $0x50] sm:$0xff]
  %v2422 = vld [vmem:[%s3 + $0x58] sm:$0xff]
  %v2423 = vld [vmem:[%s3 + $0x60] sm:$0xff]
  %v2424 = vld [vmem:[%s3 + $0x68] sm:$0xff]
  %v2425 = vld [vmem:[%s3 + $0x70] sm:$0xff]
  %v2426 = vld [vmem:[%s3 + $0x78] sm:$0xff]
  %v2427 = vld [vmem:[%s3 + $0x80] sm:$0xff]
  %v2428 = vld [vmem:[%s3 + $0x88] sm:$0xff]
  %v2429 = vld [vmem:[%s3 + $0x90] sm:$0xff]
  %v2430 = vld [vmem:[%s3 + $0x98] sm:$0xff]
  %v2431 = vld [vmem:[%s3 + $0xa0] sm:$0xff]
  %v2432 = vld [vmem:[%s3 + $0xa8] sm:$0xff]
  %v2433 = vld [vmem:[%s3 + $0xb0] sm:$0xff]
  %v2434 = vld [vmem:[%s3 + $0xb8] sm:$0xff]
  %v2435 = vld [vmem:[%s3 + $0xc0] sm:$0xff]
  %v2436 = vld [vmem:[%s3 + $0xc8] sm:$0xff]
  %v2437 = vld [vmem:[%s3 + $0xd0] sm:$0xff]
  %v2438 = vld [vmem:[%s3 + $0xd8] sm:$0xff]
  %v2439 = vld [vmem:[%s3 + $0xe0] sm:$0xff]
  %v2440 = vld [vmem:[%s3 + $0xe8] sm:$0xff]
  %v2441 = vld [vmem:[%s3 + $0xf0] sm:$0xff]
  %v2442 = vld [vmem:[%s3 + $0xf8] sm:$0xff]
  %2443 = vmatprep.subr.mxu0 %v2442
  %2444 = vmatpush1.msra.mxu0 %v2441
  %2445 = vmatprep.subr.mxu0 %v2440
  %2446 = vmatpush1.msra.mxu0 %v2439
  %2447 = vmatprep.subr.mxu0 %v2438
  %2448 = vmatpush1.msra.mxu0 %v2437
  %2449 = vmatprep.subr.mxu0 %v2436
  %2450 = vmatpush1.msra.mxu0 %v2435
  %2451 = vmatprep.subr.mxu0 %v2434
  %2452 = vmatpush1.msra.mxu0 %v2433
  %2453 = vmatprep.subr.mxu0 %v2432
  %2454 = vmatpush1.msra.mxu0 %v2431
  %2455 = vmatprep.subr.mxu0 %v2430
  %2456 = vmatpush1.msra.mxu0 %v2429
  %2457 = vmatprep.subr.mxu0 %v2428
  %2458 = vmatpush1.msra.mxu0 %v2427
  %2459 = vmatprep.subr.mxu0 %v2426
  %2460 = vmatpush1.msra.mxu0 %v2425
  %2461 = vmatprep.subr.mxu0 %v2424
  %2462 = vmatpush1.msra.mxu0 %v2423
  %2463 = vmatprep.subr.mxu0 %v2422
  %2464 = vmatpush1.msra.mxu0 %v2421
  %2465 = vmatprep.subr.mxu0 %v2420
  %2466 = vmatpush1.msra.mxu0 %v2419
  %2467 = vmatprep.subr.mxu0 %v2418
  %2468 = vmatpush1.msra.mxu0 %v2417
  %2469 = vmatprep.subr.mxu0 %v2416
  %2470 = vmatpush1.msra.mxu0 %v2415
  %2471 = vmatprep.subr.mxu0 %v2414
  %2472 = vmatpush1.msra.mxu0 %v2413
  %2473 = vmatprep.subr.mxu0 %v2412
  %2474 = vmatpush1.msra.mxu0 %v2411
  %2475 = vmatprep.subr.mxu0 0.0
  %2476 = vmatpush2.msra.mxu0 0.0
  %2477 = vmatprep.subr.mxu0 0.0
  %2478 = vmatpush2.msra.mxu0 0.0
  %2479 = vmatprep.subr.mxu0 0.0
  %2480 = vmatpush2.msra.mxu0 0.0
  %2481 = vmatprep.subr.mxu0 0.0
  %2482 = vmatpush2.msra.mxu0 0.0
  %2483 = vmatprep.subr.mxu0 0.0
  %2484 = vmatpush2.msra.mxu0 0.0
  %2485 = vmatprep.subr.mxu0 0.0
  %2486 = vmatpush2.msra.mxu0 0.0
  %2487 = vmatprep.subr.mxu0 0.0
  %2488 = vmatpush2.msra.mxu0 0.0
  %2489 = vmatprep.subr.mxu0 0.0
  %2490 = vmatpush2.msra.mxu0 0.0
  %2491 = vmatprep.subr.mxu0 0.0
  %2492 = vmatpush2.msra.mxu0 0.0
  %2493 = vmatprep.subr.mxu0 0.0
  %2494 = vmatpush2.msra.mxu0 0.0
  %2495 = vmatprep.subr.mxu0 0.0
  %2496 = vmatpush2.msra.mxu0 0.0
  %2497 = vmatprep.subr.mxu0 0.0
  %2498 = vmatpush2.msra.mxu0 0.0
  %2499 = vmatprep.subr.mxu0 0.0
  %2500 = vmatpush2.msra.mxu0 0.0
  %2501 = vmatprep.subr.mxu0 0.0
  %2502 = vmatpush2.msra.mxu0 0.0
  %2503 = vmatprep.subr.mxu0 0.0
  %2504 = vmatpush2.msra.mxu0 0.0
  %2505 = vmatprep.subr.mxu0 0.0
  %2506 = vmatpush2.msra.mxu0 0.0
  %2507 = vmatprep.mubr.f32.mxu0 0.0
  %2508 = vmatmul.mubr.f32.gmra.mxu0 %v2395
  %v2509 = vpop.f32.mrf.mxu0
  %v2510 = vadd.f32 0.0, %v2509
  %v2511 = vpop.f32.mrf.mxu0
  %v2512 = vadd.f32 0.0, %v2511
  %2513 = vmatprep.mubr.f32.mxu0 0.0
  %2514 = vmatmul.mubr.f32.gmra.mxu0 %v2396
  %v2515 = vpop.f32.mrf.mxu0
  %v2516 = vadd.f32 0.0, %v2515
  %v2517 = vpop.f32.mrf.mxu0
  %v2518 = vadd.f32 0.0, %v2517
  %2519 = vmatprep.mubr.f32.mxu0 0.0
  %2520 = vmatmul.mubr.f32.gmra.mxu0 %v2397
  %v2521 = vpop.f32.mrf.mxu0
  %v2522 = vadd.f32 0.0, %v2521
  %v2523 = vpop.f32.mrf.mxu0
  %v2524 = vadd.f32 0.0, %v2523
  %2525 = vmatprep.mubr.f32.mxu0 0.0
  %2526 = vmatmul.mubr.f32.gmra.mxu0 %v2398
  %v2527 = vpop.f32.mrf.mxu0
  %v2528 = vadd.f32 0.0, %v2527
  %v2529 = vpop.f32.mrf.mxu0
  %v2530 = vadd.f32 0.0, %v2529
  %2531 = vmatprep.mubr.f32.mxu0 0.0
  %2532 = vmatmul.mubr.f32.gmra.mxu0 %v2399
  %v2533 = vpop.f32.mrf.mxu0
  %v2534 = vadd.f32 0.0, %v2533
  %v2535 = vpop.f32.mrf.mxu0
  %v2536 = vadd.f32 0.0, %v2535
  %2537 = vmatprep.mubr.f32.mxu0 0.0
  %2538 = vmatmul.mubr.f32.gmra.mxu0 %v2400
  %v2539 = vpop.f32.mrf.mxu0
  %v2540 = vadd.f32 0.0, %v2539
  %v2541 = vpop.f32.mrf.mxu0
  %v2542 = vadd.f32 0.0, %v2541
  %2543 = vmatprep.mubr.f32.mxu0 0.0
  %2544 = vmatmul.mubr.f32.gmra.mxu0 %v2401
  %v2545 = vpop.f32.mrf.mxu0
  %v2546 = vadd.f32 0.0, %v2545
  %v2547 = vpop.f32.mrf.mxu0
  %v2548 = vadd.f32 0.0, %v2547
  %2549 = vmatprep.mubr.f32.mxu0 0.0
  %2550 = vmatmul.mubr.f32.gmra.mxu0 %v2402
  %v2551 = vpop.f32.mrf.mxu0
  %v2552 = vadd.f32 0.0, %v2551
  %v2553 = vpop.f32.mrf.mxu0
  %v2554 = vadd.f32 0.0, %v2553
  %2555 = vmatprep.mubr.f32.mxu0 0.0
  %2556 = vmatmul.mubr.f32.gmra.mxu0 %v2403
  %v2557 = vpop.f32.mrf.mxu0
  %v2558 = vadd.f32 0.0, %v2557
  %v2559 = vpop.f32.mrf.mxu0
  %v2560 = vadd.f32 0.0, %v2559
  %2561 = vmatprep.mubr.f32.mxu0 0.0
  %2562 = vmatmul.mubr.f32.gmra.mxu0 %v2404
  %v2563 = vpop.f32.mrf.mxu0
  %v2564 = vadd.f32 0.0, %v2563
  %v2565 = vpop.f32.mrf.mxu0
  %v2566 = vadd.f32 0.0, %v2565
  %2567 = vmatprep.mubr.f32.mxu0 0.0
  %2568 = vmatmul.mubr.f32.gmra.mxu0 %v2405
  %v2569 = vpop.f32.mrf.mxu0
  %v2570 = vadd.f32 0.0, %v2569
  %v2571 = vpop.f32.mrf.mxu0
  %v2572 = vadd.f32 0.0, %v2571
  %2573 = vmatprep.mubr.f32.mxu0 0.0
  %2574 = vmatmul.mubr.f32.gmra.mxu0 %v2406
  %v2575 = vpop.f32.mrf.mxu0
  %v2576 = vadd.f32 0.0, %v2575
  %v2577 = vpop.f32.mrf.mxu0
  %v2578 = vadd.f32 0.0, %v2577
  %2579 = vmatprep.mubr.f32.mxu0 0.0
  %2580 = vmatmul.mubr.f32.gmra.mxu0 %v2407
  %v2581 = vpop.f32.mrf.mxu0
  %v2582 = vadd.f32 0.0, %v2581
  %v2583 = vpop.f32.mrf.mxu0
  %v2584 = vadd.f32 0.0, %v2583
  %2585 = vmatprep.mubr.f32.mxu0 0.0
  %2586 = vmatmul.mubr.f32.gmra.mxu0 %v2408
  %v2587 = vpop.f32.mrf.mxu0
  %v2588 = vadd.f32 0.0, %v2587
  %v2589 = vpop.f32.mrf.mxu0
  %v2590 = vadd.f32 0.0, %v2589
  %2591 = vmatprep.mubr.f32.mxu0 0.0
  %2592 = vmatmul.mubr.f32.gmra.mxu0 %v2409
  %v2593 = vpop.f32.mrf.mxu0
  %v2594 = vadd.f32 0.0, %v2593
  %v2595 = vpop.f32.mrf.mxu0
  %v2596 = vadd.f32 0.0, %v2595
  %2597 = vmatprep.mubr.f32.mxu0 0.0
  %2598 = vmatmul.mubr.f32.gmra.mxu0 %v2410
  %v2599 = vpop.f32.mrf.mxu0
  %v2600 = vadd.f32 0.0, %v2599
  %v2601 = vpop.f32.mrf.mxu0
  %v2602 = vadd.f32 0.0, %v2601
  %2603 = vdwg.mxu0
  %v2605 = vlaneseq
  %v2606 = vshrl.u32 %v2605, 7
  %v2607 = vsub.s32 0, %v2606
  %v2608 = vrot.slane %v2394, %v2607
  %v2609 = vlaneseq
  %v2610 = vshrl.u32 %v2609, 7
  %v2611 = vsub.s32 1, %v2610
  %v2612 = vrot.slane %v2394, %v2611
  %v2615 = vadd.f32 %v2608, %v2510
  %v2616 = vadd.f32 %v2612, %v2512
  %v2617 = vadd.f32 %v2608, %v2516
  %v2618 = vadd.f32 %v2612, %v2518
  %v2619 = vadd.f32 %v2608, %v2522
  %v2620 = vadd.f32 %v2612, %v2524
  %v2621 = vadd.f32 %v2608, %v2528
  %v2622 = vadd.f32 %v2612, %v2530
  %v2623 = vadd.f32 %v2608, %v2534
  %v2624 = vadd.f32 %v2612, %v2536
  %v2625 = vadd.f32 %v2608, %v2540
  %v2626 = vadd.f32 %v2612, %v2542
  %v2627 = vadd.f32 %v2608, %v2546
  %v2628 = vadd.f32 %v2612, %v2548
  %v2629 = vadd.f32 %v2608, %v2552
  %v2630 = vadd.f32 %v2612, %v2554
  %v2631 = vadd.f32 %v2608, %v2558
  %v2632 = vadd.f32 %v2612, %v2560
  %v2633 = vadd.f32 %v2608, %v2564
  %v2634 = vadd.f32 %v2612, %v2566
  %v2635 = vadd.f32 %v2608, %v2570
  %v2636 = vadd.f32 %v2612, %v2572
  %v2637 = vadd.f32 %v2608, %v2576
  %v2638 = vadd.f32 %v2612, %v2578
  %v2639 = vadd.f32 %v2608, %v2582
  %v2640 = vadd.f32 %v2612, %v2584
  %v2641 = vadd.f32 %v2608, %v2588
  %v2642 = vadd.f32 %v2612, %v2590
  %v2643 = vadd.f32 %v2608, %v2594
  %v2644 = vadd.f32 %v2612, %v2596
  %v2645 = vadd.f32 %v2608, %v2600
  %v2646 = vadd.f32 %v2612, %v2602
  %v2647 = vld [vmem:[#allocation3 + $0x1] sm:$0xff]
  %v2648 = vld [vmem:[#allocation3 + $0x9] sm:$0xff]
  %v2649 = vld [vmem:[#allocation3 + $0x11] sm:$0xff]
  %v2650 = vld [vmem:[#allocation3 + $0x19] sm:$0xff]
  %v2651 = vld [vmem:[#allocation3 + $0x21] sm:$0xff]
  %v2652 = vld [vmem:[#allocation3 + $0x29] sm:$0xff]
  %v2653 = vld [vmem:[#allocation3 + $0x31] sm:$0xff]
  %v2654 = vld [vmem:[#allocation3 + $0x39] sm:$0xff]
  %v2655 = vld [vmem:[#allocation3 + $0x41] sm:$0xff]
  %v2656 = vld [vmem:[#allocation3 + $0x49] sm:$0xff]
  %v2657 = vld [vmem:[#allocation3 + $0x51] sm:$0xff]
  %v2658 = vld [vmem:[#allocation3 + $0x59] sm:$0xff]
  %v2659 = vld [vmem:[#allocation3 + $0x61] sm:$0xff]
  %v2660 = vld [vmem:[#allocation3 + $0x69] sm:$0xff]
  %v2661 = vld [vmem:[#allocation3 + $0x71] sm:$0xff]
  %v2662 = vld [vmem:[#allocation3 + $0x79] sm:$0xff]
  %s2663 = scalar_lea.vmem %s3, 256
  %v2664 = vld [vmem:[%s2663] sm:$0xff]
  %v2665 = vld [vmem:[%s2663 + $0x8] sm:$0xff]
  %v2666 = vld [vmem:[%s2663 + $0x10] sm:$0xff]
  %v2667 = vld [vmem:[%s2663 + $0x18] sm:$0xff]
  %v2668 = vld [vmem:[%s2663 + $0x20] sm:$0xff]
  %v2669 = vld [vmem:[%s2663 + $0x28] sm:$0xff]
  %v2670 = vld [vmem:[%s2663 + $0x30] sm:$0xff]
  %v2671 = vld [vmem:[%s2663 + $0x38] sm:$0xff]
  %v2672 = vld [vmem:[%s2663 + $0x40] sm:$0xff]
  %v2673 = vld [vmem:[%s2663 + $0x48] sm:$0xff]
  %v2674 = vld [vmem:[%s2663 + $0x50] sm:$0xff]
  %v2675 = vld [vmem:[%s2663 + $0x58] sm:$0xff]
  %v2676 = vld [vmem:[%s2663 + $0x60] sm:$0xff]
  %v2677 = vld [vmem:[%s2663 + $0x68] sm:$0xff]
  %v2678 = vld [vmem:[%s2663 + $0x70] sm:$0xff]
  %v2679 = vld [vmem:[%s2663 + $0x78] sm:$0xff]
  %v2680 = vld [vmem:[%s2663 + $0x80] sm:$0xff]
  %v2681 = vld [vmem:[%s2663 + $0x88] sm:$0xff]
  %v2682 = vld [vmem:[%s2663 + $0x90] sm:$0xff]
  %v2683 = vld [vmem:[%s2663 + $0x98] sm:$0xff]
  %v2684 = vld [vmem:[%s2663 + $0xa0] sm:$0xff]
  %v2685 = vld [vmem:[%s2663 + $0xa8] sm:$0xff]
  %v2686 = vld [vmem:[%s2663 + $0xb0] sm:$0xff]
  %v2687 = vld [vmem:[%s2663 + $0xb8] sm:$0xff]
  %v2688 = vld [vmem:[%s2663 + $0xc0] sm:$0xff]
  %v2689 = vld [vmem:[%s2663 + $0xc8] sm:$0xff]
  %v2690 = vld [vmem:[%s2663 + $0xd0] sm:$0xff]
  %v2691 = vld [vmem:[%s2663 + $0xd8] sm:$0xff]
  %v2692 = vld [vmem:[%s2663 + $0xe0] sm:$0xff]
  %v2693 = vld [vmem:[%s2663 + $0xe8] sm:$0xff]
  %v2694 = vld [vmem:[%s2663 + $0xf0] sm:$0xff]
  %v2695 = vld [vmem:[%s2663 + $0xf8] sm:$0xff]
  %2696 = vmatprep.subr.mxu0 %v2695
  %2697 = vmatpush1.msra.mxu0 %v2694
  %2698 = vmatprep.subr.mxu0 %v2693
  %2699 = vmatpush1.msra.mxu0 %v2692
  %2700 = vmatprep.subr.mxu0 %v2691
  %2701 = vmatpush1.msra.mxu0 %v2690
  %2702 = vmatprep.subr.mxu0 %v2689
  %2703 = vmatpush1.msra.mxu0 %v2688
  %2704 = vmatprep.subr.mxu0 %v2687
  %2705 = vmatpush1.msra.mxu0 %v2686
  %2706 = vmatprep.subr.mxu0 %v2685
  %2707 = vmatpush1.msra.mxu0 %v2684
  %2708 = vmatprep.subr.mxu0 %v2683
  %2709 = vmatpush1.msra.mxu0 %v2682
  %2710 = vmatprep.subr.mxu0 %v2681
  %2711 = vmatpush1.msra.mxu0 %v2680
  %2712 = vmatprep.subr.mxu0 %v2679
  %2713 = vmatpush1.msra.mxu0 %v2678
  %2714 = vmatprep.subr.mxu0 %v2677
  %2715 = vmatpush1.msra.mxu0 %v2676
  %2716 = vmatprep.subr.mxu0 %v2675
  %2717 = vmatpush1.msra.mxu0 %v2674
  %2718 = vmatprep.subr.mxu0 %v2673
  %2719 = vmatpush1.msra.mxu0 %v2672
  %2720 = vmatprep.subr.mxu0 %v2671
  %2721 = vmatpush1.msra.mxu0 %v2670
  %2722 = vmatprep.subr.mxu0 %v2669
  %2723 = vmatpush1.msra.mxu0 %v2668
  %2724 = vmatprep.subr.mxu0 %v2667
  %2725 = vmatpush1.msra.mxu0 %v2666
  %2726 = vmatprep.subr.mxu0 %v2665
  %2727 = vmatpush1.msra.mxu0 %v2664
  %2728 = vmatprep.subr.mxu0 0.0
  %2729 = vmatpush2.msra.mxu0 0.0
  %2730 = vmatprep.subr.mxu0 0.0
  %2731 = vmatpush2.msra.mxu0 0.0
  %2732 = vmatprep.subr.mxu0 0.0
  %2733 = vmatpush2.msra.mxu0 0.0
  %2734 = vmatprep.subr.mxu0 0.0
  %2735 = vmatpush2.msra.mxu0 0.0
  %2736 = vmatprep.subr.mxu0 0.0
  %2737 = vmatpush2.msra.mxu0 0.0
  %2738 = vmatprep.subr.mxu0 0.0
  %2739 = vmatpush2.msra.mxu0 0.0
  %2740 = vmatprep.subr.mxu0 0.0
  %2741 = vmatpush2.msra.mxu0 0.0
  %2742 = vmatprep.subr.mxu0 0.0
  %2743 = vmatpush2.msra.mxu0 0.0
  %2744 = vmatprep.subr.mxu0 0.0
  %2745 = vmatpush2.msra.mxu0 0.0
  %2746 = vmatprep.subr.mxu0 0.0
  %2747 = vmatpush2.msra.mxu0 0.0
  %2748 = vmatprep.subr.mxu0 0.0
  %2749 = vmatpush2.msra.mxu0 0.0
  %2750 = vmatprep.subr.mxu0 0.0
  %2751 = vmatpush2.msra.mxu0 0.0
  %2752 = vmatprep.subr.mxu0 0.0
  %2753 = vmatpush2.msra.mxu0 0.0
  %2754 = vmatprep.subr.mxu0 0.0
  %2755 = vmatpush2.msra.mxu0 0.0
  %2756 = vmatprep.subr.mxu0 0.0
  %2757 = vmatpush2.msra.mxu0 0.0
  %2758 = vmatprep.subr.mxu0 0.0
  %2759 = vmatpush2.msra.mxu0 0.0
  %2760 = vmatprep.mubr.f32.mxu0 0.0
  %2761 = vmatmul.mubr.f32.gmra.mxu0 %v2647
  %v2762 = vpop.f32.mrf.mxu0
  %v2763 = vadd.f32 0.0, %v2762
  %v2764 = vpop.f32.mrf.mxu0
  %v2765 = vadd.f32 0.0, %v2764
  %2766 = vmatprep.mubr.f32.mxu0 0.0
  %2767 = vmatmul.mubr.f32.gmra.mxu0 %v2648
  %v2768 = vpop.f32.mrf.mxu0
  %v2769 = vadd.f32 0.0, %v2768
  %v2770 = vpop.f32.mrf.mxu0
  %v2771 = vadd.f32 0.0, %v2770
  %2772 = vmatprep.mubr.f32.mxu0 0.0
  %2773 = vmatmul.mubr.f32.gmra.mxu0 %v2649
  %v2774 = vpop.f32.mrf.mxu0
  %v2775 = vadd.f32 0.0, %v2774
  %v2776 = vpop.f32.mrf.mxu0
  %v2777 = vadd.f32 0.0, %v2776
  %2778 = vmatprep.mubr.f32.mxu0 0.0
  %2779 = vmatmul.mubr.f32.gmra.mxu0 %v2650
  %v2780 = vpop.f32.mrf.mxu0
  %v2781 = vadd.f32 0.0, %v2780
  %v2782 = vpop.f32.mrf.mxu0
  %v2783 = vadd.f32 0.0, %v2782
  %2784 = vmatprep.mubr.f32.mxu0 0.0
  %2785 = vmatmul.mubr.f32.gmra.mxu0 %v2651
  %v2786 = vpop.f32.mrf.mxu0
  %v2787 = vadd.f32 0.0, %v2786
  %v2788 = vpop.f32.mrf.mxu0
  %v2789 = vadd.f32 0.0, %v2788
  %2790 = vmatprep.mubr.f32.mxu0 0.0
  %2791 = vmatmul.mubr.f32.gmra.mxu0 %v2652
  %v2792 = vpop.f32.mrf.mxu0
  %v2793 = vadd.f32 0.0, %v2792
  %v2794 = vpop.f32.mrf.mxu0
  %v2795 = vadd.f32 0.0, %v2794
  %2796 = vmatprep.mubr.f32.mxu0 0.0
  %2797 = vmatmul.mubr.f32.gmra.mxu0 %v2653
  %v2798 = vpop.f32.mrf.mxu0
  %v2799 = vadd.f32 0.0, %v2798
  %v2800 = vpop.f32.mrf.mxu0
  %v2801 = vadd.f32 0.0, %v2800
  %2802 = vmatprep.mubr.f32.mxu0 0.0
  %2803 = vmatmul.mubr.f32.gmra.mxu0 %v2654
  %v2804 = vpop.f32.mrf.mxu0
  %v2805 = vadd.f32 0.0, %v2804
  %v2806 = vpop.f32.mrf.mxu0
  %v2807 = vadd.f32 0.0, %v2806
  %2808 = vmatprep.mubr.f32.mxu0 0.0
  %2809 = vmatmul.mubr.f32.gmra.mxu0 %v2655
  %v2810 = vpop.f32.mrf.mxu0
  %v2811 = vadd.f32 0.0, %v2810
  %v2812 = vpop.f32.mrf.mxu0
  %v2813 = vadd.f32 0.0, %v2812
  %2814 = vmatprep.mubr.f32.mxu0 0.0
  %2815 = vmatmul.mubr.f32.gmra.mxu0 %v2656
  %v2816 = vpop.f32.mrf.mxu0
  %v2817 = vadd.f32 0.0, %v2816
  %v2818 = vpop.f32.mrf.mxu0
  %v2819 = vadd.f32 0.0, %v2818
  %2820 = vmatprep.mubr.f32.mxu0 0.0
  %2821 = vmatmul.mubr.f32.gmra.mxu0 %v2657
  %v2822 = vpop.f32.mrf.mxu0
  %v2823 = vadd.f32 0.0, %v2822
  %v2824 = vpop.f32.mrf.mxu0
  %v2825 = vadd.f32 0.0, %v2824
  %2826 = vmatprep.mubr.f32.mxu0 0.0
  %2827 = vmatmul.mubr.f32.gmra.mxu0 %v2658
  %v2828 = vpop.f32.mrf.mxu0
  %v2829 = vadd.f32 0.0, %v2828
  %v2830 = vpop.f32.mrf.mxu0
  %v2831 = vadd.f32 0.0, %v2830
  %2832 = vmatprep.mubr.f32.mxu0 0.0
  %2833 = vmatmul.mubr.f32.gmra.mxu0 %v2659
  %v2834 = vpop.f32.mrf.mxu0
  %v2835 = vadd.f32 0.0, %v2834
  %v2836 = vpop.f32.mrf.mxu0
  %v2837 = vadd.f32 0.0, %v2836
  %2838 = vmatprep.mubr.f32.mxu0 0.0
  %2839 = vmatmul.mubr.f32.gmra.mxu0 %v2660
  %v2840 = vpop.f32.mrf.mxu0
  %v2841 = vadd.f32 0.0, %v2840
  %v2842 = vpop.f32.mrf.mxu0
  %v2843 = vadd.f32 0.0, %v2842
  %2844 = vmatprep.mubr.f32.mxu0 0.0
  %2845 = vmatmul.mubr.f32.gmra.mxu0 %v2661
  %v2846 = vpop.f32.mrf.mxu0
  %v2847 = vadd.f32 0.0, %v2846
  %v2848 = vpop.f32.mrf.mxu0
  %v2849 = vadd.f32 0.0, %v2848
  %2850 = vmatprep.mubr.f32.mxu0 0.0
  %2851 = vmatmul.mubr.f32.gmra.mxu0 %v2662
  %v2852 = vpop.f32.mrf.mxu0
  %v2853 = vadd.f32 0.0, %v2852
  %v2854 = vpop.f32.mrf.mxu0
  %v2855 = vadd.f32 0.0, %v2854
  %2856 = vdwg.mxu0
  %v2857 = vadd.f32 %v2615, %v2763
  %v2858 = vadd.f32 %v2616, %v2765
  %v2859 = vadd.f32 %v2617, %v2769
  %v2860 = vadd.f32 %v2618, %v2771
  %v2861 = vadd.f32 %v2619, %v2775
  %v2862 = vadd.f32 %v2620, %v2777
  %v2863 = vadd.f32 %v2621, %v2781
  %v2864 = vadd.f32 %v2622, %v2783
  %v2865 = vadd.f32 %v2623, %v2787
  %v2866 = vadd.f32 %v2624, %v2789
  %v2867 = vadd.f32 %v2625, %v2793
  %v2868 = vadd.f32 %v2626, %v2795
  %v2869 = vadd.f32 %v2627, %v2799
  %v2870 = vadd.f32 %v2628, %v2801
  %v2871 = vadd.f32 %v2629, %v2805
  %v2872 = vadd.f32 %v2630, %v2807
  %v2873 = vadd.f32 %v2631, %v2811
  %v2874 = vadd.f32 %v2632, %v2813
  %v2875 = vadd.f32 %v2633, %v2817
  %v2876 = vadd.f32 %v2634, %v2819
  %v2877 = vadd.f32 %v2635, %v2823
  %v2878 = vadd.f32 %v2636, %v2825
  %v2879 = vadd.f32 %v2637, %v2829
  %v2880 = vadd.f32 %v2638, %v2831
  %v2881 = vadd.f32 %v2639, %v2835
  %v2882 = vadd.f32 %v2640, %v2837
  %v2883 = vadd.f32 %v2641, %v2841
  %v2884 = vadd.f32 %v2642, %v2843
  %v2885 = vadd.f32 %v2643, %v2847
  %v2886 = vadd.f32 %v2644, %v2849
  %v2887 = vadd.f32 %v2645, %v2853
  %v2888 = vadd.f32 %v2646, %v2855
  %v2889 = vld [vmem:[#allocation3 + $0x2] sm:$0xff]
  %v2890 = vld [vmem:[#allocation3 + $0xa] sm:$0xff]
  %v2891 = vld [vmem:[#allocation3 + $0x12] sm:$0xff]
  %v2892 = vld [vmem:[#allocation3 + $0x1a] sm:$0xff]
  %v2893 = vld [vmem:[#allocation3 + $0x22] sm:$0xff]
  %v2894 = vld [vmem:[#allocation3 + $0x2a] sm:$0xff]
  %v2895 = vld [vmem:[#allocation3 + $0x32] sm:$0xff]
  %v2896 = vld [vmem:[#allocation3 + $0x3a] sm:$0xff]
  %v2897 = vld [vmem:[#allocation3 + $0x42] sm:$0xff]
  %v2898 = vld [vmem:[#allocation3 + $0x4a] sm:$0xff]
  %v2899 = vld [vmem:[#allocation3 + $0x52] sm:$0xff]
  %v2900 = vld [vmem:[#allocation3 + $0x5a] sm:$0xff]
  %v2901 = vld [vmem:[#allocation3 + $0x62] sm:$0xff]
  %v2902 = vld [vmem:[#allocation3 + $0x6a] sm:$0xff]
  %v2903 = vld [vmem:[#allocation3 + $0x72] sm:$0xff]
  %v2904 = vld [vmem:[#allocation3 + $0x7a] sm:$0xff]
  %s2905 = scalar_lea.vmem %s3, 512
  %v2906 = vld [vmem:[%s2905] sm:$0xff]
  %v2907 = vld [vmem:[%s2905 + $0x8] sm:$0xff]
  %v2908 = vld [vmem:[%s2905 + $0x10] sm:$0xff]
  %v2909 = vld [vmem:[%s2905 + $0x18] sm:$0xff]
  %v2910 = vld [vmem:[%s2905 + $0x20] sm:$0xff]
  %v2911 = vld [vmem:[%s2905 + $0x28] sm:$0xff]
  %v2912 = vld [vmem:[%s2905 + $0x30] sm:$0xff]
  %v2913 = vld [vmem:[%s2905 + $0x38] sm:$0xff]
  %v2914 = vld [vmem:[%s2905 + $0x40] sm:$0xff]
  %v2915 = vld [vmem:[%s2905 + $0x48] sm:$0xff]
  %v2916 = vld [vmem:[%s2905 + $0x50] sm:$0xff]
  %v2917 = vld [vmem:[%s2905 + $0x58] sm:$0xff]
  %v2918 = vld [vmem:[%s2905 + $0x60] sm:$0xff]
  %v2919 = vld [vmem:[%s2905 + $0x68] sm:$0xff]
  %v2920 = vld [vmem:[%s2905 + $0x70] sm:$0xff]
  %v2921 = vld [vmem:[%s2905 + $0x78] sm:$0xff]
  %v2922 = vld [vmem:[%s2905 + $0x80] sm:$0xff]
  %v2923 = vld [vmem:[%s2905 + $0x88] sm:$0xff]
  %v2924 = vld [vmem:[%s2905 + $0x90] sm:$0xff]
  %v2925 = vld [vmem:[%s2905 + $0x98] sm:$0xff]
  %v2926 = vld [vmem:[%s2905 + $0xa0] sm:$0xff]
  %v2927 = vld [vmem:[%s2905 + $0xa8] sm:$0xff]
  %v2928 = vld [vmem:[%s2905 + $0xb0] sm:$0xff]
  %v2929 = vld [vmem:[%s2905 + $0xb8] sm:$0xff]
  %v2930 = vld [vmem:[%s2905 + $0xc0] sm:$0xff]
  %v2931 = vld [vmem:[%s2905 + $0xc8] sm:$0xff]
  %v2932 = vld [vmem:[%s2905 + $0xd0] sm:$0xff]
  %v2933 = vld [vmem:[%s2905 + $0xd8] sm:$0xff]
  %v2934 = vld [vmem:[%s2905 + $0xe0] sm:$0xff]
  %v2935 = vld [vmem:[%s2905 + $0xe8] sm:$0xff]
  %v2936 = vld [vmem:[%s2905 + $0xf0] sm:$0xff]
  %v2937 = vld [vmem:[%s2905 + $0xf8] sm:$0xff]
  %2938 = vmatprep.subr.mxu0 %v2937
  %2939 = vmatpush1.msra.mxu0 %v2936
  %2940 = vmatprep.subr.mxu0 %v2935
  %2941 = vmatpush1.msra.mxu0 %v2934
  %2942 = vmatprep.subr.mxu0 %v2933
  %2943 = vmatpush1.msra.mxu0 %v2932
  %2944 = vmatprep.subr.mxu0 %v2931
  %2945 = vmatpush1.msra.mxu0 %v2930
  %2946 = vmatprep.subr.mxu0 %v2929
  %2947 = vmatpush1.msra.mxu0 %v2928
  %2948 = vmatprep.subr.mxu0 %v2927
  %2949 = vmatpush1.msra.mxu0 %v2926
  %2950 = vmatprep.subr.mxu0 %v2925
  %2951 = vmatpush1.msra.mxu0 %v2924
  %2952 = vmatprep.subr.mxu0 %v2923
  %2953 = vmatpush1.msra.mxu0 %v2922
  %2954 = vmatprep.subr.mxu0 %v2921
  %2955 = vmatpush1.msra.mxu0 %v2920
  %2956 = vmatprep.subr.mxu0 %v2919
  %2957 = vmatpush1.msra.mxu0 %v2918
  %2958 = vmatprep.subr.mxu0 %v2917
  %2959 = vmatpush1.msra.mxu0 %v2916
  %2960 = vmatprep.subr.mxu0 %v2915
  %2961 = vmatpush1.msra.mxu0 %v2914
  %2962 = vmatprep.subr.mxu0 %v2913
  %2963 = vmatpush1.msra.mxu0 %v2912
  %2964 = vmatprep.subr.mxu0 %v2911
  %2965 = vmatpush1.msra.mxu0 %v2910
  %2966 = vmatprep.subr.mxu0 %v2909
  %2967 = vmatpush1.msra.mxu0 %v2908
  %2968 = vmatprep.subr.mxu0 %v2907
  %2969 = vmatpush1.msra.mxu0 %v2906
  %2970 = vmatprep.subr.mxu0 0.0
  %2971 = vmatpush2.msra.mxu0 0.0
  %2972 = vmatprep.subr.mxu0 0.0
  %2973 = vmatpush2.msra.mxu0 0.0
  %2974 = vmatprep.subr.mxu0 0.0
  %2975 = vmatpush2.msra.mxu0 0.0
  %2976 = vmatprep.subr.mxu0 0.0
  %2977 = vmatpush2.msra.mxu0 0.0
  %2978 = vmatprep.subr.mxu0 0.0
  %2979 = vmatpush2.msra.mxu0 0.0
  %2980 = vmatprep.subr.mxu0 0.0
  %2981 = vmatpush2.msra.mxu0 0.0
  %2982 = vmatprep.subr.mxu0 0.0
  %2983 = vmatpush2.msra.mxu0 0.0
  %2984 = vmatprep.subr.mxu0 0.0
  %2985 = vmatpush2.msra.mxu0 0.0
  %2986 = vmatprep.subr.mxu0 0.0
  %2987 = vmatpush2.msra.mxu0 0.0
  %2988 = vmatprep.subr.mxu0 0.0
  %2989 = vmatpush2.msra.mxu0 0.0
  %2990 = vmatprep.subr.mxu0 0.0
  %2991 = vmatpush2.msra.mxu0 0.0
  %2992 = vmatprep.subr.mxu0 0.0
  %2993 = vmatpush2.msra.mxu0 0.0
  %2994 = vmatprep.subr.mxu0 0.0
  %2995 = vmatpush2.msra.mxu0 0.0
  %2996 = vmatprep.subr.mxu0 0.0
  %2997 = vmatpush2.msra.mxu0 0.0
  %2998 = vmatprep.subr.mxu0 0.0
  %2999 = vmatpush2.msra.mxu0 0.0
  %3000 = vmatprep.subr.mxu0 0.0
  %3001 = vmatpush2.msra.mxu0 0.0
  %3002 = vmatprep.mubr.f32.mxu0 0.0
  %3003 = vmatmul.mubr.f32.gmra.mxu0 %v2889
  %v3004 = vpop.f32.mrf.mxu0
  %v3005 = vadd.f32 0.0, %v3004
  %v3006 = vpop.f32.mrf.mxu0
  %v3007 = vadd.f32 0.0, %v3006
  %3008 = vmatprep.mubr.f32.mxu0 0.0
  %3009 = vmatmul.mubr.f32.gmra.mxu0 %v2890
  %v3010 = vpop.f32.mrf.mxu0
  %v3011 = vadd.f32 0.0, %v3010
  %v3012 = vpop.f32.mrf.mxu0
  %v3013 = vadd.f32 0.0, %v3012
  %3014 = vmatprep.mubr.f32.mxu0 0.0
  %3015 = vmatmul.mubr.f32.gmra.mxu0 %v2891
  %v3016 = vpop.f32.mrf.mxu0
  %v3017 = vadd.f32 0.0, %v3016
  %v3018 = vpop.f32.mrf.mxu0
  %v3019 = vadd.f32 0.0, %v3018
  %3020 = vmatprep.mubr.f32.mxu0 0.0
  %3021 = vmatmul.mubr.f32.gmra.mxu0 %v2892
  %v3022 = vpop.f32.mrf.mxu0
  %v3023 = vadd.f32 0.0, %v3022
  %v3024 = vpop.f32.mrf.mxu0
  %v3025 = vadd.f32 0.0, %v3024
  %3026 = vmatprep.mubr.f32.mxu0 0.0
  %3027 = vmatmul.mubr.f32.gmra.mxu0 %v2893
  %v3028 = vpop.f32.mrf.mxu0
  %v3029 = vadd.f32 0.0, %v3028
  %v3030 = vpop.f32.mrf.mxu0
  %v3031 = vadd.f32 0.0, %v3030
  %3032 = vmatprep.mubr.f32.mxu0 0.0
  %3033 = vmatmul.mubr.f32.gmra.mxu0 %v2894
  %v3034 = vpop.f32.mrf.mxu0
  %v3035 = vadd.f32 0.0, %v3034
  %v3036 = vpop.f32.mrf.mxu0
  %v3037 = vadd.f32 0.0, %v3036
  %3038 = vmatprep.mubr.f32.mxu0 0.0
  %3039 = vmatmul.mubr.f32.gmra.mxu0 %v2895
  %v3040 = vpop.f32.mrf.mxu0
  %v3041 = vadd.f32 0.0, %v3040
  %v3042 = vpop.f32.mrf.mxu0
  %v3043 = vadd.f32 0.0, %v3042
  %3044 = vmatprep.mubr.f32.mxu0 0.0
  %3045 = vmatmul.mubr.f32.gmra.mxu0 %v2896
  %v3046 = vpop.f32.mrf.mxu0
  %v3047 = vadd.f32 0.0, %v3046
  %v3048 = vpop.f32.mrf.mxu0
  %v3049 = vadd.f32 0.0, %v3048
  %3050 = vmatprep.mubr.f32.mxu0 0.0
  %3051 = vmatmul.mubr.f32.gmra.mxu0 %v2897
  %v3052 = vpop.f32.mrf.mxu0
  %v3053 = vadd.f32 0.0, %v3052
  %v3054 = vpop.f32.mrf.mxu0
  %v3055 = vadd.f32 0.0, %v3054
  %3056 = vmatprep.mubr.f32.mxu0 0.0
  %3057 = vmatmul.mubr.f32.gmra.mxu0 %v2898
  %v3058 = vpop.f32.mrf.mxu0
  %v3059 = vadd.f32 0.0, %v3058
  %v3060 = vpop.f32.mrf.mxu0
  %v3061 = vadd.f32 0.0, %v3060
  %3062 = vmatprep.mubr.f32.mxu0 0.0
  %3063 = vmatmul.mubr.f32.gmra.mxu0 %v2899
  %v3064 = vpop.f32.mrf.mxu0
  %v3065 = vadd.f32 0.0, %v3064
  %v3066 = vpop.f32.mrf.mxu0
  %v3067 = vadd.f32 0.0, %v3066
  %3068 = vmatprep.mubr.f32.mxu0 0.0
  %3069 = vmatmul.mubr.f32.gmra.mxu0 %v2900
  %v3070 = vpop.f32.mrf.mxu0
  %v3071 = vadd.f32 0.0, %v3070
  %v3072 = vpop.f32.mrf.mxu0
  %v3073 = vadd.f32 0.0, %v3072
  %3074 = vmatprep.mubr.f32.mxu0 0.0
  %3075 = vmatmul.mubr.f32.gmra.mxu0 %v2901
  %v3076 = vpop.f32.mrf.mxu0
  %v3077 = vadd.f32 0.0, %v3076
  %v3078 = vpop.f32.mrf.mxu0
  %v3079 = vadd.f32 0.0, %v3078
  %3080 = vmatprep.mubr.f32.mxu0 0.0
  %3081 = vmatmul.mubr.f32.gmra.mxu0 %v2902
  %v3082 = vpop.f32.mrf.mxu0
  %v3083 = vadd.f32 0.0, %v3082
  %v3084 = vpop.f32.mrf.mxu0
  %v3085 = vadd.f32 0.0, %v3084
  %3086 = vmatprep.mubr.f32.mxu0 0.0
  %3087 = vmatmul.mubr.f32.gmra.mxu0 %v2903
  %v3088 = vpop.f32.mrf.mxu0
  %v3089 = vadd.f32 0.0, %v3088
  %v3090 = vpop.f32.mrf.mxu0
  %v3091 = vadd.f32 0.0, %v3090
  %3092 = vmatprep.mubr.f32.mxu0 0.0
  %3093 = vmatmul.mubr.f32.gmra.mxu0 %v2904
  %v3094 = vpop.f32.mrf.mxu0
  %v3095 = vadd.f32 0.0, %v3094
  %v3096 = vpop.f32.mrf.mxu0
  %v3097 = vadd.f32 0.0, %v3096
  %3098 = vdwg.mxu0
  %v3099 = vadd.f32 %v2857, %v3005
  %v3100 = vadd.f32 %v2858, %v3007
  %v3101 = vadd.f32 %v2859, %v3011
  %v3102 = vadd.f32 %v2860, %v3013
  %v3103 = vadd.f32 %v2861, %v3017
  %v3104 = vadd.f32 %v2862, %v3019
  %v3105 = vadd.f32 %v2863, %v3023
  %v3106 = vadd.f32 %v2864, %v3025
  %v3107 = vadd.f32 %v2865, %v3029
  %v3108 = vadd.f32 %v2866, %v3031
  %v3109 = vadd.f32 %v2867, %v3035
  %v3110 = vadd.f32 %v2868, %v3037
  %v3111 = vadd.f32 %v2869, %v3041
  %v3112 = vadd.f32 %v2870, %v3043
  %v3113 = vadd.f32 %v2871, %v3047
  %v3114 = vadd.f32 %v2872, %v3049
  %v3115 = vadd.f32 %v2873, %v3053
  %v3116 = vadd.f32 %v2874, %v3055
  %v3117 = vadd.f32 %v2875, %v3059
  %v3118 = vadd.f32 %v2876, %v3061
  %v3119 = vadd.f32 %v2877, %v3065
  %v3120 = vadd.f32 %v2878, %v3067
  %v3121 = vadd.f32 %v2879, %v3071
  %v3122 = vadd.f32 %v2880, %v3073
  %v3123 = vadd.f32 %v2881, %v3077
  %v3124 = vadd.f32 %v2882, %v3079
  %v3125 = vadd.f32 %v2883, %v3083
  %v3126 = vadd.f32 %v2884, %v3085
  %v3127 = vadd.f32 %v2885, %v3089
  %v3128 = vadd.f32 %v2886, %v3091
  %v3129 = vadd.f32 %v2887, %v3095
  %v3130 = vadd.f32 %v2888, %v3097
  %v3131 = vld [vmem:[#allocation3 + $0x3] sm:$0xff]
  %v3132 = vld [vmem:[#allocation3 + $0xb] sm:$0xff]
  %v3133 = vld [vmem:[#allocation3 + $0x13] sm:$0xff]
  %v3134 = vld [vmem:[#allocation3 + $0x1b] sm:$0xff]
  %v3135 = vld [vmem:[#allocation3 + $0x23] sm:$0xff]
  %v3136 = vld [vmem:[#allocation3 + $0x2b] sm:$0xff]
  %v3137 = vld [vmem:[#allocation3 + $0x33] sm:$0xff]
  %v3138 = vld [vmem:[#allocation3 + $0x3b] sm:$0xff]
  %v3139 = vld [vmem:[#allocation3 + $0x43] sm:$0xff]
  %v3140 = vld [vmem:[#allocation3 + $0x4b] sm:$0xff]
  %v3141 = vld [vmem:[#allocation3 + $0x53] sm:$0xff]
  %v3142 = vld [vmem:[#allocation3 + $0x5b] sm:$0xff]
  %v3143 = vld [vmem:[#allocation3 + $0x63] sm:$0xff]
  %v3144 = vld [vmem:[#allocation3 + $0x6b] sm:$0xff]
  %v3145 = vld [vmem:[#allocation3 + $0x73] sm:$0xff]
  %v3146 = vld [vmem:[#allocation3 + $0x7b] sm:$0xff]
  %s3147 = scalar_lea.vmem %s3, 768
  %v3148 = vld [vmem:[%s3147] sm:$0xff]
  %v3149 = vld [vmem:[%s3147 + $0x8] sm:$0xff]
  %v3150 = vld [vmem:[%s3147 + $0x10] sm:$0xff]
  %v3151 = vld [vmem:[%s3147 + $0x18] sm:$0xff]
  %v3152 = vld [vmem:[%s3147 + $0x20] sm:$0xff]
  %v3153 = vld [vmem:[%s3147 + $0x28] sm:$0xff]
  %v3154 = vld [vmem:[%s3147 + $0x30] sm:$0xff]
  %v3155 = vld [vmem:[%s3147 + $0x38] sm:$0xff]
  %v3156 = vld [vmem:[%s3147 + $0x40] sm:$0xff]
  %v3157 = vld [vmem:[%s3147 + $0x48] sm:$0xff]
  %v3158 = vld [vmem:[%s3147 + $0x50] sm:$0xff]
  %v3159 = vld [vmem:[%s3147 + $0x58] sm:$0xff]
  %v3160 = vld [vmem:[%s3147 + $0x60] sm:$0xff]
  %v3161 = vld [vmem:[%s3147 + $0x68] sm:$0xff]
  %v3162 = vld [vmem:[%s3147 + $0x70] sm:$0xff]
  %v3163 = vld [vmem:[%s3147 + $0x78] sm:$0xff]
  %v3164 = vld [vmem:[%s3147 + $0x80] sm:$0xff]
  %v3165 = vld [vmem:[%s3147 + $0x88] sm:$0xff]
  %v3166 = vld [vmem:[%s3147 + $0x90] sm:$0xff]
  %v3167 = vld [vmem:[%s3147 + $0x98] sm:$0xff]
  %v3168 = vld [vmem:[%s3147 + $0xa0] sm:$0xff]
  %v3169 = vld [vmem:[%s3147 + $0xa8] sm:$0xff]
  %v3170 = vld [vmem:[%s3147 + $0xb0] sm:$0xff]
  %v3171 = vld [vmem:[%s3147 + $0xb8] sm:$0xff]
  %v3172 = vld [vmem:[%s3147 + $0xc0] sm:$0xff]
  %v3173 = vld [vmem:[%s3147 + $0xc8] sm:$0xff]
  %v3174 = vld [vmem:[%s3147 + $0xd0] sm:$0xff]
  %v3175 = vld [vmem:[%s3147 + $0xd8] sm:$0xff]
  %v3176 = vld [vmem:[%s3147 + $0xe0] sm:$0xff]
  %v3177 = vld [vmem:[%s3147 + $0xe8] sm:$0xff]
  %v3178 = vld [vmem:[%s3147 + $0xf0] sm:$0xff]
  %v3179 = vld [vmem:[%s3147 + $0xf8] sm:$0xff]
  %3180 = vmatprep.subr.mxu0 %v3179
  %3181 = vmatpush1.msra.mxu0 %v3178
  %3182 = vmatprep.subr.mxu0 %v3177
  %3183 = vmatpush1.msra.mxu0 %v3176
  %3184 = vmatprep.subr.mxu0 %v3175
  %3185 = vmatpush1.msra.mxu0 %v3174
  %3186 = vmatprep.subr.mxu0 %v3173
  %3187 = vmatpush1.msra.mxu0 %v3172
  %3188 = vmatprep.subr.mxu0 %v3171
  %3189 = vmatpush1.msra.mxu0 %v3170
  %3190 = vmatprep.subr.mxu0 %v3169
  %3191 = vmatpush1.msra.mxu0 %v3168
  %3192 = vmatprep.subr.mxu0 %v3167
  %3193 = vmatpush1.msra.mxu0 %v3166
  %3194 = vmatprep.subr.mxu0 %v3165
  %3195 = vmatpush1.msra.mxu0 %v3164
  %3196 = vmatprep.subr.mxu0 %v3163
  %3197 = vmatpush1.msra.mxu0 %v3162
  %3198 = vmatprep.subr.mxu0 %v3161
  %3199 = vmatpush1.msra.mxu0 %v3160
  %3200 = vmatprep.subr.mxu0 %v3159
  %3201 = vmatpush1.msra.mxu0 %v3158
  %3202 = vmatprep.subr.mxu0 %v3157
  %3203 = vmatpush1.msra.mxu0 %v3156
  %3204 = vmatprep.subr.mxu0 %v3155
  %3205 = vmatpush1.msra.mxu0 %v3154
  %3206 = vmatprep.subr.mxu0 %v3153
  %3207 = vmatpush1.msra.mxu0 %v3152
  %3208 = vmatprep.subr.mxu0 %v3151
  %3209 = vmatpush1.msra.mxu0 %v3150
  %3210 = vmatprep.subr.mxu0 %v3149
  %3211 = vmatpush1.msra.mxu0 %v3148
  %3212 = vmatprep.subr.mxu0 0.0
  %3213 = vmatpush2.msra.mxu0 0.0
  %3214 = vmatprep.subr.mxu0 0.0
  %3215 = vmatpush2.msra.mxu0 0.0
  %3216 = vmatprep.subr.mxu0 0.0
  %3217 = vmatpush2.msra.mxu0 0.0
  %3218 = vmatprep.subr.mxu0 0.0
  %3219 = vmatpush2.msra.mxu0 0.0
  %3220 = vmatprep.subr.mxu0 0.0
  %3221 = vmatpush2.msra.mxu0 0.0
  %3222 = vmatprep.subr.mxu0 0.0
  %3223 = vmatpush2.msra.mxu0 0.0
  %3224 = vmatprep.subr.mxu0 0.0
  %3225 = vmatpush2.msra.mxu0 0.0
  %3226 = vmatprep.subr.mxu0 0.0
  %3227 = vmatpush2.msra.mxu0 0.0
  %3228 = vmatprep.subr.mxu0 0.0
  %3229 = vmatpush2.msra.mxu0 0.0
  %3230 = vmatprep.subr.mxu0 0.0
  %3231 = vmatpush2.msra.mxu0 0.0
  %3232 = vmatprep.subr.mxu0 0.0
  %3233 = vmatpush2.msra.mxu0 0.0
  %3234 = vmatprep.subr.mxu0 0.0
  %3235 = vmatpush2.msra.mxu0 0.0
  %3236 = vmatprep.subr.mxu0 0.0
  %3237 = vmatpush2.msra.mxu0 0.0
  %3238 = vmatprep.subr.mxu0 0.0
  %3239 = vmatpush2.msra.mxu0 0.0
  %3240 = vmatprep.subr.mxu0 0.0
  %3241 = vmatpush2.msra.mxu0 0.0
  %3242 = vmatprep.subr.mxu0 0.0
  %3243 = vmatpush2.msra.mxu0 0.0
  %3244 = vmatprep.mubr.f32.mxu0 0.0
  %3245 = vmatmul.mubr.f32.gmra.mxu0 %v3131
  %v3246 = vpop.f32.mrf.mxu0
  %v3247 = vadd.f32 0.0, %v3246
  %v3248 = vpop.f32.mrf.mxu0
  %v3249 = vadd.f32 0.0, %v3248
  %3250 = vmatprep.mubr.f32.mxu0 0.0
  %3251 = vmatmul.mubr.f32.gmra.mxu0 %v3132
  %v3252 = vpop.f32.mrf.mxu0
  %v3253 = vadd.f32 0.0, %v3252
  %v3254 = vpop.f32.mrf.mxu0
  %v3255 = vadd.f32 0.0, %v3254
  %3256 = vmatprep.mubr.f32.mxu0 0.0
  %3257 = vmatmul.mubr.f32.gmra.mxu0 %v3133
  %v3258 = vpop.f32.mrf.mxu0
  %v3259 = vadd.f32 0.0, %v3258
  %v3260 = vpop.f32.mrf.mxu0
  %v3261 = vadd.f32 0.0, %v3260
  %3262 = vmatprep.mubr.f32.mxu0 0.0
  %3263 = vmatmul.mubr.f32.gmra.mxu0 %v3134
  %v3264 = vpop.f32.mrf.mxu0
  %v3265 = vadd.f32 0.0, %v3264
  %v3266 = vpop.f32.mrf.mxu0
  %v3267 = vadd.f32 0.0, %v3266
  %3268 = vmatprep.mubr.f32.mxu0 0.0
  %3269 = vmatmul.mubr.f32.gmra.mxu0 %v3135
  %v3270 = vpop.f32.mrf.mxu0
  %v3271 = vadd.f32 0.0, %v3270
  %v3272 = vpop.f32.mrf.mxu0
  %v3273 = vadd.f32 0.0, %v3272
  %3274 = vmatprep.mubr.f32.mxu0 0.0
  %3275 = vmatmul.mubr.f32.gmra.mxu0 %v3136
  %v3276 = vpop.f32.mrf.mxu0
  %v3277 = vadd.f32 0.0, %v3276
  %v3278 = vpop.f32.mrf.mxu0
  %v3279 = vadd.f32 0.0, %v3278
  %3280 = vmatprep.mubr.f32.mxu0 0.0
  %3281 = vmatmul.mubr.f32.gmra.mxu0 %v3137
  %v3282 = vpop.f32.mrf.mxu0
  %v3283 = vadd.f32 0.0, %v3282
  %v3284 = vpop.f32.mrf.mxu0
  %v3285 = vadd.f32 0.0, %v3284
  %3286 = vmatprep.mubr.f32.mxu0 0.0
  %3287 = vmatmul.mubr.f32.gmra.mxu0 %v3138
  %v3288 = vpop.f32.mrf.mxu0
  %v3289 = vadd.f32 0.0, %v3288
  %v3290 = vpop.f32.mrf.mxu0
  %v3291 = vadd.f32 0.0, %v3290
  %3292 = vmatprep.mubr.f32.mxu0 0.0
  %3293 = vmatmul.mubr.f32.gmra.mxu0 %v3139
  %v3294 = vpop.f32.mrf.mxu0
  %v3295 = vadd.f32 0.0, %v3294
  %v3296 = vpop.f32.mrf.mxu0
  %v3297 = vadd.f32 0.0, %v3296
  %3298 = vmatprep.mubr.f32.mxu0 0.0
  %3299 = vmatmul.mubr.f32.gmra.mxu0 %v3140
  %v3300 = vpop.f32.mrf.mxu0
  %v3301 = vadd.f32 0.0, %v3300
  %v3302 = vpop.f32.mrf.mxu0
  %v3303 = vadd.f32 0.0, %v3302
  %3304 = vmatprep.mubr.f32.mxu0 0.0
  %3305 = vmatmul.mubr.f32.gmra.mxu0 %v3141
  %v3306 = vpop.f32.mrf.mxu0
  %v3307 = vadd.f32 0.0, %v3306
  %v3308 = vpop.f32.mrf.mxu0
  %v3309 = vadd.f32 0.0, %v3308
  %3310 = vmatprep.mubr.f32.mxu0 0.0
  %3311 = vmatmul.mubr.f32.gmra.mxu0 %v3142
  %v3312 = vpop.f32.mrf.mxu0
  %v3313 = vadd.f32 0.0, %v3312
  %v3314 = vpop.f32.mrf.mxu0
  %v3315 = vadd.f32 0.0, %v3314
  %3316 = vmatprep.mubr.f32.mxu0 0.0
  %3317 = vmatmul.mubr.f32.gmra.mxu0 %v3143
  %v3318 = vpop.f32.mrf.mxu0
  %v3319 = vadd.f32 0.0, %v3318
  %v3320 = vpop.f32.mrf.mxu0
  %v3321 = vadd.f32 0.0, %v3320
  %3322 = vmatprep.mubr.f32.mxu0 0.0
  %3323 = vmatmul.mubr.f32.gmra.mxu0 %v3144
  %v3324 = vpop.f32.mrf.mxu0
  %v3325 = vadd.f32 0.0, %v3324
  %v3326 = vpop.f32.mrf.mxu0
  %v3327 = vadd.f32 0.0, %v3326
  %3328 = vmatprep.mubr.f32.mxu0 0.0
  %3329 = vmatmul.mubr.f32.gmra.mxu0 %v3145
  %v3330 = vpop.f32.mrf.mxu0
  %v3331 = vadd.f32 0.0, %v3330
  %v3332 = vpop.f32.mrf.mxu0
  %v3333 = vadd.f32 0.0, %v3332
  %3334 = vmatprep.mubr.f32.mxu0 0.0
  %3335 = vmatmul.mubr.f32.gmra.mxu0 %v3146
  %v3336 = vpop.f32.mrf.mxu0
  %v3337 = vadd.f32 0.0, %v3336
  %v3338 = vpop.f32.mrf.mxu0
  %v3339 = vadd.f32 0.0, %v3338
  %3340 = vdwg.mxu0
  %v3341 = vadd.f32 %v3099, %v3247
  %v3342 = vadd.f32 %v3100, %v3249
  %v3343 = vadd.f32 %v3101, %v3253
  %v3344 = vadd.f32 %v3102, %v3255
  %v3345 = vadd.f32 %v3103, %v3259
  %v3346 = vadd.f32 %v3104, %v3261
  %v3347 = vadd.f32 %v3105, %v3265
  %v3348 = vadd.f32 %v3106, %v3267
  %v3349 = vadd.f32 %v3107, %v3271
  %v3350 = vadd.f32 %v3108, %v3273
  %v3351 = vadd.f32 %v3109, %v3277
  %v3352 = vadd.f32 %v3110, %v3279
  %v3353 = vadd.f32 %v3111, %v3283
  %v3354 = vadd.f32 %v3112, %v3285
  %v3355 = vadd.f32 %v3113, %v3289
  %v3356 = vadd.f32 %v3114, %v3291
  %v3357 = vadd.f32 %v3115, %v3295
  %v3358 = vadd.f32 %v3116, %v3297
  %v3359 = vadd.f32 %v3117, %v3301
  %v3360 = vadd.f32 %v3118, %v3303
  %v3361 = vadd.f32 %v3119, %v3307
  %v3362 = vadd.f32 %v3120, %v3309
  %v3363 = vadd.f32 %v3121, %v3313
  %v3364 = vadd.f32 %v3122, %v3315
  %v3365 = vadd.f32 %v3123, %v3319
  %v3366 = vadd.f32 %v3124, %v3321
  %v3367 = vadd.f32 %v3125, %v3325
  %v3368 = vadd.f32 %v3126, %v3327
  %v3369 = vadd.f32 %v3127, %v3331
  %v3370 = vadd.f32 %v3128, %v3333
  %v3371 = vadd.f32 %v3129, %v3337
  %v3372 = vadd.f32 %v3130, %v3339
  %v3373 = vld [vmem:[#allocation3 + $0x4] sm:$0xff]
  %v3374 = vld [vmem:[#allocation3 + $0xc] sm:$0xff]
  %v3375 = vld [vmem:[#allocation3 + $0x14] sm:$0xff]
  %v3376 = vld [vmem:[#allocation3 + $0x1c] sm:$0xff]
  %v3377 = vld [vmem:[#allocation3 + $0x24] sm:$0xff]
  %v3378 = vld [vmem:[#allocation3 + $0x2c] sm:$0xff]
  %v3379 = vld [vmem:[#allocation3 + $0x34] sm:$0xff]
  %v3380 = vld [vmem:[#allocation3 + $0x3c] sm:$0xff]
  %v3381 = vld [vmem:[#allocation3 + $0x44] sm:$0xff]
  %v3382 = vld [vmem:[#allocation3 + $0x4c] sm:$0xff]
  %v3383 = vld [vmem:[#allocation3 + $0x54] sm:$0xff]
  %v3384 = vld [vmem:[#allocation3 + $0x5c] sm:$0xff]
  %v3385 = vld [vmem:[#allocation3 + $0x64] sm:$0xff]
  %v3386 = vld [vmem:[#allocation3 + $0x6c] sm:$0xff]
  %v3387 = vld [vmem:[#allocation3 + $0x74] sm:$0xff]
  %v3388 = vld [vmem:[#allocation3 + $0x7c] sm:$0xff]
  %s3389 = scalar_lea.vmem %s3, 1024
  %v3390 = vld [vmem:[%s3389] sm:$0xff]
  %v3391 = vld [vmem:[%s3389 + $0x8] sm:$0xff]
  %v3392 = vld [vmem:[%s3389 + $0x10] sm:$0xff]
  %v3393 = vld [vmem:[%s3389 + $0x18] sm:$0xff]
  %v3394 = vld [vmem:[%s3389 + $0x20] sm:$0xff]
  %v3395 = vld [vmem:[%s3389 + $0x28] sm:$0xff]
  %v3396 = vld [vmem:[%s3389 + $0x30] sm:$0xff]
  %v3397 = vld [vmem:[%s3389 + $0x38] sm:$0xff]
  %v3398 = vld [vmem:[%s3389 + $0x40] sm:$0xff]
  %v3399 = vld [vmem:[%s3389 + $0x48] sm:$0xff]
  %v3400 = vld [vmem:[%s3389 + $0x50] sm:$0xff]
  %v3401 = vld [vmem:[%s3389 + $0x58] sm:$0xff]
  %v3402 = vld [vmem:[%s3389 + $0x60] sm:$0xff]
  %v3403 = vld [vmem:[%s3389 + $0x68] sm:$0xff]
  %v3404 = vld [vmem:[%s3389 + $0x70] sm:$0xff]
  %v3405 = vld [vmem:[%s3389 + $0x78] sm:$0xff]
  %v3406 = vld [vmem:[%s3389 + $0x80] sm:$0xff]
  %v3407 = vld [vmem:[%s3389 + $0x88] sm:$0xff]
  %v3408 = vld [vmem:[%s3389 + $0x90] sm:$0xff]
  %v3409 = vld [vmem:[%s3389 + $0x98] sm:$0xff]
  %v3410 = vld [vmem:[%s3389 + $0xa0] sm:$0xff]
  %v3411 = vld [vmem:[%s3389 + $0xa8] sm:$0xff]
  %v3412 = vld [vmem:[%s3389 + $0xb0] sm:$0xff]
  %v3413 = vld [vmem:[%s3389 + $0xb8] sm:$0xff]
  %v3414 = vld [vmem:[%s3389 + $0xc0] sm:$0xff]
  %v3415 = vld [vmem:[%s3389 + $0xc8] sm:$0xff]
  %v3416 = vld [vmem:[%s3389 + $0xd0] sm:$0xff]
  %v3417 = vld [vmem:[%s3389 + $0xd8] sm:$0xff]
  %v3418 = vld [vmem:[%s3389 + $0xe0] sm:$0xff]
  %v3419 = vld [vmem:[%s3389 + $0xe8] sm:$0xff]
  %v3420 = vld [vmem:[%s3389 + $0xf0] sm:$0xff]
  %v3421 = vld [vmem:[%s3389 + $0xf8] sm:$0xff]
  %3422 = vmatprep.subr.mxu0 %v3421
  %3423 = vmatpush1.msra.mxu0 %v3420
  %3424 = vmatprep.subr.mxu0 %v3419
  %3425 = vmatpush1.msra.mxu0 %v3418
  %3426 = vmatprep.subr.mxu0 %v3417
  %3427 = vmatpush1.msra.mxu0 %v3416
  %3428 = vmatprep.subr.mxu0 %v3415
  %3429 = vmatpush1.msra.mxu0 %v3414
  %3430 = vmatprep.subr.mxu0 %v3413
  %3431 = vmatpush1.msra.mxu0 %v3412
  %3432 = vmatprep.subr.mxu0 %v3411
  %3433 = vmatpush1.msra.mxu0 %v3410
  %3434 = vmatprep.subr.mxu0 %v3409
  %3435 = vmatpush1.msra.mxu0 %v3408
  %3436 = vmatprep.subr.mxu0 %v3407
  %3437 = vmatpush1.msra.mxu0 %v3406
  %3438 = vmatprep.subr.mxu0 %v3405
  %3439 = vmatpush1.msra.mxu0 %v3404
  %3440 = vmatprep.subr.mxu0 %v3403
  %3441 = vmatpush1.msra.mxu0 %v3402
  %3442 = vmatprep.subr.mxu0 %v3401
  %3443 = vmatpush1.msra.mxu0 %v3400
  %3444 = vmatprep.subr.mxu0 %v3399
  %3445 = vmatpush1.msra.mxu0 %v3398
  %3446 = vmatprep.subr.mxu0 %v3397
  %3447 = vmatpush1.msra.mxu0 %v3396
  %3448 = vmatprep.subr.mxu0 %v3395
  %3449 = vmatpush1.msra.mxu0 %v3394
  %3450 = vmatprep.subr.mxu0 %v3393
  %3451 = vmatpush1.msra.mxu0 %v3392
  %3452 = vmatprep.subr.mxu0 %v3391
  %3453 = vmatpush1.msra.mxu0 %v3390
  %3454 = vmatprep.subr.mxu0 0.0
  %3455 = vmatpush2.msra.mxu0 0.0
  %3456 = vmatprep.subr.mxu0 0.0
  %3457 = vmatpush2.msra.mxu0 0.0
  %3458 = vmatprep.subr.mxu0 0.0
  %3459 = vmatpush2.msra.mxu0 0.0
  %3460 = vmatprep.subr.mxu0 0.0
  %3461 = vmatpush2.msra.mxu0 0.0
  %3462 = vmatprep.subr.mxu0 0.0
  %3463 = vmatpush2.msra.mxu0 0.0
  %3464 = vmatprep.subr.mxu0 0.0
  %3465 = vmatpush2.msra.mxu0 0.0
  %3466 = vmatprep.subr.mxu0 0.0
  %3467 = vmatpush2.msra.mxu0 0.0
  %3468 = vmatprep.subr.mxu0 0.0
  %3469 = vmatpush2.msra.mxu0 0.0
  %3470 = vmatprep.subr.mxu0 0.0
  %3471 = vmatpush2.msra.mxu0 0.0
  %3472 = vmatprep.subr.mxu0 0.0
  %3473 = vmatpush2.msra.mxu0 0.0
  %3474 = vmatprep.subr.mxu0 0.0
  %3475 = vmatpush2.msra.mxu0 0.0
  %3476 = vmatprep.subr.mxu0 0.0
  %3477 = vmatpush2.msra.mxu0 0.0
  %3478 = vmatprep.subr.mxu0 0.0
  %3479 = vmatpush2.msra.mxu0 0.0
  %3480 = vmatprep.subr.mxu0 0.0
  %3481 = vmatpush2.msra.mxu0 0.0
  %3482 = vmatprep.subr.mxu0 0.0
  %3483 = vmatpush2.msra.mxu0 0.0
  %3484 = vmatprep.subr.mxu0 0.0
  %3485 = vmatpush2.msra.mxu0 0.0
  %3486 = vmatprep.mubr.f32.mxu0 0.0
  %3487 = vmatmul.mubr.f32.gmra.mxu0 %v3373
  %v3488 = vpop.f32.mrf.mxu0
  %v3489 = vadd.f32 0.0, %v3488
  %v3490 = vpop.f32.mrf.mxu0
  %v3491 = vadd.f32 0.0, %v3490
  %3492 = vmatprep.mubr.f32.mxu0 0.0
  %3493 = vmatmul.mubr.f32.gmra.mxu0 %v3374
  %v3494 = vpop.f32.mrf.mxu0
  %v3495 = vadd.f32 0.0, %v3494
  %v3496 = vpop.f32.mrf.mxu0
  %v3497 = vadd.f32 0.0, %v3496
  %3498 = vmatprep.mubr.f32.mxu0 0.0
  %3499 = vmatmul.mubr.f32.gmra.mxu0 %v3375
  %v3500 = vpop.f32.mrf.mxu0
  %v3501 = vadd.f32 0.0, %v3500
  %v3502 = vpop.f32.mrf.mxu0
  %v3503 = vadd.f32 0.0, %v3502
  %3504 = vmatprep.mubr.f32.mxu0 0.0
  %3505 = vmatmul.mubr.f32.gmra.mxu0 %v3376
  %v3506 = vpop.f32.mrf.mxu0
  %v3507 = vadd.f32 0.0, %v3506
  %v3508 = vpop.f32.mrf.mxu0
  %v3509 = vadd.f32 0.0, %v3508
  %3510 = vmatprep.mubr.f32.mxu0 0.0
  %3511 = vmatmul.mubr.f32.gmra.mxu0 %v3377
  %v3512 = vpop.f32.mrf.mxu0
  %v3513 = vadd.f32 0.0, %v3512
  %v3514 = vpop.f32.mrf.mxu0
  %v3515 = vadd.f32 0.0, %v3514
  %3516 = vmatprep.mubr.f32.mxu0 0.0
  %3517 = vmatmul.mubr.f32.gmra.mxu0 %v3378
  %v3518 = vpop.f32.mrf.mxu0
  %v3519 = vadd.f32 0.0, %v3518
  %v3520 = vpop.f32.mrf.mxu0
  %v3521 = vadd.f32 0.0, %v3520
  %3522 = vmatprep.mubr.f32.mxu0 0.0
  %3523 = vmatmul.mubr.f32.gmra.mxu0 %v3379
  %v3524 = vpop.f32.mrf.mxu0
  %v3525 = vadd.f32 0.0, %v3524
  %v3526 = vpop.f32.mrf.mxu0
  %v3527 = vadd.f32 0.0, %v3526
  %3528 = vmatprep.mubr.f32.mxu0 0.0
  %3529 = vmatmul.mubr.f32.gmra.mxu0 %v3380
  %v3530 = vpop.f32.mrf.mxu0
  %v3531 = vadd.f32 0.0, %v3530
  %v3532 = vpop.f32.mrf.mxu0
  %v3533 = vadd.f32 0.0, %v3532
  %3534 = vmatprep.mubr.f32.mxu0 0.0
  %3535 = vmatmul.mubr.f32.gmra.mxu0 %v3381
  %v3536 = vpop.f32.mrf.mxu0
  %v3537 = vadd.f32 0.0, %v3536
  %v3538 = vpop.f32.mrf.mxu0
  %v3539 = vadd.f32 0.0, %v3538
  %3540 = vmatprep.mubr.f32.mxu0 0.0
  %3541 = vmatmul.mubr.f32.gmra.mxu0 %v3382
  %v3542 = vpop.f32.mrf.mxu0
  %v3543 = vadd.f32 0.0, %v3542
  %v3544 = vpop.f32.mrf.mxu0
  %v3545 = vadd.f32 0.0, %v3544
  %3546 = vmatprep.mubr.f32.mxu0 0.0
  %3547 = vmatmul.mubr.f32.gmra.mxu0 %v3383
  %v3548 = vpop.f32.mrf.mxu0
  %v3549 = vadd.f32 0.0, %v3548
  %v3550 = vpop.f32.mrf.mxu0
  %v3551 = vadd.f32 0.0, %v3550
  %3552 = vmatprep.mubr.f32.mxu0 0.0
  %3553 = vmatmul.mubr.f32.gmra.mxu0 %v3384
  %v3554 = vpop.f32.mrf.mxu0
  %v3555 = vadd.f32 0.0, %v3554
  %v3556 = vpop.f32.mrf.mxu0
  %v3557 = vadd.f32 0.0, %v3556
  %3558 = vmatprep.mubr.f32.mxu0 0.0
  %3559 = vmatmul.mubr.f32.gmra.mxu0 %v3385
  %v3560 = vpop.f32.mrf.mxu0
  %v3561 = vadd.f32 0.0, %v3560
  %v3562 = vpop.f32.mrf.mxu0
  %v3563 = vadd.f32 0.0, %v3562
  %3564 = vmatprep.mubr.f32.mxu0 0.0
  %3565 = vmatmul.mubr.f32.gmra.mxu0 %v3386
  %v3566 = vpop.f32.mrf.mxu0
  %v3567 = vadd.f32 0.0, %v3566
  %v3568 = vpop.f32.mrf.mxu0
  %v3569 = vadd.f32 0.0, %v3568
  %3570 = vmatprep.mubr.f32.mxu0 0.0
  %3571 = vmatmul.mubr.f32.gmra.mxu0 %v3387
  %v3572 = vpop.f32.mrf.mxu0
  %v3573 = vadd.f32 0.0, %v3572
  %v3574 = vpop.f32.mrf.mxu0
  %v3575 = vadd.f32 0.0, %v3574
  %3576 = vmatprep.mubr.f32.mxu0 0.0
  %3577 = vmatmul.mubr.f32.gmra.mxu0 %v3388
  %v3578 = vpop.f32.mrf.mxu0
  %v3579 = vadd.f32 0.0, %v3578
  %v3580 = vpop.f32.mrf.mxu0
  %v3581 = vadd.f32 0.0, %v3580
  %3582 = vdwg.mxu0
  %v3583 = vadd.f32 %v3341, %v3489
  %v3584 = vadd.f32 %v3342, %v3491
  %v3585 = vadd.f32 %v3343, %v3495
  %v3586 = vadd.f32 %v3344, %v3497
  %v3587 = vadd.f32 %v3345, %v3501
  %v3588 = vadd.f32 %v3346, %v3503
  %v3589 = vadd.f32 %v3347, %v3507
  %v3590 = vadd.f32 %v3348, %v3509
  %v3591 = vadd.f32 %v3349, %v3513
  %v3592 = vadd.f32 %v3350, %v3515
  %v3593 = vadd.f32 %v3351, %v3519
  %v3594 = vadd.f32 %v3352, %v3521
  %v3595 = vadd.f32 %v3353, %v3525
  %v3596 = vadd.f32 %v3354, %v3527
  %v3597 = vadd.f32 %v3355, %v3531
  %v3598 = vadd.f32 %v3356, %v3533
  %v3599 = vadd.f32 %v3357, %v3537
  %v3600 = vadd.f32 %v3358, %v3539
  %v3601 = vadd.f32 %v3359, %v3543
  %v3602 = vadd.f32 %v3360, %v3545
  %v3603 = vadd.f32 %v3361, %v3549
  %v3604 = vadd.f32 %v3362, %v3551
  %v3605 = vadd.f32 %v3363, %v3555
  %v3606 = vadd.f32 %v3364, %v3557
  %v3607 = vadd.f32 %v3365, %v3561
  %v3608 = vadd.f32 %v3366, %v3563
  %v3609 = vadd.f32 %v3367, %v3567
  %v3610 = vadd.f32 %v3368, %v3569
  %v3611 = vadd.f32 %v3369, %v3573
  %v3612 = vadd.f32 %v3370, %v3575
  %v3613 = vadd.f32 %v3371, %v3579
  %v3614 = vadd.f32 %v3372, %v3581
  %v3615 = vmax.f32 %v3583, 0.0
  %v3616 = vmax.f32 %v3584, 0.0
  %v3617 = vmax.f32 %v3585, 0.0
  %v3618 = vmax.f32 %v3586, 0.0
  %v3619 = vmax.f32 %v3587, 0.0
  %v3620 = vmax.f32 %v3588, 0.0
  %v3621 = vmax.f32 %v3589, 0.0
  %v3622 = vmax.f32 %v3590, 0.0
  %v3623 = vmax.f32 %v3591, 0.0
  %v3624 = vmax.f32 %v3592, 0.0
  %v3625 = vmax.f32 %v3593, 0.0
  %v3626 = vmax.f32 %v3594, 0.0
  %v3627 = vmax.f32 %v3595, 0.0
  %v3628 = vmax.f32 %v3596, 0.0
  %v3629 = vmax.f32 %v3597, 0.0
  %v3630 = vmax.f32 %v3598, 0.0
  %v3631 = vmax.f32 %v3599, 0.0
  %v3632 = vmax.f32 %v3600, 0.0
  %v3633 = vmax.f32 %v3601, 0.0
  %v3634 = vmax.f32 %v3602, 0.0
  %v3635 = vmax.f32 %v3603, 0.0
  %v3636 = vmax.f32 %v3604, 0.0
  %v3637 = vmax.f32 %v3605, 0.0
  %v3638 = vmax.f32 %v3606, 0.0
  %v3639 = vmax.f32 %v3607, 0.0
  %v3640 = vmax.f32 %v3608, 0.0
  %v3641 = vmax.f32 %v3609, 0.0
  %v3642 = vmax.f32 %v3610, 0.0
  %v3643 = vmax.f32 %v3611, 0.0
  %v3644 = vmax.f32 %v3612, 0.0
  %v3645 = vmax.f32 %v3613, 0.0
  %v3646 = vmax.f32 %v3614, 0.0
  %vm3679 = vcmask 1046528
  %v3680 = vrot.slane %v3615, 1
  %v3681 = vrot.slane %v3617, 1
  %v3682 = vsel %vm3679, %v3680, %v3681
  %v3683 = vrot.slane %v3616, 1
  %v3684 = vrot.slane %v3618, 1
  %v3685 = vsel %vm3679, %v3683, %v3684
  %v3686 = vrot.slane %v3619, 1
  %v3687 = vsel %vm3679, %v3681, %v3686
  %v3688 = vrot.slane %v3620, 1
  %v3689 = vsel %vm3679, %v3684, %v3688
  %v3690 = vrot.slane %v3621, 1
  %v3691 = vsel %vm3679, %v3686, %v3690
  %v3692 = vrot.slane %v3622, 1
  %v3693 = vsel %vm3679, %v3688, %v3692
  %v3694 = vrot.slane %v3623, 1
  %v3695 = vsel %vm3679, %v3690, %v3694
  %v3696 = vrot.slane %v3624, 1
  %v3697 = vsel %vm3679, %v3692, %v3696
  %v3698 = vrot.slane %v3625, 1
  %v3699 = vsel %vm3679, %v3694, %v3698
  %v3700 = vrot.slane %v3626, 1
  %v3701 = vsel %vm3679, %v3696, %v3700
  %v3702 = vrot.slane %v3627, 1
  %v3703 = vsel %vm3679, %v3698, %v3702
  %v3704 = vrot.slane %v3628, 1
  %v3705 = vsel %vm3679, %v3700, %v3704
  %v3706 = vrot.slane %v3629, 1
  %v3707 = vsel %vm3679, %v3702, %v3706
  %v3708 = vrot.slane %v3630, 1
  %v3709 = vsel %vm3679, %v3704, %v3708
  %v3710 = vrot.slane %v3631, 1
  %v3711 = vsel %vm3679, %v3706, %v3710
  %v3712 = vrot.slane %v3632, 1
  %v3713 = vsel %vm3679, %v3708, %v3712
  %v3714 = vrot.slane %v3633, 1
  %v3715 = vsel %vm3679, %v3710, %v3714
  %v3716 = vrot.slane %v3634, 1
  %v3717 = vsel %vm3679, %v3712, %v3716
  %v3718 = vrot.slane %v3635, 1
  %v3719 = vsel %vm3679, %v3714, %v3718
  %v3720 = vrot.slane %v3636, 1
  %v3721 = vsel %vm3679, %v3716, %v3720
  %v3722 = vrot.slane %v3637, 1
  %v3723 = vsel %vm3679, %v3718, %v3722
  %v3724 = vrot.slane %v3638, 1
  %v3725 = vsel %vm3679, %v3720, %v3724
  %v3726 = vrot.slane %v3639, 1
  %v3727 = vsel %vm3679, %v3722, %v3726
  %v3728 = vrot.slane %v3640, 1
  %v3729 = vsel %vm3679, %v3724, %v3728
  %v3730 = vrot.slane %v3641, 1
  %v3731 = vsel %vm3679, %v3726, %v3730
  %v3732 = vrot.slane %v3642, 1
  %v3733 = vsel %vm3679, %v3728, %v3732
  %v3734 = vrot.slane %v3643, 1
  %v3735 = vsel %vm3679, %v3730, %v3734
  %v3736 = vrot.slane %v3644, 1
  %v3737 = vsel %vm3679, %v3732, %v3736
  %v3738 = vrot.slane %v3645, 1
  %v3739 = vsel %vm3679, %v3734, %v3738
  %v3740 = vrot.slane %v3646, 1
  %v3741 = vsel %vm3679, %v3736, %v3740
  %v3774 = vmax.f32 %v3615, %v3682
  %v3775 = vmax.f32 %v3616, %v3685
  %v3776 = vmax.f32 %v3617, %v3687
  %v3777 = vmax.f32 %v3618, %v3689
  %v3778 = vmax.f32 %v3619, %v3691
  %v3779 = vmax.f32 %v3620, %v3693
  %v3780 = vmax.f32 %v3621, %v3695
  %v3781 = vmax.f32 %v3622, %v3697
  %v3782 = vmax.f32 %v3623, %v3699
  %v3783 = vmax.f32 %v3624, %v3701
  %v3784 = vmax.f32 %v3625, %v3703
  %v3785 = vmax.f32 %v3626, %v3705
  %v3786 = vmax.f32 %v3627, %v3707
  %v3787 = vmax.f32 %v3628, %v3709
  %v3788 = vmax.f32 %v3629, %v3711
  %v3789 = vmax.f32 %v3630, %v3713
  %v3790 = vmax.f32 %v3631, %v3715
  %v3791 = vmax.f32 %v3632, %v3717
  %v3792 = vmax.f32 %v3633, %v3719
  %v3793 = vmax.f32 %v3634, %v3721
  %v3794 = vmax.f32 %v3635, %v3723
  %v3795 = vmax.f32 %v3636, %v3725
  %v3796 = vmax.f32 %v3637, %v3727
  %v3797 = vmax.f32 %v3638, %v3729
  %v3798 = vmax.f32 %v3639, %v3731
  %v3799 = vmax.f32 %v3640, %v3733
  %v3800 = vmax.f32 %v3641, %v3735
  %v3801 = vmax.f32 %v3642, %v3737
  %v3802 = vmax.f32 %v3643, %v3739
  %v3803 = vmax.f32 %v3644, %v3741
  %v3804 = vmax.f32 %v3645, %v3738
  %v3805 = vmax.f32 %v3646, %v3740
  %v3806 = vld [vmem:[%s5] sm:$0xff]
  %v3807 = vld [vmem:[%s5 + $0x8] sm:$0xff]
  %v3808 = vld [vmem:[%s5 + $0x10] sm:$0xff]
  %v3809 = vld [vmem:[%s5 + $0x18] sm:$0xff]
  %v3810 = vld [vmem:[%s5 + $0x20] sm:$0xff]
  %vm3811 = vcmask 1039360
  %v3813 = vsel %vm3811, %v3806, 0
  %v3816 = vsel %vm3811, %v3807, 0
  %v3819 = vsel %vm3811, %v3808, 0
  %v3822 = vsel %vm3811, %v3809, 0
  %v3825 = vsel %vm3811, %v3810, 0
  %v3828 = vsel %vm3679, %v3804, 0
  %v3831 = vsel %vm3679, %v3805, 0
  %3833 = vmatprep.subr.mxu0 %v3831
  %3834 = vmatpush1.msra.mxu0 %v3828
  %3835 = vmatprep.subr.mxu0 %v3803
  %3836 = vmatpush1.msra.mxu0 %v3802
  %3837 = vmatprep.subr.mxu0 %v3801
  %3838 = vmatpush1.msra.mxu0 %v3800
  %3839 = vmatprep.subr.mxu0 %v3799
  %3840 = vmatpush1.msra.mxu0 %v3798
  %3841 = vmatprep.subr.mxu0 %v3797
  %3842 = vmatpush1.msra.mxu0 %v3796
  %3843 = vmatprep.subr.mxu0 %v3795
  %3844 = vmatpush1.msra.mxu0 %v3794
  %3845 = vmatprep.subr.mxu0 %v3793
  %3846 = vmatpush1.msra.mxu0 %v3792
  %3847 = vmatprep.subr.mxu0 %v3791
  %3848 = vmatpush1.msra.mxu0 %v3790
  %3849 = vmatprep.subr.mxu0 %v3789
  %3850 = vmatpush1.msra.mxu0 %v3788
  %3851 = vmatprep.subr.mxu0 %v3787
  %3852 = vmatpush1.msra.mxu0 %v3786
  %3853 = vmatprep.subr.mxu0 %v3785
  %3854 = vmatpush1.msra.mxu0 %v3784
  %3855 = vmatprep.subr.mxu0 %v3783
  %3856 = vmatpush1.msra.mxu0 %v3782
  %3857 = vmatprep.subr.mxu0 %v3781
  %3858 = vmatpush1.msra.mxu0 %v3780
  %3859 = vmatprep.subr.mxu0 %v3779
  %3860 = vmatpush1.msra.mxu0 %v3778
  %3861 = vmatprep.subr.mxu0 %v3777
  %3862 = vmatpush1.msra.mxu0 %v3776
  %3863 = vmatprep.subr.mxu0 %v3775
  %3864 = vmatpush1.msra.mxu0 %v3774
  %3865 = vmatprep.subr.mxu0 0.0
  %3866 = vmatpush2.msra.mxu0 0.0
  %3867 = vmatprep.subr.mxu0 0.0
  %3868 = vmatpush2.msra.mxu0 0.0
  %3869 = vmatprep.subr.mxu0 0.0
  %3870 = vmatpush2.msra.mxu0 0.0
  %3871 = vmatprep.subr.mxu0 0.0
  %3872 = vmatpush2.msra.mxu0 0.0
  %3873 = vmatprep.subr.mxu0 0.0
  %3874 = vmatpush2.msra.mxu0 0.0
  %3875 = vmatprep.subr.mxu0 0.0
  %3876 = vmatpush2.msra.mxu0 0.0
  %3877 = vmatprep.subr.mxu0 0.0
  %3878 = vmatpush2.msra.mxu0 0.0
  %3879 = vmatprep.subr.mxu0 0.0
  %3880 = vmatpush2.msra.mxu0 0.0
  %3881 = vmatprep.subr.mxu0 0.0
  %3882 = vmatpush2.msra.mxu0 0.0
  %3883 = vmatprep.subr.mxu0 0.0
  %3884 = vmatpush2.msra.mxu0 0.0
  %3885 = vmatprep.subr.mxu0 0.0
  %3886 = vmatpush2.msra.mxu0 0.0
  %3887 = vmatprep.subr.mxu0 0.0
  %3888 = vmatpush2.msra.mxu0 0.0
  %3889 = vmatprep.subr.mxu0 0.0
  %3890 = vmatpush2.msra.mxu0 0.0
  %3891 = vmatprep.subr.mxu0 0.0
  %3892 = vmatpush2.msra.mxu0 0.0
  %3893 = vmatprep.subr.mxu0 0.0
  %3894 = vmatpush2.msra.mxu0 0.0
  %3895 = vmatprep.subr.mxu0 0.0
  %3896 = vmatpush2.msra.mxu0 0.0
  %3897 = vmatprep.mubr.f32.mxu0 0.0
  %3898 = vmatmul.mubr.f32.gmra.mxu0 %v3813
  %v3899 = vpop.f32.mrf.mxu0
  %v3900 = vadd.f32 0.0, %v3899
  %v3901 = vpop.f32.mrf.mxu0
  %v3902 = vadd.f32 0.0, %v3901
  %3903 = vmatprep.mubr.f32.mxu0 0.0
  %3904 = vmatmul.mubr.f32.gmra.mxu0 %v3816
  %v3905 = vpop.f32.mrf.mxu0
  %v3906 = vadd.f32 0.0, %v3905
  %v3907 = vpop.f32.mrf.mxu0
  %v3908 = vadd.f32 0.0, %v3907
  %3909 = vmatprep.mubr.f32.mxu0 0.0
  %3910 = vmatmul.mubr.f32.gmra.mxu0 %v3819
  %v3911 = vpop.f32.mrf.mxu0
  %v3912 = vadd.f32 0.0, %v3911
  %v3913 = vpop.f32.mrf.mxu0
  %v3914 = vadd.f32 0.0, %v3913
  %3915 = vmatprep.mubr.f32.mxu0 0.0
  %3916 = vmatmul.mubr.f32.gmra.mxu0 %v3822
  %v3917 = vpop.f32.mrf.mxu0
  %v3918 = vadd.f32 0.0, %v3917
  %v3919 = vpop.f32.mrf.mxu0
  %v3920 = vadd.f32 0.0, %v3919
  %3921 = vmatprep.mubr.f32.mxu0 0.0
  %3922 = vmatmul.mubr.f32.gmra.mxu0 %v3825
  %v3923 = vpop.f32.mrf.mxu0
  %v3924 = vadd.f32 0.0, %v3923
  %v3925 = vpop.f32.mrf.mxu0
  %v3926 = vadd.f32 0.0, %v3925
  %3927 = vdwg.mxu0
  %3938 = vrot.lane.b32.xlu0 %v3900, 112
  %v3939 = vpop.permute.xlu0 %3938
  %3940 = vrot.lane.b32.xlu0 %v3902, 112
  %v3941 = vpop.permute.xlu0 %3940
  %3942 = vrot.lane.b32.xlu0 %v3906, 112
  %v3943 = vpop.permute.xlu0 %3942
  %3944 = vrot.lane.b32.xlu0 %v3908, 112
  %v3945 = vpop.permute.xlu0 %3944
  %3946 = vrot.lane.b32.xlu0 %v3912, 112
  %v3947 = vpop.permute.xlu0 %3946
  %3948 = vrot.lane.b32.xlu0 %v3914, 112
  %v3949 = vpop.permute.xlu0 %3948
  %3950 = vrot.lane.b32.xlu0 %v3918, 112
  %v3951 = vpop.permute.xlu0 %3950
  %3952 = vrot.lane.b32.xlu0 %v3920, 112
  %v3953 = vpop.permute.xlu0 %3952
  %3954 = vrot.lane.b32.xlu0 %v3924, 112
  %v3955 = vpop.permute.xlu0 %3954
  %3956 = vrot.lane.b32.xlu0 %v3926, 112
  %v3957 = vpop.permute.xlu0 %3956
  %vm3958 = vcmask 916480
  %v3959 = vsel %vm3958, %v3939, %v3941
  %v3960 = vsel %vm3958, %v3943, %v3945
  %v3961 = vsel %vm3958, %v3947, %v3949
  %v3962 = vsel %vm3958, %v3951, %v3953
  %v3963 = vsel %vm3958, %v3955, %v3957
  %v3974 = vmax.f32 %v3900, %v3959
  %v3975 = vmax.f32 %v3902, %v3941
  %v3976 = vmax.f32 %v3906, %v3960
  %v3977 = vmax.f32 %v3908, %v3945
  %v3978 = vmax.f32 %v3912, %v3961
  %v3979 = vmax.f32 %v3914, %v3949
  %v3980 = vmax.f32 %v3918, %v3962
  %v3981 = vmax.f32 %v3920, %v3953
  %v3982 = vmax.f32 %v3924, %v3963
  %v3983 = vmax.f32 %v3926, %v3957
  %v3984 = vld [vmem:[%s7] sm:$0x1]
  %v3985 = vld [vmem:[%s6] sm:$0xff]
  %v3986 = vld [vmem:[%s6 + $0x8] sm:$0xff]
  %v3987 = vld [vmem:[%s6 + $0x10] sm:$0xff]
  %v3988 = vld [vmem:[%s6 + $0x18] sm:$0xff]
  %v3989 = vld [vmem:[%s6 + $0x20] sm:$0xff]
  %v3990 = vld [vmem:[%s6 + $0x28] sm:$0xff]
  %v3991 = vld [vmem:[%s6 + $0x30] sm:$0xff]
  %v3992 = vld [vmem:[%s6 + $0x38] sm:$0xff]
  %v3993 = vld [vmem:[%s6 + $0x40] sm:$0xff]
  %v3994 = vld [vmem:[%s6 + $0x48] sm:$0xff]
  %v3995 = vld [vmem:[%s6 + $0x50] sm:$0xff]
  %v3996 = vld [vmem:[%s6 + $0x58] sm:$0xff]
  %v3997 = vld [vmem:[%s6 + $0x60] sm:$0xff]
  %v3998 = vld [vmem:[%s6 + $0x68] sm:$0xff]
  %v3999 = vld [vmem:[%s6 + $0x70] sm:$0xff]
  %v4000 = vld [vmem:[%s6 + $0x78] sm:$0xff]
  %v4001 = vld [vmem:[%s6 + $0x80] sm:$0xff]
  %v4002 = vld [vmem:[%s6 + $0x88] sm:$0xff]
  %vm4003 = vcmask 130048
  %v4005 = vsel %vm4003, %v3975, 0
  %4007 = vmatprep.subr.mxu0 0.0
  %4008 = vmatpush1.msra.mxu0 %v4000
  %4009 = vmatprep.subr.mxu0 0.0
  %4010 = vmatpush1.msra.mxu0 %v3999
  %4011 = vmatprep.subr.mxu0 0.0
  %4012 = vmatpush1.msra.mxu0 %v3998
  %4013 = vmatprep.subr.mxu0 0.0
  %4014 = vmatpush1.msra.mxu0 %v3997
  %4015 = vmatprep.subr.mxu0 0.0
  %4016 = vmatpush1.msra.mxu0 %v3996
  %4017 = vmatprep.subr.mxu0 0.0
  %4018 = vmatpush1.msra.mxu0 %v3995
  %4019 = vmatprep.subr.mxu0 0.0
  %4020 = vmatpush1.msra.mxu0 %v3994
  %4021 = vmatprep.subr.mxu0 0.0
  %4022 = vmatpush1.msra.mxu0 %v3993
  %4023 = vmatprep.subr.mxu0 0.0
  %4024 = vmatpush1.msra.mxu0 %v3992
  %4025 = vmatprep.subr.mxu0 0.0
  %4026 = vmatpush1.msra.mxu0 %v3991
  %4027 = vmatprep.subr.mxu0 0.0
  %4028 = vmatpush1.msra.mxu0 %v3990
  %4029 = vmatprep.subr.mxu0 0.0
  %4030 = vmatpush1.msra.mxu0 %v3989
  %4031 = vmatprep.subr.mxu0 0.0
  %4032 = vmatpush1.msra.mxu0 %v3988
  %4033 = vmatprep.subr.mxu0 0.0
  %4034 = vmatpush1.msra.mxu0 %v3987
  %4035 = vmatprep.subr.mxu0 0.0
  %4036 = vmatpush1.msra.mxu0 %v3986
  %4037 = vmatprep.subr.mxu0 0.0
  %4038 = vmatpush1.msra.mxu0 %v3985
  %4039 = vmatprep.subr.mxu0 0.0
  %4040 = vmatpush2.msra.mxu0 0.0
  %4041 = vmatprep.subr.mxu0 0.0
  %4042 = vmatpush2.msra.mxu0 0.0
  %4043 = vmatprep.subr.mxu0 0.0
  %4044 = vmatpush2.msra.mxu0 0.0
  %4045 = vmatprep.subr.mxu0 0.0
  %4046 = vmatpush2.msra.mxu0 0.0
  %4047 = vmatprep.subr.mxu0 0.0
  %4048 = vmatpush2.msra.mxu0 0.0
  %4049 = vmatprep.subr.mxu0 0.0
  %4050 = vmatpush2.msra.mxu0 0.0
  %4051 = vmatprep.subr.mxu0 0.0
  %4052 = vmatpush2.msra.mxu0 0.0
  %4053 = vmatprep.subr.mxu0 0.0
  %4054 = vmatpush2.msra.mxu0 0.0
  %4055 = vmatprep.subr.mxu0 0.0
  %4056 = vmatpush2.msra.mxu0 0.0
  %4057 = vmatprep.subr.mxu0 0.0
  %4058 = vmatpush2.msra.mxu0 0.0
  %4059 = vmatprep.subr.mxu0 0.0
  %4060 = vmatpush2.msra.mxu0 0.0
  %4061 = vmatprep.subr.mxu0 0.0
  %4062 = vmatpush2.msra.mxu0 0.0
  %4063 = vmatprep.subr.mxu0 0.0
  %4064 = vmatpush2.msra.mxu0 0.0
  %4065 = vmatprep.subr.mxu0 0.0
  %4066 = vmatpush2.msra.mxu0 0.0
  %4067 = vmatprep.subr.mxu0 0.0
  %4068 = vmatpush2.msra.mxu0 %v4002
  %4069 = vmatprep.subr.mxu0 0.0
  %4070 = vmatpush2.msra.mxu0 %v4001
  %4071 = vmatprep.mubr.f32.mxu0 %v4005
  %4072 = vmatmul.mubr.f32.gmra.mxu0 %v3974
  %v4073 = vpop.f32.mrf.mxu0
  %v4074 = vadd.f32 0.0, %v4073
  %v4075 = vpop.f32.mrf.mxu0
  %4076 = vdwg.mxu0
  %v4078 = vlaneseq
  %v4079 = vshrl.u32 %v4078, 7
  %v4080 = vsub.s32 0, %v4079
  %v4081 = vrot.slane %v3984, %v4080
  %v4083 = vadd.f32 %v4081, %v4074
  %s4084 = scalar_lea.vmem %s6, 144
  %v4085 = vld [vmem:[%s4084] sm:$0xff]
  %v4086 = vld [vmem:[%s4084 + $0x8] sm:$0xff]
  %v4087 = vld [vmem:[%s4084 + $0x10] sm:$0xff]
  %v4088 = vld [vmem:[%s4084 + $0x18] sm:$0xff]
  %v4089 = vld [vmem:[%s4084 + $0x20] sm:$0xff]
  %v4090 = vld [vmem:[%s4084 + $0x28] sm:$0xff]
  %v4091 = vld [vmem:[%s4084 + $0x30] sm:$0xff]
  %v4092 = vld [vmem:[%s4084 + $0x38] sm:$0xff]
  %v4093 = vld [vmem:[%s4084 + $0x40] sm:$0xff]
  %v4094 = vld [vmem:[%s4084 + $0x48] sm:$0xff]
  %v4095 = vld [vmem:[%s4084 + $0x50] sm:$0xff]
  %v4096 = vld [vmem:[%s4084 + $0x58] sm:$0xff]
  %v4097 = vld [vmem:[%s4084 + $0x60] sm:$0xff]
  %v4098 = vld [vmem:[%s4084 + $0x68] sm:$0xff]
  %v4099 = vld [vmem:[%s4084 + $0x70] sm:$0xff]
  %v4100 = vld [vmem:[%s4084 + $0x78] sm:$0xff]
  %v4101 = vld [vmem:[%s4084 + $0x80] sm:$0xff]
  %v4102 = vld [vmem:[%s4084 + $0x88] sm:$0xff]
  %v4104 = vsel %vm4003, %v3977, 0
  %4106 = vmatprep.subr.mxu0 0.0
  %4107 = vmatpush1.msra.mxu0 %v4100
  %4108 = vmatprep.subr.mxu0 0.0
  %4109 = vmatpush1.msra.mxu0 %v4099
  %4110 = vmatprep.subr.mxu0 0.0
  %4111 = vmatpush1.msra.mxu0 %v4098
  %4112 = vmatprep.subr.mxu0 0.0
  %4113 = vmatpush1.msra.mxu0 %v4097
  %4114 = vmatprep.subr.mxu0 0.0
  %4115 = vmatpush1.msra.mxu0 %v4096
  %4116 = vmatprep.subr.mxu0 0.0
  %4117 = vmatpush1.msra.mxu0 %v4095
  %4118 = vmatprep.subr.mxu0 0.0
  %4119 = vmatpush1.msra.mxu0 %v4094
  %4120 = vmatprep.subr.mxu0 0.0
  %4121 = vmatpush1.msra.mxu0 %v4093
  %4122 = vmatprep.subr.mxu0 0.0
  %4123 = vmatpush1.msra.mxu0 %v4092
  %4124 = vmatprep.subr.mxu0 0.0
  %4125 = vmatpush1.msra.mxu0 %v4091
  %4126 = vmatprep.subr.mxu0 0.0
  %4127 = vmatpush1.msra.mxu0 %v4090
  %4128 = vmatprep.subr.mxu0 0.0
  %4129 = vmatpush1.msra.mxu0 %v4089
  %4130 = vmatprep.subr.mxu0 0.0
  %4131 = vmatpush1.msra.mxu0 %v4088
  %4132 = vmatprep.subr.mxu0 0.0
  %4133 = vmatpush1.msra.mxu0 %v4087
  %4134 = vmatprep.subr.mxu0 0.0
  %4135 = vmatpush1.msra.mxu0 %v4086
  %4136 = vmatprep.subr.mxu0 0.0
  %4137 = vmatpush1.msra.mxu0 %v4085
  %4138 = vmatprep.subr.mxu0 0.0
  %4139 = vmatpush2.msra.mxu0 0.0
  %4140 = vmatprep.subr.mxu0 0.0
  %4141 = vmatpush2.msra.mxu0 0.0
  %4142 = vmatprep.subr.mxu0 0.0
  %4143 = vmatpush2.msra.mxu0 0.0
  %4144 = vmatprep.subr.mxu0 0.0
  %4145 = vmatpush2.msra.mxu0 0.0
  %4146 = vmatprep.subr.mxu0 0.0
  %4147 = vmatpush2.msra.mxu0 0.0
  %4148 = vmatprep.subr.mxu0 0.0
  %4149 = vmatpush2.msra.mxu0 0.0
  %4150 = vmatprep.subr.mxu0 0.0
  %4151 = vmatpush2.msra.mxu0 0.0
  %4152 = vmatprep.subr.mxu0 0.0
  %4153 = vmatpush2.msra.mxu0 0.0
  %4154 = vmatprep.subr.mxu0 0.0
  %4155 = vmatpush2.msra.mxu0 0.0
  %4156 = vmatprep.subr.mxu0 0.0
  %4157 = vmatpush2.msra.mxu0 0.0
  %4158 = vmatprep.subr.mxu0 0.0
  %4159 = vmatpush2.msra.mxu0 0.0
  %4160 = vmatprep.subr.mxu0 0.0
  %4161 = vmatpush2.msra.mxu0 0.0
  %4162 = vmatprep.subr.mxu0 0.0
  %4163 = vmatpush2.msra.mxu0 0.0
  %4164 = vmatprep.subr.mxu0 0.0
  %4165 = vmatpush2.msra.mxu0 0.0
  %4166 = vmatprep.subr.mxu0 0.0
  %4167 = vmatpush2.msra.mxu0 %v4102
  %4168 = vmatprep.subr.mxu0 0.0
  %4169 = vmatpush2.msra.mxu0 %v4101
  %4170 = vmatprep.mubr.f32.mxu0 %v4104
  %4171 = vmatmul.mubr.f32.gmra.mxu0 %v3976
  %v4172 = vpop.f32.mrf.mxu0
  %v4173 = vadd.f32 0.0, %v4172
  %v4174 = vpop.f32.mrf.mxu0
  %4175 = vdwg.mxu0
  %v4176 = vadd.f32 %v4083, %v4173
  %s4177 = scalar_lea.vmem %s6, 288
  %v4178 = vld [vmem:[%s4177] sm:$0xff]
  %v4179 = vld [vmem:[%s4177 + $0x8] sm:$0xff]
  %v4180 = vld [vmem:[%s4177 + $0x10] sm:$0xff]
  %v4181 = vld [vmem:[%s4177 + $0x18] sm:$0xff]
  %v4182 = vld [vmem:[%s4177 + $0x20] sm:$0xff]
  %v4183 = vld [vmem:[%s4177 + $0x28] sm:$0xff]
  %v4184 = vld [vmem:[%s4177 + $0x30] sm:$0xff]
  %v4185 = vld [vmem:[%s4177 + $0x38] sm:$0xff]
  %v4186 = vld [vmem:[%s4177 + $0x40] sm:$0xff]
  %v4187 = vld [vmem:[%s4177 + $0x48] sm:$0xff]
  %v4188 = vld [vmem:[%s4177 + $0x50] sm:$0xff]
  %v4189 = vld [vmem:[%s4177 + $0x58] sm:$0xff]
  %v4190 = vld [vmem:[%s4177 + $0x60] sm:$0xff]
  %v4191 = vld [vmem:[%s4177 + $0x68] sm:$0xff]
  %v4192 = vld [vmem:[%s4177 + $0x70] sm:$0xff]
  %v4193 = vld [vmem:[%s4177 + $0x78] sm:$0xff]
  %v4194 = vld [vmem:[%s4177 + $0x80] sm:$0xff]
  %v4195 = vld [vmem:[%s4177 + $0x88] sm:$0xff]
  %v4197 = vsel %vm4003, %v3979, 0
  %4199 = vmatprep.subr.mxu0 0.0
  %4200 = vmatpush1.msra.mxu0 %v4193
  %4201 = vmatprep.subr.mxu0 0.0
  %4202 = vmatpush1.msra.mxu0 %v4192
  %4203 = vmatprep.subr.mxu0 0.0
  %4204 = vmatpush1.msra.mxu0 %v4191
  %4205 = vmatprep.subr.mxu0 0.0
  %4206 = vmatpush1.msra.mxu0 %v4190
  %4207 = vmatprep.subr.mxu0 0.0
  %4208 = vmatpush1.msra.mxu0 %v4189
  %4209 = vmatprep.subr.mxu0 0.0
  %4210 = vmatpush1.msra.mxu0 %v4188
  %4211 = vmatprep.subr.mxu0 0.0
  %4212 = vmatpush1.msra.mxu0 %v4187
  %4213 = vmatprep.subr.mxu0 0.0
  %4214 = vmatpush1.msra.mxu0 %v4186
  %4215 = vmatprep.subr.mxu0 0.0
  %4216 = vmatpush1.msra.mxu0 %v4185
  %4217 = vmatprep.subr.mxu0 0.0
  %4218 = vmatpush1.msra.mxu0 %v4184
  %4219 = vmatprep.subr.mxu0 0.0
  %4220 = vmatpush1.msra.mxu0 %v4183
  %4221 = vmatprep.subr.mxu0 0.0
  %4222 = vmatpush1.msra.mxu0 %v4182
  %4223 = vmatprep.subr.mxu0 0.0
  %4224 = vmatpush1.msra.mxu0 %v4181
  %4225 = vmatprep.subr.mxu0 0.0
  %4226 = vmatpush1.msra.mxu0 %v4180
  %4227 = vmatprep.subr.mxu0 0.0
  %4228 = vmatpush1.msra.mxu0 %v4179
  %4229 = vmatprep.subr.mxu0 0.0
  %4230 = vmatpush1.msra.mxu0 %v4178
  %4231 = vmatprep.subr.mxu0 0.0
  %4232 = vmatpush2.msra.mxu0 0.0
  %4233 = vmatprep.subr.mxu0 0.0
  %4234 = vmatpush2.msra.mxu0 0.0
  %4235 = vmatprep.subr.mxu0 0.0
  %4236 = vmatpush2.msra.mxu0 0.0
  %4237 = vmatprep.subr.mxu0 0.0
  %4238 = vmatpush2.msra.mxu0 0.0
  %4239 = vmatprep.subr.mxu0 0.0
  %4240 = vmatpush2.msra.mxu0 0.0
  %4241 = vmatprep.subr.mxu0 0.0
  %4242 = vmatpush2.msra.mxu0 0.0
  %4243 = vmatprep.subr.mxu0 0.0
  %4244 = vmatpush2.msra.mxu0 0.0
  %4245 = vmatprep.subr.mxu0 0.0
  %4246 = vmatpush2.msra.mxu0 0.0
  %4247 = vmatprep.subr.mxu0 0.0
  %4248 = vmatpush2.msra.mxu0 0.0
  %4249 = vmatprep.subr.mxu0 0.0
  %4250 = vmatpush2.msra.mxu0 0.0
  %4251 = vmatprep.subr.mxu0 0.0
  %4252 = vmatpush2.msra.mxu0 0.0
  %4253 = vmatprep.subr.mxu0 0.0
  %4254 = vmatpush2.msra.mxu0 0.0
  %4255 = vmatprep.subr.mxu0 0.0
  %4256 = vmatpush2.msra.mxu0 0.0
  %4257 = vmatprep.subr.mxu0 0.0
  %4258 = vmatpush2.msra.mxu0 0.0
  %4259 = vmatprep.subr.mxu0 0.0
  %4260 = vmatpush2.msra.mxu0 %v4195
  %4261 = vmatprep.subr.mxu0 0.0
  %4262 = vmatpush2.msra.mxu0 %v4194
  %4263 = vmatprep.mubr.f32.mxu0 %v4197
  %4264 = vmatmul.mubr.f32.gmra.mxu0 %v3978
  %v4265 = vpop.f32.mrf.mxu0
  %v4266 = vadd.f32 0.0, %v4265
  %v4267 = vpop.f32.mrf.mxu0
  %4268 = vdwg.mxu0
  %v4269 = vadd.f32 %v4176, %v4266
  %s4270 = scalar_lea.vmem %s6, 432
  %v4271 = vld [vmem:[%s4270] sm:$0xff]
  %v4272 = vld [vmem:[%s4270 + $0x8] sm:$0xff]
  %v4273 = vld [vmem:[%s4270 + $0x10] sm:$0xff]
  %v4274 = vld [vmem:[%s4270 + $0x18] sm:$0xff]
  %v4275 = vld [vmem:[%s4270 + $0x20] sm:$0xff]
  %v4276 = vld [vmem:[%s4270 + $0x28] sm:$0xff]
  %v4277 = vld [vmem:[%s4270 + $0x30] sm:$0xff]
  %v4278 = vld [vmem:[%s4270 + $0x38] sm:$0xff]
  %v4279 = vld [vmem:[%s4270 + $0x40] sm:$0xff]
  %v4280 = vld [vmem:[%s4270 + $0x48] sm:$0xff]
  %v4281 = vld [vmem:[%s4270 + $0x50] sm:$0xff]
  %v4282 = vld [vmem:[%s4270 + $0x58] sm:$0xff]
  %v4283 = vld [vmem:[%s4270 + $0x60] sm:$0xff]
  %v4284 = vld [vmem:[%s4270 + $0x68] sm:$0xff]
  %v4285 = vld [vmem:[%s4270 + $0x70] sm:$0xff]
  %v4286 = vld [vmem:[%s4270 + $0x78] sm:$0xff]
  %v4287 = vld [vmem:[%s4270 + $0x80] sm:$0xff]
  %v4288 = vld [vmem:[%s4270 + $0x88] sm:$0xff]
  %v4290 = vsel %vm4003, %v3981, 0
  %4292 = vmatprep.subr.mxu0 0.0
  %4293 = vmatpush1.msra.mxu0 %v4286
  %4294 = vmatprep.subr.mxu0 0.0
  %4295 = vmatpush1.msra.mxu0 %v4285
  %4296 = vmatprep.subr.mxu0 0.0
  %4297 = vmatpush1.msra.mxu0 %v4284
  %4298 = vmatprep.subr.mxu0 0.0
  %4299 = vmatpush1.msra.mxu0 %v4283
  %4300 = vmatprep.subr.mxu0 0.0
  %4301 = vmatpush1.msra.mxu0 %v4282
  %4302 = vmatprep.subr.mxu0 0.0
  %4303 = vmatpush1.msra.mxu0 %v4281
  %4304 = vmatprep.subr.mxu0 0.0
  %4305 = vmatpush1.msra.mxu0 %v4280
  %4306 = vmatprep.subr.mxu0 0.0
  %4307 = vmatpush1.msra.mxu0 %v4279
  %4308 = vmatprep.subr.mxu0 0.0
  %4309 = vmatpush1.msra.mxu0 %v4278
  %4310 = vmatprep.subr.mxu0 0.0
  %4311 = vmatpush1.msra.mxu0 %v4277
  %4312 = vmatprep.subr.mxu0 0.0
  %4313 = vmatpush1.msra.mxu0 %v4276
  %4314 = vmatprep.subr.mxu0 0.0
  %4315 = vmatpush1.msra.mxu0 %v4275
  %4316 = vmatprep.subr.mxu0 0.0
  %4317 = vmatpush1.msra.mxu0 %v4274
  %4318 = vmatprep.subr.mxu0 0.0
  %4319 = vmatpush1.msra.mxu0 %v4273
  %4320 = vmatprep.subr.mxu0 0.0
  %4321 = vmatpush1.msra.mxu0 %v4272
  %4322 = vmatprep.subr.mxu0 0.0
  %4323 = vmatpush1.msra.mxu0 %v4271
  %4324 = vmatprep.subr.mxu0 0.0
  %4325 = vmatpush2.msra.mxu0 0.0
  %4326 = vmatprep.subr.mxu0 0.0
  %4327 = vmatpush2.msra.mxu0 0.0
  %4328 = vmatprep.subr.mxu0 0.0
  %4329 = vmatpush2.msra.mxu0 0.0
  %4330 = vmatprep.subr.mxu0 0.0
  %4331 = vmatpush2.msra.mxu0 0.0
  %4332 = vmatprep.subr.mxu0 0.0
  %4333 = vmatpush2.msra.mxu0 0.0
  %4334 = vmatprep.subr.mxu0 0.0
  %4335 = vmatpush2.msra.mxu0 0.0
  %4336 = vmatprep.subr.mxu0 0.0
  %4337 = vmatpush2.msra.mxu0 0.0
  %4338 = vmatprep.subr.mxu0 0.0
  %4339 = vmatpush2.msra.mxu0 0.0
  %4340 = vmatprep.subr.mxu0 0.0
  %4341 = vmatpush2.msra.mxu0 0.0
  %4342 = vmatprep.subr.mxu0 0.0
  %4343 = vmatpush2.msra.mxu0 0.0
  %4344 = vmatprep.subr.mxu0 0.0
  %4345 = vmatpush2.msra.mxu0 0.0
  %4346 = vmatprep.subr.mxu0 0.0
  %4347 = vmatpush2.msra.mxu0 0.0
  %4348 = vmatprep.subr.mxu0 0.0
  %4349 = vmatpush2.msra.mxu0 0.0
  %4350 = vmatprep.subr.mxu0 0.0
  %4351 = vmatpush2.msra.mxu0 0.0
  %4352 = vmatprep.subr.mxu0 0.0
  %4353 = vmatpush2.msra.mxu0 %v4288
  %4354 = vmatprep.subr.mxu0 0.0
  %4355 = vmatpush2.msra.mxu0 %v4287
  %4356 = vmatprep.mubr.f32.mxu0 %v4290
  %4357 = vmatmul.mubr.f32.gmra.mxu0 %v3980
  %v4358 = vpop.f32.mrf.mxu0
  %v4359 = vadd.f32 0.0, %v4358
  %v4360 = vpop.f32.mrf.mxu0
  %4361 = vdwg.mxu0
  %v4362 = vadd.f32 %v4269, %v4359
  %s4363 = scalar_lea.vmem %s6, 576
  %v4364 = vld [vmem:[%s4363] sm:$0xff]
  %v4365 = vld [vmem:[%s4363 + $0x8] sm:$0xff]
  %v4366 = vld [vmem:[%s4363 + $0x10] sm:$0xff]
  %v4367 = vld [vmem:[%s4363 + $0x18] sm:$0xff]
  %v4368 = vld [vmem:[%s4363 + $0x20] sm:$0xff]
  %v4369 = vld [vmem:[%s4363 + $0x28] sm:$0xff]
  %v4370 = vld [vmem:[%s4363 + $0x30] sm:$0xff]
  %v4371 = vld [vmem:[%s4363 + $0x38] sm:$0xff]
  %v4372 = vld [vmem:[%s4363 + $0x40] sm:$0xff]
  %v4373 = vld [vmem:[%s4363 + $0x48] sm:$0xff]
  %v4374 = vld [vmem:[%s4363 + $0x50] sm:$0xff]
  %v4375 = vld [vmem:[%s4363 + $0x58] sm:$0xff]
  %v4376 = vld [vmem:[%s4363 + $0x60] sm:$0xff]
  %v4377 = vld [vmem:[%s4363 + $0x68] sm:$0xff]
  %v4378 = vld [vmem:[%s4363 + $0x70] sm:$0xff]
  %v4379 = vld [vmem:[%s4363 + $0x78] sm:$0xff]
  %v4380 = vld [vmem:[%s4363 + $0x80] sm:$0xff]
  %v4381 = vld [vmem:[%s4363 + $0x88] sm:$0xff]
  %v4383 = vsel %vm4003, %v3983, 0
  %4385 = vmatprep.subr.mxu0 0.0
  %4386 = vmatpush1.msra.mxu0 %v4379
  %4387 = vmatprep.subr.mxu0 0.0
  %4388 = vmatpush1.msra.mxu0 %v4378
  %4389 = vmatprep.subr.mxu0 0.0
  %4390 = vmatpush1.msra.mxu0 %v4377
  %4391 = vmatprep.subr.mxu0 0.0
  %4392 = vmatpush1.msra.mxu0 %v4376
  %4393 = vmatprep.subr.mxu0 0.0
  %4394 = vmatpush1.msra.mxu0 %v4375
  %4395 = vmatprep.subr.mxu0 0.0
  %4396 = vmatpush1.msra.mxu0 %v4374
  %4397 = vmatprep.subr.mxu0 0.0
  %4398 = vmatpush1.msra.mxu0 %v4373
  %4399 = vmatprep.subr.mxu0 0.0
  %4400 = vmatpush1.msra.mxu0 %v4372
  %4401 = vmatprep.subr.mxu0 0.0
  %4402 = vmatpush1.msra.mxu0 %v4371
  %4403 = vmatprep.subr.mxu0 0.0
  %4404 = vmatpush1.msra.mxu0 %v4370
  %4405 = vmatprep.subr.mxu0 0.0
  %4406 = vmatpush1.msra.mxu0 %v4369
  %4407 = vmatprep.subr.mxu0 0.0
  %4408 = vmatpush1.msra.mxu0 %v4368
  %4409 = vmatprep.subr.mxu0 0.0
  %4410 = vmatpush1.msra.mxu0 %v4367
  %4411 = vmatprep.subr.mxu0 0.0
  %4412 = vmatpush1.msra.mxu0 %v4366
  %4413 = vmatprep.subr.mxu0 0.0
  %4414 = vmatpush1.msra.mxu0 %v4365
  %4415 = vmatprep.subr.mxu0 0.0
  %4416 = vmatpush1.msra.mxu0 %v4364
  %4417 = vmatprep.subr.mxu0 0.0
  %4418 = vmatpush2.msra.mxu0 0.0
  %4419 = vmatprep.subr.mxu0 0.0
  %4420 = vmatpush2.msra.mxu0 0.0
  %4421 = vmatprep.subr.mxu0 0.0
  %4422 = vmatpush2.msra.mxu0 0.0
  %4423 = vmatprep.subr.mxu0 0.0
  %4424 = vmatpush2.msra.mxu0 0.0
  %4425 = vmatprep.subr.mxu0 0.0
  %4426 = vmatpush2.msra.mxu0 0.0
  %4427 = vmatprep.subr.mxu0 0.0
  %4428 = vmatpush2.msra.mxu0 0.0
  %4429 = vmatprep.subr.mxu0 0.0
  %4430 = vmatpush2.msra.mxu0 0.0
  %4431 = vmatprep.subr.mxu0 0.0
  %4432 = vmatpush2.msra.mxu0 0.0
  %4433 = vmatprep.subr.mxu0 0.0
  %4434 = vmatpush2.msra.mxu0 0.0
  %4435 = vmatprep.subr.mxu0 0.0
  %4436 = vmatpush2.msra.mxu0 0.0
  %4437 = vmatprep.subr.mxu0 0.0
  %4438 = vmatpush2.msra.mxu0 0.0
  %4439 = vmatprep.subr.mxu0 0.0
  %4440 = vmatpush2.msra.mxu0 0.0
  %4441 = vmatprep.subr.mxu0 0.0
  %4442 = vmatpush2.msra.mxu0 0.0
  %4443 = vmatprep.subr.mxu0 0.0
  %4444 = vmatpush2.msra.mxu0 0.0
  %4445 = vmatprep.subr.mxu0 0.0
  %4446 = vmatpush2.msra.mxu0 %v4381
  %4447 = vmatprep.subr.mxu0 0.0
  %4448 = vmatpush2.msra.mxu0 %v4380
  %4449 = vmatprep.mubr.f32.mxu0 %v4383
  %4450 = vmatmul.mubr.f32.gmra.mxu0 %v3982
  %v4451 = vpop.f32.mrf.mxu0
  %v4452 = vadd.f32 0.0, %v4451
  %v4453 = vpop.f32.mrf.mxu0
  %4454 = vdwg.mxu0
  %v4455 = vadd.f32 %v4362, %v4452
  %v4456 = vmax.f32 %v4455, 0.0
  %v4457 = vld [vmem:[%s9] sm:$0x1]
  %v4458 = vld [vmem:[%s8] sm:$0xff]
  %v4459 = vld [vmem:[%s8 + $0x8] sm:$0xff]
  %v4460 = vld [vmem:[%s8 + $0x10] sm:$0xff]
  %v4461 = vld [vmem:[%s8 + $0x18] sm:$0xff]
  %v4462 = vld [vmem:[%s8 + $0x20] sm:$0xff]
  %v4463 = vld [vmem:[%s8 + $0x28] sm:$0xff]
  %v4464 = vld [vmem:[%s8 + $0x30] sm:$0xff]
  %v4465 = vld [vmem:[%s8 + $0x38] sm:$0xff]
  %v4466 = vld [vmem:[%s8 + $0x40] sm:$0xff]
  %v4467 = vld [vmem:[%s8 + $0x48] sm:$0xff]
  %v4468 = vld [vmem:[%s8 + $0x50] sm:$0xff]
  %v4469 = vld [vmem:[%s8 + $0x58] sm:$0xff]
  %v4470 = vld [vmem:[%s8 + $0x60] sm:$0xff]
  %v4471 = vld [vmem:[%s8 + $0x68] sm:$0xff]
  %v4472 = vld [vmem:[%s8 + $0x70] sm:$0xff]
  %v4473 = vld [vmem:[%s8 + $0x78] sm:$0xff]
  %4474 = vmatprep.subr.mxu0 0.0
  %4475 = vmatpush1.msra.mxu0 %v4473
  %4476 = vmatprep.subr.mxu0 0.0
  %4477 = vmatpush1.msra.mxu0 %v4472
  %4478 = vmatprep.subr.mxu0 0.0
  %4479 = vmatpush1.msra.mxu0 %v4471
  %4480 = vmatprep.subr.mxu0 0.0
  %4481 = vmatpush1.msra.mxu0 %v4470
  %4482 = vmatprep.subr.mxu0 0.0
  %4483 = vmatpush1.msra.mxu0 %v4469
  %4484 = vmatprep.subr.mxu0 0.0
  %4485 = vmatpush1.msra.mxu0 %v4468
  %4486 = vmatprep.subr.mxu0 0.0
  %4487 = vmatpush1.msra.mxu0 %v4467
  %4488 = vmatprep.subr.mxu0 0.0
  %4489 = vmatpush1.msra.mxu0 %v4466
  %4490 = vmatprep.subr.mxu0 0.0
  %4491 = vmatpush1.msra.mxu0 %v4465
  %4492 = vmatprep.subr.mxu0 0.0
  %4493 = vmatpush1.msra.mxu0 %v4464
  %4494 = vmatprep.subr.mxu0 0.0
  %4495 = vmatpush1.msra.mxu0 %v4463
  %4496 = vmatprep.subr.mxu0 0.0
  %4497 = vmatpush1.msra.mxu0 %v4462
  %4498 = vmatprep.subr.mxu0 0.0
  %4499 = vmatpush1.msra.mxu0 %v4461
  %4500 = vmatprep.subr.mxu0 0.0
  %4501 = vmatpush1.msra.mxu0 %v4460
  %4502 = vmatprep.subr.mxu0 0.0
  %4503 = vmatpush1.msra.mxu0 %v4459
  %4504 = vmatprep.subr.mxu0 0.0
  %4505 = vmatpush1.msra.mxu0 %v4458
  %4506 = vmatprep.subr.mxu0 0.0
  %4507 = vmatpush2.msra.mxu0 0.0
  %4508 = vmatprep.subr.mxu0 0.0
  %4509 = vmatpush2.msra.mxu0 0.0
  %4510 = vmatprep.subr.mxu0 0.0
  %4511 = vmatpush2.msra.mxu0 0.0
  %4512 = vmatprep.subr.mxu0 0.0
  %4513 = vmatpush2.msra.mxu0 0.0
  %4514 = vmatprep.subr.mxu0 0.0
  %4515 = vmatpush2.msra.mxu0 0.0
  %4516 = vmatprep.subr.mxu0 0.0
  %4517 = vmatpush2.msra.mxu0 0.0
  %4518 = vmatprep.subr.mxu0 0.0
  %4519 = vmatpush2.msra.mxu0 0.0
  %4520 = vmatprep.subr.mxu0 0.0
  %4521 = vmatpush2.msra.mxu0 0.0
  %4522 = vmatprep.subr.mxu0 0.0
  %4523 = vmatpush2.msra.mxu0 0.0
  %4524 = vmatprep.subr.mxu0 0.0
  %4525 = vmatpush2.msra.mxu0 0.0
  %4526 = vmatprep.subr.mxu0 0.0
  %4527 = vmatpush2.msra.mxu0 0.0
  %4528 = vmatprep.subr.mxu0 0.0
  %4529 = vmatpush2.msra.mxu0 0.0
  %4530 = vmatprep.subr.mxu0 0.0
  %4531 = vmatpush2.msra.mxu0 0.0
  %4532 = vmatprep.subr.mxu0 0.0
  %4533 = vmatpush2.msra.mxu0 0.0
  %4534 = vmatprep.subr.mxu0 0.0
  %4535 = vmatpush2.msra.mxu0 0.0
  %4536 = vmatprep.subr.mxu0 0.0
  %4537 = vmatpush2.msra.mxu0 0.0
  %4538 = vmatprep.mubr.f32.mxu0 0.0
  %4539 = vmatmul.mubr.f32.gmra.mxu0 %v4456
  %v4540 = vpop.f32.mrf.mxu0
  %v4541 = vadd.f32 0.0, %v4540
  %v4542 = vpop.f32.mrf.mxu0
  %4543 = vdwg.mxu0
  %v4545 = vlaneseq
  %v4546 = vshrl.u32 %v4545, 7
  %v4547 = vsub.s32 0, %v4546
  %v4548 = vrot.slane %v4457, %v4547
  %v4550 = vadd.f32 %v4548, %v4541
  %v4551 = vmax.f32 %v4550, 0.0
  %v4552 = vld [vmem:[%s11] sm:$0x1]
  %v4553 = vld [vmem:[%s10] sm:$0xff]
  %v4554 = vld [vmem:[%s10 + $0x8] sm:$0xff]
  %v4555 = vld [vmem:[%s10 + $0x10] sm:$0xff]
  %v4556 = vld [vmem:[%s10 + $0x18] sm:$0xff]
  %v4557 = vld [vmem:[%s10 + $0x20] sm:$0xff]
  %v4558 = vld [vmem:[%s10 + $0x28] sm:$0xff]
  %v4559 = vld [vmem:[%s10 + $0x30] sm:$0xff]
  %v4560 = vld [vmem:[%s10 + $0x38] sm:$0xff]
  %v4561 = vld [vmem:[%s10 + $0x40] sm:$0xff]
  %v4562 = vld [vmem:[%s10 + $0x48] sm:$0xff]
  %v4563 = vld [vmem:[%s10 + $0x50] sm:$0xff]
  %v4564 = vld [vmem:[%s10 + $0x58] sm:$0xff]
  %v4565 = vld [vmem:[%s10 + $0x60] sm:$0xff]
  %v4566 = vld [vmem:[%s10 + $0x68] sm:$0xff]
  %v4567 = vld [vmem:[%s10 + $0x70] sm:$0xff]
  %v4568 = vld [vmem:[%s10 + $0x78] sm:$0xff]
  %4569 = vmatprep.subr.mxu0 0.0
  %4570 = vmatpush1.msra.mxu0 %v4568
  %4571 = vmatprep.subr.mxu0 0.0
  %4572 = vmatpush1.msra.mxu0 %v4567
  %4573 = vmatprep.subr.mxu0 0.0
  %4574 = vmatpush1.msra.mxu0 %v4566
  %4575 = vmatprep.subr.mxu0 0.0
  %4576 = vmatpush1.msra.mxu0 %v4565
  %4577 = vmatprep.subr.mxu0 0.0
  %4578 = vmatpush1.msra.mxu0 %v4564
  %4579 = vmatprep.subr.mxu0 0.0
  %4580 = vmatpush1.msra.mxu0 %v4563
  %4581 = vmatprep.subr.mxu0 0.0
  %4582 = vmatpush1.msra.mxu0 %v4562
  %4583 = vmatprep.subr.mxu0 0.0
  %4584 = vmatpush1.msra.mxu0 %v4561
  %4585 = vmatprep.subr.mxu0 0.0
  %4586 = vmatpush1.msra.mxu0 %v4560
  %4587 = vmatprep.subr.mxu0 0.0
  %4588 = vmatpush1.msra.mxu0 %v4559
  %4589 = vmatprep.subr.mxu0 0.0
  %4590 = vmatpush1.msra.mxu0 %v4558
  %4591 = vmatprep.subr.mxu0 0.0
  %4592 = vmatpush1.msra.mxu0 %v4557
  %4593 = vmatprep.subr.mxu0 0.0
  %4594 = vmatpush1.msra.mxu0 %v4556
  %4595 = vmatprep.subr.mxu0 0.0
  %4596 = vmatpush1.msra.mxu0 %v4555
  %4597 = vmatprep.subr.mxu0 0.0
  %4598 = vmatpush1.msra.mxu0 %v4554
  %4599 = vmatprep.subr.mxu0 0.0
  %4600 = vmatpush1.msra.mxu0 %v4553
  %4601 = vmatprep.subr.mxu0 0.0
  %4602 = vmatpush2.msra.mxu0 0.0
  %4603 = vmatprep.subr.mxu0 0.0
  %4604 = vmatpush2.msra.mxu0 0.0
  %4605 = vmatprep.subr.mxu0 0.0
  %4606 = vmatpush2.msra.mxu0 0.0
  %4607 = vmatprep.subr.mxu0 0.0
  %4608 = vmatpush2.msra.mxu0 0.0
  %4609 = vmatprep.subr.mxu0 0.0
  %4610 = vmatpush2.msra.mxu0 0.0
  %4611 = vmatprep.subr.mxu0 0.0
  %4612 = vmatpush2.msra.mxu0 0.0
  %4613 = vmatprep.subr.mxu0 0.0
  %4614 = vmatpush2.msra.mxu0 0.0
  %4615 = vmatprep.subr.mxu0 0.0
  %4616 = vmatpush2.msra.mxu0 0.0
  %4617 = vmatprep.subr.mxu0 0.0
  %4618 = vmatpush2.msra.mxu0 0.0
  %4619 = vmatprep.subr.mxu0 0.0
  %4620 = vmatpush2.msra.mxu0 0.0
  %4621 = vmatprep.subr.mxu0 0.0
  %4622 = vmatpush2.msra.mxu0 0.0
  %4623 = vmatprep.subr.mxu0 0.0
  %4624 = vmatpush2.msra.mxu0 0.0
  %4625 = vmatprep.subr.mxu0 0.0
  %4626 = vmatpush2.msra.mxu0 0.0
  %4627 = vmatprep.subr.mxu0 0.0
  %4628 = vmatpush2.msra.mxu0 0.0
  %4629 = vmatprep.subr.mxu0 0.0
  %4630 = vmatpush2.msra.mxu0 0.0
  %4631 = vmatprep.subr.mxu0 0.0
  %4632 = vmatpush2.msra.mxu0 0.0
  %4633 = vmatprep.mubr.f32.mxu0 0.0
  %4634 = vmatmul.mubr.f32.gmra.mxu0 %v4551
  %v4635 = vpop.f32.mrf.mxu0
  %v4636 = vadd.f32 0.0, %v4635
  %v4637 = vpop.f32.mrf.mxu0
  %4638 = vdwg.mxu0
  %v4640 = vlaneseq
  %v4641 = vshrl.u32 %v4640, 7
  %v4642 = vsub.s32 0, %v4641
  %v4643 = vrot.slane %v4552, %v4642
  %v4645 = vadd.f32 %v4643, %v4636
  %4646 = vst [vmem:[%s12] sm:$0xff] %v4645
  // Predicated region
  $region50: #{lenet_forward.1} parent=0 // pred_check
    _
  $region51: #{lenet_forward.1} parent=0 // pred_check_branch
    %4648 = sbr.rel (0) target = $region53
  $region52: #{lenet_forward.1} parent=0 // pred_region
    _
  $region53: #{lenet_forward.1} parent=0 // pred_fallthru
    _
  // Predicated region
  $region54: #{lenet_forward.1} parent=0 // pred_check
    _
  $region55: #{lenet_forward.1} parent=0 // pred_check_branch
    %4650 = sbr.rel (0) target = $region57
  $region56: #{lenet_forward.1} parent=0 // pred_region
    _
  $region57: #{lenet_forward.1} parent=0 // pred_fallthru
    _

</llo_original>
